<compile_context>
chip_gen: v7x
topology: tpu7x:2x2x1
jax: 0.10.0
libtpu: 0.0.40
codegen_flags: <defaults>
</compile_context>

<pallas_src>
import jax
import jax.numpy as jnp
from jax.experimental import pallas as pl
from jax.experimental.pallas import tpu as pltpu

# Small but lane-dense shapes (real FPGA kernel used L=64, D=768, H=12).
L = 8            # sequence length (multiple of 8 sublanes)
D = 128          # hidden size   (multiple of 128 lanes)
H = 4            # attention heads
DH = D // H      # head dim
FF = 4 * D       # MLP intermediate size (multiple of 128 lanes)
EPS = 1e-5       # layer_norm_epsilon
VOCAB = 64
MAX_POS = 16
N_LAYERS = 2


def _layernorm(x, w, b):
    mu = jnp.mean(x, axis=-1, keepdims=True)
    var = jnp.mean(jnp.square(x - mu), axis=-1, keepdims=True)
    return (x - mu) * jax.lax.rsqrt(var + EPS) * w + b


def _gelu_new(x):
    c = 0.7978845608028654  # sqrt(2/pi)
    return 0.5 * x * (1.0 + jnp.tanh(c * (x + 0.044715 * x * x * x)))


def gptneo_stack_kernel(bias_ref,                       # (L, L) f32 resident
                        x_ref,                          # (L, D) f32 resident
                        small_ref,                      # (1, 8, D) f32 per layer
                        bfc_ref,                        # (1, 1, FF) f32 per layer
                        wqkv_ref,                       # (1, 3H, D, DH) bf16 per layer
                        wo_ref,                         # (1, H, DH, D) bf16 per layer
                        wfc_ref,                        # (1, D, FF) bf16 per layer
                        wproj_ref,                      # (1, FF, D) bf16 per layer
                        lnfw_ref, lnfb_ref,             # (1, D) f32 resident
                        o_ref,                          # (L, D) f32
                        h_scratch):                     # VMEM (L, D) f32
    lid = pl.program_id(0)

    # Hidden state lives in VMEM scratch across all layers (resident carry).
    @pl.when(lid == 0)
    def _():
        h_scratch[...] = x_ref[...]

    x = h_scratch[...]

    sp = small_ref[0]                                   # (8, D) f32
    ln1w, ln1b = sp[0:1], sp[1:2]
    bo = sp[2:3]
    ln2w, ln2b = sp[3:4], sp[4:5]
    bproj = sp[5:6]

    # ---- LN1 + self-attention (all matmuls batched over the head axis) ----
    h = _layernorm(x, ln1w, ln1b)
    hb = h.astype(jnp.bfloat16)
    hb3 = jnp.broadcast_to(hb[None, :, :], (3 * H, L, D))
    qkvh = jnp.einsum('hld,hdk->hlk', hb3, wqkv_ref[0],
                      preferred_element_type=jnp.float32)        # (3H, L, DH)
    qh = qkvh[0:H].astype(jnp.bfloat16)
    kh = qkvh[H:2 * H].astype(jnp.bfloat16)
    vh = qkvh[2 * H:3 * H].astype(jnp.bfloat16)

    # GPT-Neo does NOT scale attention scores by 1/sqrt(head_dim).
    s = jnp.einsum('hqd,hkd->hqk', qh, kh,
                   preferred_element_type=jnp.float32)           # (H, L, L)
    s = s + bias_ref[...][None, :, :]                            # causal + length bias
    m = jnp.max(s, axis=-1, keepdims=True)
    p = jnp.exp(s - m)                                           # masked -> exp(-huge) = 0
    denom = jnp.sum(p, axis=-1, keepdims=True)                   # >= 1 (max row entry is 1)
    p = p * pl.reciprocal(denom, approx=True)                    # divide on the EUP
    ctx = jnp.einsum('hqk,hkd->hqd', p.astype(jnp.bfloat16), vh,
                     preferred_element_type=jnp.float32)         # (H, L, DH)
    attn_h = jnp.einsum('hld,hdo->hlo', ctx.astype(jnp.bfloat16), wo_ref[0],
                        preferred_element_type=jnp.float32)      # (H, L, D)
    attn = jnp.sum(attn_h, axis=0) + bo                          # merge heads = sum over h
    x = x + attn                                                 # residual 1

    # ---- LN2 + MLP ----
    h2 = _layernorm(x, ln2w, ln2b)
    fc = jnp.dot(h2.astype(jnp.bfloat16), wfc_ref[0],
                 preferred_element_type=jnp.float32) + bfc_ref[0]
    fc = _gelu_new(fc)
    mlp = jnp.dot(fc.astype(jnp.bfloat16), wproj_ref[0],
                  preferred_element_type=jnp.float32) + bproj
    x = x + mlp                                                  # residual 2

    h_scratch[...] = x

    # Final LayerNorm fused into the last grid step.
    @pl.when(lid == pl.num_programs(0) - 1)
    def _():
        o_ref[...] = _layernorm(x, lnfw_ref[...], lnfb_ref[...])


def run_gptneo_stack(hidden, attn_bias, stacked, lnf_w, lnf_b):
    n_layers = stacked['wqkv'].shape[0]

    def resident(shape):                 # same block every grid step (fetched once)
        zeros = (0,) * len(shape)
        return pl.BlockSpec(shape, lambda l, z=zeros: z)

    def per_layer(arr):                  # leading layer axis indexed by grid step
        pad = (0,) * (arr.ndim - 1)
        return pl.BlockSpec((1,) + arr.shape[1:], lambda l, p=pad: (l,) + p)

    in_specs = [
        resident((L, L)),                                        # attention bias
        resident((L, D)),                                        # hidden (read at layer 0)
        per_layer(stacked['small']),                             # packed small f32 params
        per_layer(stacked['bfc']),
        per_layer(stacked['wqkv']),
        per_layer(stacked['wo']),
        per_layer(stacked['wfc']),
        per_layer(stacked['wproj']),
        resident((1, D)), resident((1, D)),                      # ln_f weight / bias
    ]

    return pl.pallas_call(
        gptneo_stack_kernel,
        out_shape=jax.ShapeDtypeStruct((L, D), jnp.float32),
        grid=(n_layers,),
        in_specs=in_specs,
        out_specs=resident((L, D)),
        scratch_shapes=[pltpu.VMEM((L, D), jnp.float32)],
        compiler_params=pltpu.CompilerParams(
            # Layer axis carries the hidden state -> sequential ("arbitrary").
            dimension_semantics=("arbitrary",),
            vmem_limit_bytes=32 * 1024 * 1024,
            # TODO(synk): at real GPT-Neo sizes, tile wfc/wproj along FF (grid
            # axis + f32 acc scratch) so double-buffered weights fit v7x's
            # 64 MiB VMEM, and use pl.core_map / a second batch row to engage
            # v7x's second TensorCore.
        ),
    )(attn_bias, hidden,
      stacked['small'], stacked['bfc'],
      stacked['wqkv'], stacked['wo'],
      stacked['wfc'], stacked['wproj'],
      lnf_w, lnf_b)


def prepare_stacked_weights(layer_params):
    """Stack per-layer torch-layout weights; pre-transpose / pre-split heads ONCE."""
    def stack(fn):
        return jnp.stack([fn(lw) for lw in layer_params], axis=0)

    def qkv_heads(lw):
        # torch nn.Linear weight is (out, in); y = x @ W^T.
        # W^T (D_in, D_out) -> split out dim into heads -> (H, D, DH).
        def split(w):
            return jnp.transpose(w.T.reshape(D, H, DH), (1, 0, 2))
        return jnp.concatenate([split(lw['q_proj_weight']),
                                split(lw['k_proj_weight']),
                                split(lw['v_proj_weight'])], axis=0)       # (3H, D, DH)

    def out_heads(lw):
        # out_proj: y = ctx_flat @ Wo^T; input dim is head-major -> (H, DH, D).
        return lw['out_proj_weight'].T.reshape(H, DH, D)

    def small(lw):
        return jnp.stack([lw['ln1_weight'], lw['ln1_bias'],
                          lw['out_proj_bias'],
                          lw['ln2_weight'], lw['ln2_bias'],
                          lw['mlp_proj_bias'],
                          jnp.zeros((D,), jnp.float32),
                          jnp.zeros((D,), jnp.float32)], axis=0)           # (8, D)

    # TODO(synk): per-generation weight quantization (int8 on v5e/v6e, fp8 on
    # v7x) would halve/quarter the HBM weight-streaming bytes.
    return {
        'small': stack(small),                                                # (N, 8, D) f32
        'bfc':   stack(lambda lw: lw['mlp_fc_bias'][None, :]),                # (N, 1, FF) f32
        'wqkv':  stack(qkv_heads).astype(jnp.bfloat16),                       # (N, 3H, D, DH)
        'wo':    stack(out_heads).astype(jnp.bfloat16),                       # (N, H, DH, D)
        'wfc':   stack(lambda lw: lw['mlp_fc_weight'].T).astype(jnp.bfloat16),    # (N, D, FF)
        'wproj': stack(lambda lw: lw['mlp_proj_weight'].T).astype(jnp.bfloat16),  # (N, FF, D)
    }


def init_params(key):
    scale = 0.02
    ks = jax.random.split(key, 2 + N_LAYERS)
    layers = []
    for l in range(N_LAYERS):
        kk = jax.random.split(ks[2 + l], 8)
        layers.append({
            'ln1_weight': jnp.ones((D,), jnp.float32),
            'ln1_bias': jnp.zeros((D,), jnp.float32),
            # torch nn.Linear layout: (out_features, in_features)
            'q_proj_weight': scale * jax.random.normal(kk[0], (D, D), jnp.float32),
            'k_proj_weight': scale * jax.random.normal(kk[1], (D, D), jnp.float32),
            'v_proj_weight': scale * jax.random.normal(kk[2], (D, D), jnp.float32),
            'out_proj_weight': scale * jax.random.normal(kk[3], (D, D), jnp.float32),
            'out_proj_bias': scale * jax.random.normal(kk[4], (D,), jnp.float32),
            'ln2_weight': jnp.ones((D,), jnp.float32),
            'ln2_bias': jnp.zeros((D,), jnp.float32),
            'mlp_fc_weight': scale * jax.random.normal(kk[5], (FF, D), jnp.float32),
            'mlp_fc_bias': scale * jax.random.normal(kk[6], (FF,), jnp.float32),
            'mlp_proj_weight': scale * jax.random.normal(kk[7], (D, FF), jnp.float32),
            'mlp_proj_bias': jnp.zeros((D,), jnp.float32),
        })
    return {
        'wte': scale * jax.random.normal(ks[0], (VOCAB, D), jnp.float32),
        'wpe': scale * jax.random.normal(ks[1], (MAX_POS, D), jnp.float32),
        'ln_f_weight': jnp.ones((1, D), jnp.float32),
        'ln_f_bias': jnp.zeros((1, D), jnp.float32),
        'stacked': prepare_stacked_weights(layers),
    }


def gptneo_forward(input_ids, attention_mask, params):
    input_shape = input_ids.shape
    input_ids = input_ids.reshape(-1, input_shape[-1])
    if attention_mask is not None:
        position_ids = jnp.cumsum(attention_mask.astype(jnp.int32), axis=-1) - 1
        position_ids = jnp.where(attention_mask == 0, 1, position_ids)
    else:
        position_ids = jnp.arange(input_shape[-1], dtype=jnp.int32)[None, :]

    inputs_embeds = jnp.take(params['wte'], input_ids, axis=0)        # (B, L, D)
    position_embeds = jnp.take(params['wpe'], position_ids, axis=0)   # (B, L, D)
    # The FPGA path processes batch element 0 only (module semantics preserved).
    hidden = (inputs_embeds + position_embeds)[0]                     # (L, D)

    if attention_mask is not None:
        alen = jnp.sum(attention_mask[0]).astype(jnp.int32)
    else:
        alen = jnp.int32(L)

    # Causal + valid-length additive bias, built once (hoisted out of the
    # per-layer loop) and passed as a resident kernel input.
    row = jax.lax.broadcasted_iota(jnp.int32, (L, L), 0)
    col = jax.lax.broadcasted_iota(jnp.int32, (L, L), 1)
    attn_bias = jnp.where((col <= row) & (col < alen),
                          0.0, -1e30).astype(jnp.float32)             # (L, L)

    out = run_gptneo_stack(hidden, attn_bias, params['stacked'],
                           params['ln_f_weight'], params['ln_f_bias'])
    return out[None, :, :]                                            # (1, L, D)


if __name__ == "__main__":
    key = jax.random.PRNGKey(0)
    kp, kid = jax.random.split(key)
    params = init_params(kp)

    input_ids = jax.random.randint(kid, (1, L), 0, VOCAB, dtype=jnp.int32)
    # 6 valid tokens, 2 padding tokens (exercises the length mask).
    attention_mask = jnp.array([[1, 1, 1, 1, 1, 1, 0, 0]], dtype=jnp.int32)

    out = gptneo_forward(input_ids, attention_mask, params)
    out = jax.block_until_ready(out)
    assert out.shape == (1, L, D) and out.dtype == jnp.float32
    assert bool(jnp.all(jnp.isfinite(out)))
    print("KERNEL_OK")
</pallas_src>

<mosaic_0001>
module attributes {stable_mosaic.version = 11 : i64} {
  func.func @gptneo_stack_kernel(%arg0: i32, %arg1: memref<8x8xf32, #tpu.memory_space<vmem>>, %arg2: memref<8x128xf32, #tpu.memory_space<vmem>>, %arg3: memref<1x8x128xf32, #tpu.memory_space<vmem>>, %arg4: memref<1x1x512xf32, #tpu.memory_space<vmem>>, %arg5: memref<1x12x128x32xbf16, #tpu.memory_space<vmem>>, %arg6: memref<1x4x32x128xbf16, #tpu.memory_space<vmem>>, %arg7: memref<1x128x512xbf16, #tpu.memory_space<vmem>>, %arg8: memref<1x512x128xbf16, #tpu.memory_space<vmem>>, %arg9: memref<1x128xf32, #tpu.memory_space<vmem>>, %arg10: memref<1x128xf32, #tpu.memory_space<vmem>>, %arg11: memref<8x128xf32, #tpu.memory_space<vmem>>, %arg12: memref<8x128xf32, #tpu.memory_space<vmem>>) attributes {dimension_semantics = [#tpu.dimension_semantics<arbitrary>], iteration_bounds = array<i64: 2>, scalar_prefetch = 0 : i64, scratch_operands = 1 : i64, tpu.core_type = #tpu.core_type<tc>, window_params = [{pipeline_mode = #tpu.pipeline_mode<synchronous>, transform_indices = @transform_0, window_bounds = array<i64: 8, 8>}, {pipeline_mode = #tpu.pipeline_mode<synchronous>, transform_indices = @transform_1, window_bounds = array<i64: 8, 128>}, {transform_indices = @transform_2, window_bounds = array<i64: 1, 8, 128>}, {transform_indices = @transform_3, window_bounds = array<i64: 1, 1, 512>}, {transform_indices = @transform_4, window_bounds = array<i64: 1, 12, 128, 32>}, {transform_indices = @transform_5, window_bounds = array<i64: 1, 4, 32, 128>}, {transform_indices = @transform_6, window_bounds = array<i64: 1, 128, 512>}, {transform_indices = @transform_7, window_bounds = array<i64: 1, 512, 128>}, {pipeline_mode = #tpu.pipeline_mode<synchronous>, transform_indices = @transform_8, window_bounds = array<i64: 1, 128>}, {pipeline_mode = #tpu.pipeline_mode<synchronous>, transform_indices = @transform_9, window_bounds = array<i64: 1, 128>}, {pipeline_mode = #tpu.pipeline_mode<synchronous>, transform_indices = @transform_10, window_bounds = array<i64: 8, 128>}]} {
    %c0_i32 = arith.constant 0 : i32
    %0 = arith.cmpi eq, %arg0, %c0_i32 : i32
    %1 = arith.extui %0 : i1 to i32
    %c0_i32_0 = arith.constant 0 : i32
    %2 = arith.cmpi ne, %1, %c0_i32_0 : i32
    scf.if %2 {
      %c0_49 = arith.constant 0 : index
      %c0_50 = arith.constant 0 : index
      %126 = vector.load %arg2[%c0_49, %c0_50] : memref<8x128xf32, #tpu.memory_space<vmem>>, vector<8x128xf32>
      %c0_51 = arith.constant 0 : index
      %c0_52 = arith.constant 0 : index
      %127 = vector.load %arg12[%c0_51, %c0_52] : memref<8x128xf32, #tpu.memory_space<vmem>>, vector<8x128xf32>
      tpu.vector_store %arg12[%c0_51, %c0_52], %126 {strides = array<i32>} : memref<8x128xf32, #tpu.memory_space<vmem>>, vector<8x128xf32>,
    } else {
    }
    %c0 = arith.constant 0 : index
    %c0_1 = arith.constant 0 : index
    %3 = vector.load %arg12[%c0, %c0_1] : memref<8x128xf32, #tpu.memory_space<vmem>>, vector<8x128xf32>
    %c0_2 = arith.constant 0 : index
    %c0_3 = arith.constant 0 : index
    %c0_4 = arith.constant 0 : index
    %4 = vector.load %arg3[%c0_2, %c0_3, %c0_4] : memref<1x8x128xf32, #tpu.memory_space<vmem>>, vector<1x8x128xf32>
    %5 = vector.shape_cast %4 : vector<1x8x128xf32> to vector<8x128xf32>
    %6 = vector.extract_strided_slice %5 {offsets = [0, 0], sizes = [1, 128], strides = [1, 1]} : vector<8x128xf32> to vector<1x128xf32>
    %7 = vector.extract_strided_slice %5 {offsets = [1, 0], sizes = [1, 128], strides = [1, 1]} : vector<8x128xf32> to vector<1x128xf32>
    %8 = vector.extract_strided_slice %5 {offsets = [2, 0], sizes = [1, 128], strides = [1, 1]} : vector<8x128xf32> to vector<1x128xf32>
    %9 = vector.extract_strided_slice %5 {offsets = [3, 0], sizes = [1, 128], strides = [1, 1]} : vector<8x128xf32> to vector<1x128xf32>
    %10 = vector.extract_strided_slice %5 {offsets = [4, 0], sizes = [1, 128], strides = [1, 1]} : vector<8x128xf32> to vector<1x128xf32>
    %11 = vector.extract_strided_slice %5 {offsets = [5, 0], sizes = [1, 128], strides = [1, 1]} : vector<8x128xf32> to vector<1x128xf32>
    %cst = arith.constant dense<0.000000e+00> : vector<8xf32>
    %12 = vector.multi_reduction <add>, %3, %cst [1] : vector<8x128xf32> to vector<8xf32>
    %13 = vector.shape_cast %12 : vector<8xf32> to vector<8x1xf32>
    %cst_5 = arith.constant 1.280000e+02 : f32
    %14 = vector.broadcast %cst_5 : f32 to vector<8x1xf32>
    %15 = arith.divf %13, %14 : vector<8x1xf32>
    %16 = vector.broadcast %15 : vector<8x1xf32> to vector<8x128xf32>
    %17 = arith.subf %3, %16 : vector<8x128xf32>
    %18 = arith.mulf %17, %17 : vector<8x128xf32>
    %cst_6 = arith.constant dense<0.000000e+00> : vector<8xf32>
    %19 = vector.multi_reduction <add>, %18, %cst_6 [1] : vector<8x128xf32> to vector<8xf32>
    %20 = vector.shape_cast %19 : vector<8xf32> to vector<8x1xf32>
    %cst_7 = arith.constant 1.280000e+02 : f32
    %21 = vector.broadcast %cst_7 : f32 to vector<8x1xf32>
    %22 = arith.divf %20, %21 : vector<8x1xf32>
    %23 = vector.broadcast %15 : vector<8x1xf32> to vector<8x128xf32>
    %24 = arith.subf %3, %23 : vector<8x128xf32>
    %cst_8 = arith.constant 9.99999974E-6 : f32
    %25 = vector.broadcast %cst_8 : f32 to vector<8x1xf32>
    %26 = arith.addf %22, %25 : vector<8x1xf32>
    %27 = math.rsqrt %26 : vector<8x1xf32>
    %28 = vector.broadcast %27 : vector<8x1xf32> to vector<8x128xf32>
    %29 = arith.mulf %24, %28 : vector<8x128xf32>
    %30 = vector.broadcast %6 : vector<1x128xf32> to vector<8x128xf32>
    %31 = arith.mulf %29, %30 : vector<8x128xf32>
    %32 = vector.broadcast %7 : vector<1x128xf32> to vector<8x128xf32>
    %33 = arith.addf %31, %32 : vector<8x128xf32>
    %34 = arith.truncf %33 : vector<8x128xf32> to vector<8x128xbf16>
    %35 = vector.shape_cast %34 : vector<8x128xbf16> to vector<1x8x128xbf16>
    %36 = vector.shape_cast %35 : vector<1x8x128xbf16> to vector<1x8x128xbf16>
    %37 = vector.broadcast %36 : vector<1x8x128xbf16> to vector<12x8x128xbf16>
    %c0_9 = arith.constant 0 : index
    %c0_10 = arith.constant 0 : index
    %c0_11 = arith.constant 0 : index
    %c0_12 = arith.constant 0 : index
    %38 = vector.load %arg5[%c0_9, %c0_10, %c0_11, %c0_12] : memref<1x12x128x32xbf16, #tpu.memory_space<vmem>>, vector<1x12x128x32xbf16>
    %39 = vector.shape_cast %38 : vector<1x12x128x32xbf16> to vector<12x128x32xbf16>
    "tpu.trace_start"() <{level = 10 : i32, message = "hld,hdk->hlk"}> : () -> ()
    %cst_13 = arith.constant dense<0.000000e+00> : vector<12x8x32xf32>
    %40 = tpu.matmul %37, %39, %cst_13 {dimension_numbers = #tpu.dot_dimension_numbers<[2], [1], [1], [2], [0, 0, 0, 1, 1, 2], [0], [0]>} : vector<12x8x128xbf16>, vector<12x128x32xbf16>, vector<12x8x32xf32> -> vector<12x8x32xf32>
    "tpu.trace_stop"() : () -> ()
    %41 = vector.extract_strided_slice %40 {offsets = [0, 0, 0], sizes = [4, 8, 32], strides = [1, 1, 1]} : vector<12x8x32xf32> to vector<4x8x32xf32>
    %42 = arith.truncf %41 : vector<4x8x32xf32> to vector<4x8x32xbf16>
    %43 = vector.extract_strided_slice %40 {offsets = [4, 0, 0], sizes = [4, 8, 32], strides = [1, 1, 1]} : vector<12x8x32xf32> to vector<4x8x32xf32>
    %44 = arith.truncf %43 : vector<4x8x32xf32> to vector<4x8x32xbf16>
    %45 = vector.extract_strided_slice %40 {offsets = [8, 0, 0], sizes = [4, 8, 32], strides = [1, 1, 1]} : vector<12x8x32xf32> to vector<4x8x32xf32>
    %46 = arith.truncf %45 : vector<4x8x32xf32> to vector<4x8x32xbf16>
    "tpu.trace_start"() <{level = 10 : i32, message = "hqd,hkd->hqk"}> : () -> ()
    %cst_14 = arith.constant dense<0.000000e+00> : vector<4x8x8xf32>
    %47 = tpu.matmul %42, %44, %cst_14 {dimension_numbers = #tpu.dot_dimension_numbers<[2], [2], [1], [1], [0, 0, 0, 1, 1, 1], [0], [0]>} : vector<4x8x32xbf16>, vector<4x8x32xbf16>, vector<4x8x8xf32> -> vector<4x8x8xf32>
    "tpu.trace_stop"() : () -> ()
    %c0_15 = arith.constant 0 : index
    %c0_16 = arith.constant 0 : index
    %48 = vector.load %arg1[%c0_15, %c0_16] : memref<8x8xf32, #tpu.memory_space<vmem>>, vector<8x8xf32>
    %49 = vector.shape_cast %48 : vector<8x8xf32> to vector<1x8x8xf32>
    %50 = vector.broadcast %49 : vector<1x8x8xf32> to vector<4x8x8xf32>
    %51 = arith.addf %47, %50 : vector<4x8x8xf32>
    %cst_17 = arith.constant dense<0xFF800000> : vector<4x8xf32>
    %52 = vector.multi_reduction <maximumf>, %51, %cst_17 [2] : vector<4x8x8xf32> to vector<4x8xf32>
    %53 = vector.shape_cast %52 : vector<4x8xf32> to vector<4x8x1xf32>
    %54 = vector.broadcast %53 : vector<4x8x1xf32> to vector<4x8x8xf32>
    %55 = arith.subf %51, %54 : vector<4x8x8xf32>
    %56 = math.exp %55 : vector<4x8x8xf32>
    %cst_18 = arith.constant dense<0.000000e+00> : vector<4x8xf32>
    %57 = vector.multi_reduction <add>, %56, %cst_18 [2] : vector<4x8x8xf32> to vector<4x8xf32>
    %58 = vector.shape_cast %57 : vector<4x8xf32> to vector<4x8x1xf32>
    %59 = tpu.reciprocal %58 {approx = true} : vector<4x8x1xf32> -> vector<4x8x1xf32>
    %60 = vector.broadcast %59 : vector<4x8x1xf32> to vector<4x8x8xf32>
    %61 = arith.mulf %56, %60 : vector<4x8x8xf32>
    %62 = arith.truncf %61 : vector<4x8x8xf32> to vector<4x8x8xbf16>
    "tpu.trace_start"() <{level = 10 : i32, message = "hqk,hkd->hqd"}> : () -> ()
    %cst_19 = arith.constant dense<0.000000e+00> : vector<4x8x32xf32>
    %63 = tpu.matmul %62, %46, %cst_19 {dimension_numbers = #tpu.dot_dimension_numbers<[2], [1], [1], [2], [0, 0, 0, 1, 1, 2], [0], [0]>} : vector<4x8x8xbf16>, vector<4x8x32xbf16>, vector<4x8x32xf32> -> vector<4x8x32xf32>
    "tpu.trace_stop"() : () -> ()
    %64 = arith.truncf %63 : vector<4x8x32xf32> to vector<4x8x32xbf16>
    %c0_20 = arith.constant 0 : index
    %c0_21 = arith.constant 0 : index
    %c0_22 = arith.constant 0 : index
    %c0_23 = arith.constant 0 : index
    %65 = vector.load %arg6[%c0_20, %c0_21, %c0_22, %c0_23] : memref<1x4x32x128xbf16, #tpu.memory_space<vmem>>, vector<1x4x32x128xbf16>
    %66 = vector.shape_cast %65 : vector<1x4x32x128xbf16> to vector<4x32x128xbf16>
    "tpu.trace_start"() <{level = 10 : i32, message = "hld,hdo->hlo"}> : () -> ()
    %cst_24 = arith.constant dense<0.000000e+00> : vector<4x8x128xf32>
    %67 = tpu.matmul %64, %66, %cst_24 {dimension_numbers = #tpu.dot_dimension_numbers<[2], [1], [1], [2], [0, 0, 0, 1, 1, 2], [0], [0]>} : vector<4x8x32xbf16>, vector<4x32x128xbf16>, vector<4x8x128xf32> -> vector<4x8x128xf32>
    "tpu.trace_stop"() : () -> ()
    %cst_25 = arith.constant dense<0.000000e+00> : vector<8x128xf32>
    %68 = vector.multi_reduction <add>, %67, %cst_25 [0] : vector<4x8x128xf32> to vector<8x128xf32>
    %69 = vector.broadcast %8 : vector<1x128xf32> to vector<8x128xf32>
    %70 = arith.addf %68, %69 : vector<8x128xf32>
    %71 = arith.addf %3, %70 : vector<8x128xf32>
    %cst_26 = arith.constant dense<0.000000e+00> : vector<8xf32>
    %72 = vector.multi_reduction <add>, %71, %cst_26 [1] : vector<8x128xf32> to vector<8xf32>
    %73 = vector.shape_cast %72 : vector<8xf32> to vector<8x1xf32>
    %cst_27 = arith.constant 1.280000e+02 : f32
    %74 = vector.broadcast %cst_27 : f32 to vector<8x1xf32>
    %75 = arith.divf %73, %74 : vector<8x1xf32>
    %76 = vector.broadcast %75 : vector<8x1xf32> to vector<8x128xf32>
    %77 = arith.subf %71, %76 : vector<8x128xf32>
    %78 = arith.mulf %77, %77 : vector<8x128xf32>
    %cst_28 = arith.constant dense<0.000000e+00> : vector<8xf32>
    %79 = vector.multi_reduction <add>, %78, %cst_28 [1] : vector<8x128xf32> to vector<8xf32>
    %80 = vector.shape_cast %79 : vector<8xf32> to vector<8x1xf32>
    %cst_29 = arith.constant 1.280000e+02 : f32
    %81 = vector.broadcast %cst_29 : f32 to vector<8x1xf32>
    %82 = arith.divf %80, %81 : vector<8x1xf32>
    %83 = vector.broadcast %75 : vector<8x1xf32> to vector<8x128xf32>
    %84 = arith.subf %71, %83 : vector<8x128xf32>
    %cst_30 = arith.constant 9.99999974E-6 : f32
    %85 = vector.broadcast %cst_30 : f32 to vector<8x1xf32>
    %86 = arith.addf %82, %85 : vector<8x1xf32>
    %87 = math.rsqrt %86 : vector<8x1xf32>
    %88 = vector.broadcast %87 : vector<8x1xf32> to vector<8x128xf32>
    %89 = arith.mulf %84, %88 : vector<8x128xf32>
    %90 = vector.broadcast %9 : vector<1x128xf32> to vector<8x128xf32>
    %91 = arith.mulf %89, %90 : vector<8x128xf32>
    %92 = vector.broadcast %10 : vector<1x128xf32> to vector<8x128xf32>
    %93 = arith.addf %91, %92 : vector<8x128xf32>
    %94 = arith.truncf %93 : vector<8x128xf32> to vector<8x128xbf16>
    %c0_31 = arith.constant 0 : index
    %c0_32 = arith.constant 0 : index
    %c0_33 = arith.constant 0 : index
    %95 = vector.load %arg7[%c0_31, %c0_32, %c0_33] : memref<1x128x512xbf16, #tpu.memory_space<vmem>>, vector<1x128x512xbf16>
    %96 = vector.shape_cast %95 : vector<1x128x512xbf16> to vector<128x512xbf16>
    %cst_34 = arith.constant dense<0.000000e+00> : vector<8x512xf32>
    %97 = tpu.matmul %94, %96, %cst_34 {dimension_numbers = #tpu.dot_dimension_numbers<[1], [0], [0], [1], [0, 0, 1, 1], [], []>} : vector<8x128xbf16>, vector<128x512xbf16>, vector<8x512xf32> -> vector<8x512xf32>
    %c0_35 = arith.constant 0 : index
    %c0_36 = arith.constant 0 : index
    %c0_37 = arith.constant 0 : index
    %98 = vector.load %arg4[%c0_35, %c0_36, %c0_37] : memref<1x1x512xf32, #tpu.memory_space<vmem>>, vector<1x1x512xf32>
    %99 = vector.shape_cast %98 : vector<1x1x512xf32> to vector<1x512xf32>
    %100 = vector.broadcast %99 : vector<1x512xf32> to vector<8x512xf32>
    %101 = arith.addf %97, %100 : vector<8x512xf32>
    %cst_38 = arith.constant 5.000000e-01 : f32
    %102 = vector.broadcast %cst_38 : f32 to vector<8x512xf32>
    %103 = arith.mulf %102, %101 : vector<8x512xf32>
    %cst_39 = arith.constant 4.471500e-02 : f32
    %104 = vector.broadcast %cst_39 : f32 to vector<8x512xf32>
    %105 = arith.mulf %104, %101 : vector<8x512xf32>
    %106 = arith.mulf %105, %101 : vector<8x512xf32>
    %107 = arith.mulf %106, %101 : vector<8x512xf32>
    %108 = arith.addf %101, %107 : vector<8x512xf32>
    %cst_40 = arith.constant 0.797884583 : f32
    %109 = vector.broadcast %cst_40 : f32 to vector<8x512xf32>
    %110 = arith.mulf %109, %108 : vector<8x512xf32>
    %111 = math.tanh %110 : vector<8x512xf32>
    %cst_41 = arith.constant 1.000000e+00 : f32
    %112 = vector.broadcast %cst_41 : f32 to vector<8x512xf32>
    %113 = arith.addf %112, %111 : vector<8x512xf32>
    %114 = arith.mulf %103, %113 : vector<8x512xf32>
    %115 = arith.truncf %114 : vector<8x512xf32> to vector<8x512xbf16>
    %c0_42 = arith.constant 0 : index
    %c0_43 = arith.constant 0 : index
    %c0_44 = arith.constant 0 : index
    %116 = vector.load %arg8[%c0_42, %c0_43, %c0_44] : memref<1x512x128xbf16, #tpu.memory_space<vmem>>, vector<1x512x128xbf16>
    %117 = vector.shape_cast %116 : vector<1x512x128xbf16> to vector<512x128xbf16>
    %cst_45 = arith.constant dense<0.000000e+00> : vector<8x128xf32>
    %118 = tpu.matmul %115, %117, %cst_45 {dimension_numbers = #tpu.dot_dimension_numbers<[1], [0], [0], [1], [0, 0, 1, 1], [], []>} : vector<8x512xbf16>, vector<512x128xbf16>, vector<8x128xf32> -> vector<8x128xf32>
    %119 = vector.broadcast %11 : vector<1x128xf32> to vector<8x128xf32>
    %120 = arith.addf %118, %119 : vector<8x128xf32>
    %121 = arith.addf %71, %120 : vector<8x128xf32>
    %c0_46 = arith.constant 0 : index
    %c0_47 = arith.constant 0 : index
    %122 = vector.load %arg12[%c0_46, %c0_47] : memref<8x128xf32, #tpu.memory_space<vmem>>, vector<8x128xf32>
    tpu.vector_store %arg12[%c0_46, %c0_47], %121 {strides = array<i32>} : memref<8x128xf32, #tpu.memory_space<vmem>>, vector<8x128xf32>,
    %c1_i32 = arith.constant 1 : i32
    %123 = arith.cmpi eq, %arg0, %c1_i32 : i32
    %124 = arith.extui %123 : i1 to i32
    %c0_i32_48 = arith.constant 0 : i32
    %125 = arith.cmpi ne, %124, %c0_i32_48 : i32
    scf.if %125 {
      %c0_49 = arith.constant 0 : index
      %c0_50 = arith.constant 0 : index
      %126 = vector.load %arg9[%c0_49, %c0_50] : memref<1x128xf32, #tpu.memory_space<vmem>>, vector<1x128xf32>
      %c0_51 = arith.constant 0 : index
      %c0_52 = arith.constant 0 : index
      %127 = vector.load %arg10[%c0_51, %c0_52] : memref<1x128xf32, #tpu.memory_space<vmem>>, vector<1x128xf32>
      %cst_53 = arith.constant dense<0.000000e+00> : vector<8xf32>
      %128 = vector.multi_reduction <add>, %121, %cst_53 [1] : vector<8x128xf32> to vector<8xf32>
      %129 = vector.shape_cast %128 : vector<8xf32> to vector<8x1xf32>
      %cst_54 = arith.constant 1.280000e+02 : f32
      %130 = vector.broadcast %cst_54 : f32 to vector<8x1xf32>
      %131 = arith.divf %129, %130 : vector<8x1xf32>
      %132 = vector.broadcast %131 : vector<8x1xf32> to vector<8x128xf32>
      %133 = arith.subf %121, %132 : vector<8x128xf32>
      %134 = arith.mulf %133, %133 : vector<8x128xf32>
      %cst_55 = arith.constant dense<0.000000e+00> : vector<8xf32>
      %135 = vector.multi_reduction <add>, %134, %cst_55 [1] : vector<8x128xf32> to vector<8xf32>
      %136 = vector.shape_cast %135 : vector<8xf32> to vector<8x1xf32>
      %cst_56 = arith.constant 1.280000e+02 : f32
      %137 = vector.broadcast %cst_56 : f32 to vector<8x1xf32>
      %138 = arith.divf %136, %137 : vector<8x1xf32>
      %139 = vector.broadcast %131 : vector<8x1xf32> to vector<8x128xf32>
      %140 = arith.subf %121, %139 : vector<8x128xf32>
      %cst_57 = arith.constant 9.99999974E-6 : f32
      %141 = vector.broadcast %cst_57 : f32 to vector<8x1xf32>
      %142 = arith.addf %138, %141 : vector<8x1xf32>
      %143 = math.rsqrt %142 : vector<8x1xf32>
      %144 = vector.broadcast %143 : vector<8x1xf32> to vector<8x128xf32>
      %145 = arith.mulf %140, %144 : vector<8x128xf32>
      %146 = vector.broadcast %126 : vector<1x128xf32> to vector<8x128xf32>
      %147 = arith.mulf %145, %146 : vector<8x128xf32>
      %148 = vector.broadcast %127 : vector<1x128xf32> to vector<8x128xf32>
      %149 = arith.addf %147, %148 : vector<8x128xf32>
      %c0_58 = arith.constant 0 : index
      %c0_59 = arith.constant 0 : index
      %150 = vector.load %arg11[%c0_58, %c0_59] : memref<8x128xf32, #tpu.memory_space<vmem>>, vector<8x128xf32>
      tpu.vector_store %arg11[%c0_58, %c0_59], %149 {strides = array<i32>} : memref<8x128xf32, #tpu.memory_space<vmem>>, vector<8x128xf32>,
    } else {
    }
    return
  }
  func.func @transform_0(%arg0: i32) -> (i32, i32) {
    %c0_i32 = arith.constant 0 : i32
    %c0_i32_0 = arith.constant 0 : i32
    %c0_i32_1 = arith.constant 0 : i32
    return %c0_i32, %c0_i32_0 : i32, i32
  }
  func.func @transform_1(%arg0: i32) -> (i32, i32) {
    %c0_i32 = arith.constant 0 : i32
    %c0_i32_0 = arith.constant 0 : i32
    %c0_i32_1 = arith.constant 0 : i32
    return %c0_i32, %c0_i32_0 : i32, i32
  }
  func.func @transform_2(%arg0: i32) -> (i32, i32, i32) {
    %c0_i32 = arith.constant 0 : i32
    %c0_i32_0 = arith.constant 0 : i32
    %c0_i32_1 = arith.constant 0 : i32
    return %arg0, %c0_i32, %c0_i32_0 : i32, i32, i32
  }
  func.func @transform_3(%arg0: i32) -> (i32, i32, i32) {
    %c0_i32 = arith.constant 0 : i32
    %c0_i32_0 = arith.constant 0 : i32
    %c0_i32_1 = arith.constant 0 : i32
    return %arg0, %c0_i32, %c0_i32_0 : i32, i32, i32
  }
  func.func @transform_4(%arg0: i32) -> (i32, i32, i32, i32) {
    %c0_i32 = arith.constant 0 : i32
    %c0_i32_0 = arith.constant 0 : i32
    %c0_i32_1 = arith.constant 0 : i32
    %c0_i32_2 = arith.constant 0 : i32
    return %arg0, %c0_i32, %c0_i32_0, %c0_i32_1 : i32, i32, i32, i32
  }
  func.func @transform_5(%arg0: i32) -> (i32, i32, i32, i32) {
    %c0_i32 = arith.constant 0 : i32
    %c0_i32_0 = arith.constant 0 : i32
    %c0_i32_1 = arith.constant 0 : i32
    %c0_i32_2 = arith.constant 0 : i32
    return %arg0, %c0_i32, %c0_i32_0, %c0_i32_1 : i32, i32, i32, i32
  }
  func.func @transform_6(%arg0: i32) -> (i32, i32, i32) {
    %c0_i32 = arith.constant 0 : i32
    %c0_i32_0 = arith.constant 0 : i32
    %c0_i32_1 = arith.constant 0 : i32
    return %arg0, %c0_i32, %c0_i32_0 : i32, i32, i32
  }
  func.func @transform_7(%arg0: i32) -> (i32, i32, i32) {
    %c0_i32 = arith.constant 0 : i32
    %c0_i32_0 = arith.constant 0 : i32
    %c0_i32_1 = arith.constant 0 : i32
    return %arg0, %c0_i32, %c0_i32_0 : i32, i32, i32
  }
  func.func @transform_8(%arg0: i32) -> (i32, i32) {
    %c0_i32 = arith.constant 0 : i32
    %c0_i32_0 = arith.constant 0 : i32
    %c0_i32_1 = arith.constant 0 : i32
    return %c0_i32, %c0_i32_0 : i32, i32
  }
  func.func @transform_9(%arg0: i32) -> (i32, i32) {
    %c0_i32 = arith.constant 0 : i32
    %c0_i32_0 = arith.constant 0 : i32
    %c0_i32_1 = arith.constant 0 : i32
    return %c0_i32, %c0_i32_0 : i32, i32
  }
  func.func @transform_10(%arg0: i32) -> (i32, i32) {
    %c0_i32 = arith.constant 0 : i32
    %c0_i32_0 = arith.constant 0 : i32
    %c0_i32_1 = arith.constant 0 : i32
    return %c0_i32, %c0_i32_0 : i32, i32
  }
}

</mosaic_0001>

<llo_original>
// kernel: tpu_custom_call.1
$region0: #{tpu_custom_call.1}
  #allocation0 [shape = 'u32[]', space=smem, size = 0x4, offset = 0x4, fixed_abs, tag = 'smem constant byte address 0x4 - core index']
  #allocation1 [shape = 'u32[144,128]{1,0:T(1,128)}', space=vmem, size = 0x12000, scoped, tag = 'internal scratch']
  #allocation2 [shape = 'f32[8,128]{1,0:T(8,128)}', space=vmem, size = 0x1000, scoped, tag = 'scratch operand']
  %s0 = inlined_call_operand.vmem [shape: f32[8,8], index: 0, kind: input, shape index: {}]
  %s1 = inlined_call_operand.vmem [shape: f32[8,128], index: 1, kind: input, shape index: {}]
  %s2 = inlined_call_operand.vmem [shape: f32[2,8,128], index: 2, kind: input, shape index: {}]
  %s3 = inlined_call_operand.vmem [shape: f32[2,1,512], index: 3, kind: input, shape index: {}]
  %s4 = inlined_call_operand.vmem [shape: bf16[2,12,128,32], index: 4, kind: input, shape index: {}]
  %s5 = inlined_call_operand.vmem [shape: bf16[2,4,32,128], index: 5, kind: input, shape index: {}]
  %s6 = inlined_call_operand.vmem [shape: bf16[2,128,512], index: 6, kind: input, shape index: {}]
  %s7 = inlined_call_operand.vmem [shape: bf16[2,512,128], index: 7, kind: input, shape index: {}]
  %s8 = inlined_call_operand.vmem [shape: f32[1,128], index: 8, kind: input, shape index: {}]
  %s9 = inlined_call_operand.vmem [shape: f32[1,128], index: 9, kind: input, shape index: {}]
  %s10 = inlined_call_operand.hbm [shape: f32[8,128], index: 10, kind: output, shape index: {}]
  %s11 = sld [smem:[#allocation0]]
  $region81: #{tpu_custom_call.1} parent=0
    _
  %s13 = ssub.s32 1, %s11
  %s14 = scalar_select 0, %s13, %s11
  $region1: #{tpu_custom_call.1} parent=0
    #allocation3 [shape = 'u8[4096]{0}', space=vmem, size = 0x1000, scoped, tag = 'output window, operand 0, single buffered']
    #allocation4 [shape = 's32[2]{0}', space=sflag, size = 0x8, scoped, tag = 'scoped memory for tpu_custom_call.1']
    %15 = vsyncpa [#allocation4], 0
    loop: start=0, step=1, limit=4
    $region2: #{tpu_custom_call.1} parent=1 // loop_pre_header
      _
    $region3: #{tpu_custom_call.1} parent=1 // loop_header
      %s17 = sphi 0, %s21
      %p18 = scmp.ge.s32.totalorder %s17, 4
      %s25 = sphi 0, %s25
      %s27 = sphi 0, %s25
      %s28 = sphi 0, %s27
      %s42 = sphi 0, %s28
      %s46 = sphi 0, %s46
      %s48 = sphi 0, %s46
      %s49 = sphi 0, %s48
      %s63 = sphi 0, %s49
      %s69 = sphi 0, %s71
      %s72 = sphi 0, %s69
      %s73 = sphi 0, %s72
      %s89 = sphi 0, %s73
      %s95 = sphi 0, %s97
      %s98 = sphi 0, %s95
      %s99 = sphi 0, %s98
      %s115 = sphi 0, %s99
      %s121 = sphi 0, %s123
      %s124 = sphi 0, %s121
      %s125 = sphi 0, %s124
      %s141 = sphi 0, %s125
      %s147 = sphi 0, %s149
      %s150 = sphi 0, %s147
      %s151 = sphi 0, %s150
      %s167 = sphi 0, %s151
      %s173 = sphi 0, %s175
      %s176 = sphi 0, %s173
      %s177 = sphi 0, %s176
      %s193 = sphi 0, %s177
      %s199 = sphi 0, %s201
      %s202 = sphi 0, %s199
      %s203 = sphi 0, %s202
      %s219 = sphi 0, %s203
      %s223 = sphi 0, %s223
      %s225 = sphi 0, %s223
      %s226 = sphi 0, %s225
      %s240 = sphi 0, %s226
      %s244 = sphi 0, %s244
      %s246 = sphi 0, %s244
      %s247 = sphi 0, %s246
      %s261 = sphi 0, %s247
      %s265 = sphi 0, %s265
      %s267 = sphi 0, %s265
      %s268 = sphi 0, %s267
      %s282 = sphi 0, %s268
    $region4: #{tpu_custom_call.1} parent=1 // loop_header_branch
      %20 = sbr.rel (%p18) target = $region8
    $region5: #{tpu_custom_call.1} parent=1 // loop_body
      %s22 = ssub.s32 %s17, 1
      %s23 = ssub.s32 %s17, 2
      %s24 = sadd.s32 %s17, 1
      %s26 = sadd.s32 %s25, 1
      %p29 = scmp.eq.s32.totalorder %s17, 1
      %p30 = scmp.ne.s32.totalorder %s25, %s27
      %p31 = scmp.eq.s32.totalorder %s17, 0
      %p32 = por %p30, %p31
      %p33 = scmp.ne.s32.totalorder %s25, %s27
      %p34 = scmp.eq.s32.totalorder %s22, 1
      %p35 = por %p33, %p34
      %p36 = scmp.ne.s32.totalorder %s27, %s28
      %p37 = scmp.eq.s32.totalorder %s22, 0
      %p38 = por %p36, %p37
      %p39 = scmp.ne.s32.totalorder %s27, %s28
      %p40 = scmp.eq.s32.totalorder %s23, 1
      %p41 = por %p39, %p40
      %p43 = scmp.ne.s32.totalorder %s28, %s42
      %p44 = scmp.eq.s32.totalorder %s23, 0
      %p45 = por %p43, %p44
      %s47 = sadd.s32 %s46, 1
      %p50 = scmp.eq.s32.totalorder %s17, 1
      %p51 = scmp.ne.s32.totalorder %s46, %s48
      %p52 = scmp.eq.s32.totalorder %s17, 0
      %p53 = por %p51, %p52
      %p54 = scmp.ne.s32.totalorder %s46, %s48
      %p55 = scmp.eq.s32.totalorder %s22, 1
      %p56 = por %p54, %p55
      %p57 = scmp.ne.s32.totalorder %s48, %s49
      %p58 = scmp.eq.s32.totalorder %s22, 0
      %p59 = por %p57, %p58
      %p60 = scmp.ne.s32.totalorder %s48, %s49
      %p61 = scmp.eq.s32.totalorder %s23, 1
      %p62 = por %p60, %p61
      %p64 = scmp.ne.s32.totalorder %s49, %s63
      %p65 = scmp.eq.s32.totalorder %s23, 0
      %p66 = por %p64, %p65
      %s67 = ssub.s32 %s17, %s24
      %p68 = scmp.eq.s32.totalorder %s67, 0
      %s70 = sadd.s32 %s69, 1
      %s71 = scalar_select %p68, %s69, %s70
      %p74 = pneg %p68
      %p75 = scmp.eq.s32.totalorder %s17, 1
      %p76 = por %p74, %p75
      %p77 = scmp.ne.s32.totalorder %s69, %s72
      %p78 = scmp.eq.s32.totalorder %s17, 0
      %p79 = por %p77, %p78
      %p80 = scmp.ne.s32.totalorder %s69, %s72
      %p81 = scmp.eq.s32.totalorder %s22, 1
      %p82 = por %p80, %p81
      %p83 = scmp.ne.s32.totalorder %s72, %s73
      %p84 = scmp.eq.s32.totalorder %s22, 0
      %p85 = por %p83, %p84
      %p86 = scmp.ne.s32.totalorder %s72, %s73
      %p87 = scmp.eq.s32.totalorder %s23, 1
      %p88 = por %p86, %p87
      %p90 = scmp.ne.s32.totalorder %s73, %s89
      %p91 = scmp.eq.s32.totalorder %s23, 0
      %p92 = por %p90, %p91
      %s93 = ssub.s32 %s17, %s24
      %p94 = scmp.eq.s32.totalorder %s93, 0
      %s96 = sadd.s32 %s95, 1
      %s97 = scalar_select %p94, %s95, %s96
      %p100 = pneg %p94
      %p101 = scmp.eq.s32.totalorder %s17, 1
      %p102 = por %p100, %p101
      %p103 = scmp.ne.s32.totalorder %s95, %s98
      %p104 = scmp.eq.s32.totalorder %s17, 0
      %p105 = por %p103, %p104
      %p106 = scmp.ne.s32.totalorder %s95, %s98
      %p107 = scmp.eq.s32.totalorder %s22, 1
      %p108 = por %p106, %p107
      %p109 = scmp.ne.s32.totalorder %s98, %s99
      %p110 = scmp.eq.s32.totalorder %s22, 0
      %p111 = por %p109, %p110
      %p112 = scmp.ne.s32.totalorder %s98, %s99
      %p113 = scmp.eq.s32.totalorder %s23, 1
      %p114 = por %p112, %p113
      %p116 = scmp.ne.s32.totalorder %s99, %s115
      %p117 = scmp.eq.s32.totalorder %s23, 0
      %p118 = por %p116, %p117
      %s119 = ssub.s32 %s17, %s24
      %p120 = scmp.eq.s32.totalorder %s119, 0
      %s122 = sadd.s32 %s121, 1
      %s123 = scalar_select %p120, %s121, %s122
      %p126 = pneg %p120
      %p127 = scmp.eq.s32.totalorder %s17, 1
      %p128 = por %p126, %p127
      %p129 = scmp.ne.s32.totalorder %s121, %s124
      %p130 = scmp.eq.s32.totalorder %s17, 0
      %p131 = por %p129, %p130
      %p132 = scmp.ne.s32.totalorder %s121, %s124
      %p133 = scmp.eq.s32.totalorder %s22, 1
      %p134 = por %p132, %p133
      %p135 = scmp.ne.s32.totalorder %s124, %s125
      %p136 = scmp.eq.s32.totalorder %s22, 0
      %p137 = por %p135, %p136
      %p138 = scmp.ne.s32.totalorder %s124, %s125
      %p139 = scmp.eq.s32.totalorder %s23, 1
      %p140 = por %p138, %p139
      %p142 = scmp.ne.s32.totalorder %s125, %s141
      %p143 = scmp.eq.s32.totalorder %s23, 0
      %p144 = por %p142, %p143
      %s145 = ssub.s32 %s17, %s24
      %p146 = scmp.eq.s32.totalorder %s145, 0
      %s148 = sadd.s32 %s147, 1
      %s149 = scalar_select %p146, %s147, %s148
      %p152 = pneg %p146
      %p153 = scmp.eq.s32.totalorder %s17, 1
      %p154 = por %p152, %p153
      %p155 = scmp.ne.s32.totalorder %s147, %s150
      %p156 = scmp.eq.s32.totalorder %s17, 0
      %p157 = por %p155, %p156
      %p158 = scmp.ne.s32.totalorder %s147, %s150
      %p159 = scmp.eq.s32.totalorder %s22, 1
      %p160 = por %p158, %p159
      %p161 = scmp.ne.s32.totalorder %s150, %s151
      %p162 = scmp.eq.s32.totalorder %s22, 0
      %p163 = por %p161, %p162
      %p164 = scmp.ne.s32.totalorder %s150, %s151
      %p165 = scmp.eq.s32.totalorder %s23, 1
      %p166 = por %p164, %p165
      %p168 = scmp.ne.s32.totalorder %s151, %s167
      %p169 = scmp.eq.s32.totalorder %s23, 0
      %p170 = por %p168, %p169
      %s171 = ssub.s32 %s17, %s24
      %p172 = scmp.eq.s32.totalorder %s171, 0
      %s174 = sadd.s32 %s173, 1
      %s175 = scalar_select %p172, %s173, %s174
      %p178 = pneg %p172
      %p179 = scmp.eq.s32.totalorder %s17, 1
      %p180 = por %p178, %p179
      %p181 = scmp.ne.s32.totalorder %s173, %s176
      %p182 = scmp.eq.s32.totalorder %s17, 0
      %p183 = por %p181, %p182
      %p184 = scmp.ne.s32.totalorder %s173, %s176
      %p185 = scmp.eq.s32.totalorder %s22, 1
      %p186 = por %p184, %p185
      %p187 = scmp.ne.s32.totalorder %s176, %s177
      %p188 = scmp.eq.s32.totalorder %s22, 0
      %p189 = por %p187, %p188
      %p190 = scmp.ne.s32.totalorder %s176, %s177
      %p191 = scmp.eq.s32.totalorder %s23, 1
      %p192 = por %p190, %p191
      %p194 = scmp.ne.s32.totalorder %s177, %s193
      %p195 = scmp.eq.s32.totalorder %s23, 0
      %p196 = por %p194, %p195
      %s197 = ssub.s32 %s17, %s24
      %p198 = scmp.eq.s32.totalorder %s197, 0
      %s200 = sadd.s32 %s199, 1
      %s201 = scalar_select %p198, %s199, %s200
      %p204 = pneg %p198
      %p205 = scmp.eq.s32.totalorder %s17, 1
      %p206 = por %p204, %p205
      %p207 = scmp.ne.s32.totalorder %s199, %s202
      %p208 = scmp.eq.s32.totalorder %s17, 0
      %p209 = por %p207, %p208
      %p210 = scmp.ne.s32.totalorder %s199, %s202
      %p211 = scmp.eq.s32.totalorder %s22, 1
      %p212 = por %p210, %p211
      %p213 = scmp.ne.s32.totalorder %s202, %s203
      %p214 = scmp.eq.s32.totalorder %s22, 0
      %p215 = por %p213, %p214
      %p216 = scmp.ne.s32.totalorder %s202, %s203
      %p217 = scmp.eq.s32.totalorder %s23, 1
      %p218 = por %p216, %p217
      %p220 = scmp.ne.s32.totalorder %s203, %s219
      %p221 = scmp.eq.s32.totalorder %s23, 0
      %p222 = por %p220, %p221
      %s224 = sadd.s32 %s223, 1
      %p227 = scmp.eq.s32.totalorder %s17, 1
      %p228 = scmp.ne.s32.totalorder %s223, %s225
      %p229 = scmp.eq.s32.totalorder %s17, 0
      %p230 = por %p228, %p229
      %p231 = scmp.ne.s32.totalorder %s223, %s225
      %p232 = scmp.eq.s32.totalorder %s22, 1
      %p233 = por %p231, %p232
      %p234 = scmp.ne.s32.totalorder %s225, %s226
      %p235 = scmp.eq.s32.totalorder %s22, 0
      %p236 = por %p234, %p235
      %p237 = scmp.ne.s32.totalorder %s225, %s226
      %p238 = scmp.eq.s32.totalorder %s23, 1
      %p239 = por %p237, %p238
      %p241 = scmp.ne.s32.totalorder %s226, %s240
      %p242 = scmp.eq.s32.totalorder %s23, 0
      %p243 = por %p241, %p242
      %s245 = sadd.s32 %s244, 1
      %p248 = scmp.eq.s32.totalorder %s17, 1
      %p249 = scmp.ne.s32.totalorder %s244, %s246
      %p250 = scmp.eq.s32.totalorder %s17, 0
      %p251 = por %p249, %p250
      %p252 = scmp.ne.s32.totalorder %s244, %s246
      %p253 = scmp.eq.s32.totalorder %s22, 1
      %p254 = por %p252, %p253
      %p255 = scmp.ne.s32.totalorder %s246, %s247
      %p256 = scmp.eq.s32.totalorder %s22, 0
      %p257 = por %p255, %p256
      %p258 = scmp.ne.s32.totalorder %s246, %s247
      %p259 = scmp.eq.s32.totalorder %s23, 1
      %p260 = por %p258, %p259
      %p262 = scmp.ne.s32.totalorder %s247, %s261
      %p263 = scmp.eq.s32.totalorder %s23, 0
      %p264 = por %p262, %p263
      %s266 = sadd.s32 %s265, 1
      %p269 = scmp.eq.s32.totalorder %s17, 1
      %p270 = scmp.ne.s32.totalorder %s265, %s267
      %p271 = scmp.eq.s32.totalorder %s17, 0
      %p272 = por %p270, %p271
      %p273 = scmp.ne.s32.totalorder %s265, %s267
      %p274 = scmp.eq.s32.totalorder %s22, 1
      %p275 = por %p273, %p274
      %p276 = scmp.ne.s32.totalorder %s267, %s268
      %p277 = scmp.eq.s32.totalorder %s22, 0
      %p278 = por %p276, %p277
      %p279 = scmp.ne.s32.totalorder %s267, %s268
      %p280 = scmp.eq.s32.totalorder %s23, 1
      %p281 = por %p279, %p280
      %p283 = scmp.ne.s32.totalorder %s268, %s282
      %p284 = scmp.eq.s32.totalorder %s23, 0
      %p285 = por %p283, %p284
      %p286 = scmp.le.s32.totalorder 1, %s17
      %p287 = scmp.lt.s32.totalorder %s17, 3
      %p288 = pnand %p286, %p287
      %p289 = pneg %p288
      // Predicated region
      $region9: #{tpu_custom_call.1} parent=5 // pred_check
        _
      $region10: #{tpu_custom_call.1} parent=5 // pred_check_branch
        %291 = sbr.rel (%p288) target = $region12
      $region11: #{tpu_custom_call.1} parent=5 // pred_region
        %s292 = ssub.s32 %s17, 1
        // Predicated region
        $region13: #{tpu_custom_call.1} parent=11 // pred_check
          %p293 = pneg %p38
        $region14: #{tpu_custom_call.1} parent=11 // pred_check_branch
          %295 = sbr.rel (%p293) target = $region16
        $region15: #{tpu_custom_call.1} parent=11 // pred_region
          _
        $region16: #{tpu_custom_call.1} parent=11 // pred_fallthru
          _
        // Predicated region
        $region17: #{tpu_custom_call.1} parent=11 // pred_check
          %p296 = pneg %p59
        $region18: #{tpu_custom_call.1} parent=11 // pred_check_branch
          %298 = sbr.rel (%p296) target = $region20
        $region19: #{tpu_custom_call.1} parent=11 // pred_region
          _
        $region20: #{tpu_custom_call.1} parent=11 // pred_fallthru
          _
        // Predicated region
        $region21: #{tpu_custom_call.1} parent=11 // pred_check
          %p299 = pneg %p236
        $region22: #{tpu_custom_call.1} parent=11 // pred_check_branch
          %301 = sbr.rel (%p299) target = $region24
        $region23: #{tpu_custom_call.1} parent=11 // pred_region
          _
        $region24: #{tpu_custom_call.1} parent=11 // pred_fallthru
          _
        // Predicated region
        $region25: #{tpu_custom_call.1} parent=11 // pred_check
          %p302 = pneg %p257
        $region26: #{tpu_custom_call.1} parent=11 // pred_check_branch
          %304 = sbr.rel (%p302) target = $region28
        $region27: #{tpu_custom_call.1} parent=11 // pred_region
          _
        $region28: #{tpu_custom_call.1} parent=11 // pred_fallthru
          _
      $region12: #{tpu_custom_call.1} parent=5 // pred_fallthru
        _
      %p305 = scmp.lt.s32.totalorder %s17, 2
      // Predicated region
      $region29: #{tpu_custom_call.1} parent=5 // pred_check
        %p306 = pneg %p305
      $region30: #{tpu_custom_call.1} parent=5 // pred_check_branch
        %308 = sbr.rel (%p306) target = $region32
      $region31: #{tpu_custom_call.1} parent=5 // pred_region
        // Predicated region
        $region33: #{tpu_custom_call.1} parent=31 // pred_check
          %p309 = pneg %p79
        $region34: #{tpu_custom_call.1} parent=31 // pred_check_branch
          %311 = sbr.rel (%p309) target = $region36
        $region35: #{tpu_custom_call.1} parent=31 // pred_region
          %p312 = scmp.lt.s32.totalorder %s17, 1
          %s313 = scalar_select %p312, %s17, 1
          %s314 = smul.addr %s313, 8
          %s315 = scalar_lea.vmem %s2, %s314
        $region36: #{tpu_custom_call.1} parent=31 // pred_fallthru
          _
        // Predicated region
        $region37: #{tpu_custom_call.1} parent=31 // pred_check
          %p316 = pneg %p105
        $region38: #{tpu_custom_call.1} parent=31 // pred_check_branch
          %318 = sbr.rel (%p316) target = $region40
        $region39: #{tpu_custom_call.1} parent=31 // pred_region
          %p319 = scmp.lt.s32.totalorder %s17, 1
          %s320 = scalar_select %p319, %s17, 1
          %s321 = smul.addr %s320, 4
          %s322 = scalar_lea.vmem %s3, %s321
        $region40: #{tpu_custom_call.1} parent=31 // pred_fallthru
          _
        // Predicated region
        $region41: #{tpu_custom_call.1} parent=31 // pred_check
          %p323 = pneg %p131
        $region42: #{tpu_custom_call.1} parent=31 // pred_check_branch
          %325 = sbr.rel (%p323) target = $region44
        $region43: #{tpu_custom_call.1} parent=31 // pred_region
          %p326 = scmp.lt.s32.totalorder %s17, 1
          %s327 = scalar_select %p326, %s17, 1
          %s328 = smul.addr %s327, 192
          %s329 = smul.addr %s328, 4
          %s330 = scalar_lea.vmem %s4, %s329
        $region44: #{tpu_custom_call.1} parent=31 // pred_fallthru
          _
        // Predicated region
        $region45: #{tpu_custom_call.1} parent=31 // pred_check
          %p331 = pneg %p157
        $region46: #{tpu_custom_call.1} parent=31 // pred_check_branch
          %333 = sbr.rel (%p331) target = $region48
        $region47: #{tpu_custom_call.1} parent=31 // pred_region
          %p334 = scmp.lt.s32.totalorder %s17, 1
          %s335 = scalar_select %p334, %s17, 1
          %s336 = smul.addr %s335, 16
          %s337 = smul.addr %s336, 4
          %s338 = scalar_lea.vmem %s5, %s337
        $region48: #{tpu_custom_call.1} parent=31 // pred_fallthru
          _
        // Predicated region
        $region49: #{tpu_custom_call.1} parent=31 // pred_check
          %p339 = pneg %p183
        $region50: #{tpu_custom_call.1} parent=31 // pred_check_branch
          %341 = sbr.rel (%p339) target = $region52
        $region51: #{tpu_custom_call.1} parent=31 // pred_region
          %p342 = scmp.lt.s32.totalorder %s17, 1
          %s343 = scalar_select %p342, %s17, 1
          %s344 = smul.addr %s343, 64
          %s345 = smul.addr %s344, 4
          %s346 = scalar_lea.vmem %s6, %s345
        $region52: #{tpu_custom_call.1} parent=31 // pred_fallthru
          _
        // Predicated region
        $region53: #{tpu_custom_call.1} parent=31 // pred_check
          %p347 = pneg %p209
        $region54: #{tpu_custom_call.1} parent=31 // pred_check_branch
          %349 = sbr.rel (%p347) target = $region56
        $region55: #{tpu_custom_call.1} parent=31 // pred_region
          %p350 = scmp.lt.s32.totalorder %s17, 1
          %s351 = scalar_select %p350, %s17, 1
          %s352 = smul.addr %s351, 64
          %s353 = smul.addr %s352, 4
          %s354 = scalar_lea.vmem %s7, %s353
        $region56: #{tpu_custom_call.1} parent=31 // pred_fallthru
          _
      $region32: #{tpu_custom_call.1} parent=5 // pred_fallthru
        _
      %p355 = scmp.le.s32.totalorder 1, %s17
      %p356 = scmp.lt.s32.totalorder %s17, 3
      %p357 = pnand %p355, %p356
      %p358 = pneg %p357
      // Predicated region
      $region57: #{tpu_custom_call.1} parent=5 // pred_check
        _
      $region58: #{tpu_custom_call.1} parent=5 // pred_check_branch
        %360 = sbr.rel (%p357) target = $region60
      $region59: #{tpu_custom_call.1} parent=5 // pred_region
        %s361 = ssub.s32 %s17, 1
        %p362 = pneg %p38
        %p363 = pneg %p35
        %p364 = pneg %p59
        %p365 = pneg %p56
        %p366 = scmp.lt.s32.totalorder %s22, 1
        %s367 = scalar_select %p366, %s22, 1
        %s368 = smul.addr %s367, 8
        %s369 = scalar_lea.vmem %s2, %s368
        %p370 = pneg %p85
        %p371 = pneg %p82
        %p372 = scmp.lt.s32.totalorder %s22, 1
        %s373 = scalar_select %p372, %s22, 1
        %s374 = smul.addr %s373, 4
        %s375 = scalar_lea.vmem %s3, %s374
        %p376 = pneg %p111
        %p377 = pneg %p108
        %p378 = scmp.lt.s32.totalorder %s22, 1
        %s379 = scalar_select %p378, %s22, 1
        %s380 = smul.addr %s379, 192
        %s381 = smul.addr %s380, 4
        %s382 = scalar_lea.vmem %s4, %s381
        %p383 = pneg %p137
        %p384 = pneg %p134
        %p385 = scmp.lt.s32.totalorder %s22, 1
        %s386 = scalar_select %p385, %s22, 1
        %s387 = smul.addr %s386, 16
        %s388 = smul.addr %s387, 4
        %s389 = scalar_lea.vmem %s5, %s388
        %p390 = pneg %p163
        %p391 = pneg %p160
        %p392 = scmp.lt.s32.totalorder %s22, 1
        %s393 = scalar_select %p392, %s22, 1
        %s394 = smul.addr %s393, 64
        %s395 = smul.addr %s394, 4
        %s396 = scalar_lea.vmem %s6, %s395
        %p397 = pneg %p189
        %p398 = pneg %p186
        %p399 = scmp.lt.s32.totalorder %s22, 1
        %s400 = scalar_select %p399, %s22, 1
        %s401 = smul.addr %s400, 64
        %s402 = smul.addr %s401, 4
        %s403 = scalar_lea.vmem %s7, %s402
        %p404 = pneg %p215
        %p405 = pneg %p212
        %p406 = pneg %p236
        %p407 = pneg %p233
        %p408 = pneg %p257
        %p409 = pneg %p254
        %p410 = pneg %p278
        %p411 = pneg %p275
        %p412 = scmp.lt.s32.totalorder %s22, 1
        %s413 = scalar_select %p412, %s22, 1
        %s414 = smul.addr %s413, 8
        %s415 = scalar_lea.vmem %s2, %s414
        %p416 = scmp.lt.s32.totalorder %s22, 1
        %s417 = scalar_select %p416, %s22, 1
        %s418 = smul.addr %s417, 4
        %s419 = scalar_lea.vmem %s3, %s418
        %p420 = scmp.lt.s32.totalorder %s22, 1
        %s421 = scalar_select %p420, %s22, 1
        %s422 = smul.addr %s421, 192
        %s423 = smul.addr %s422, 4
        %s424 = scalar_lea.vmem %s4, %s423
        %p425 = scmp.lt.s32.totalorder %s22, 1
        %s426 = scalar_select %p425, %s22, 1
        %s427 = smul.addr %s426, 16
        %s428 = smul.addr %s427, 4
        %s429 = scalar_lea.vmem %s5, %s428
        %p430 = scmp.lt.s32.totalorder %s22, 1
        %s431 = scalar_select %p430, %s22, 1
        %s432 = smul.addr %s431, 64
        %s433 = smul.addr %s432, 4
        %s434 = scalar_lea.vmem %s6, %s433
        %p435 = scmp.lt.s32.totalorder %s22, 1
        %s436 = scalar_select %p435, %s22, 1
        %s437 = smul.addr %s436, 64
        %s438 = smul.addr %s437, 4
        %s439 = scalar_lea.vmem %s7, %s438
        %p441 = scmp.eq.s32.totalorder %s22, 0
        // Predicated region
        $region61: #{tpu_custom_call.1} parent=59 // pred_check
          %p442 = pneg %p441
        $region62: #{tpu_custom_call.1} parent=59 // pred_check_branch
          %444 = sbr.rel (%p442) target = $region64
        $region63: #{tpu_custom_call.1} parent=59 // pred_region
          %v445 = vld [vmem:[%s1] sm:$0xff]
          %446 = vst [vmem:[#allocation2] sm:$0xff] %v445
        $region64: #{tpu_custom_call.1} parent=59 // pred_fallthru
          _
        %v447 = vld [vmem:[#allocation2] sm:$0xff]
        %v448 = vld [vmem:[%s415] sm:$0xff]
        %449 = vadd.xlane.f32.xlu0 %v447
        %v450 = vpop.xlane.xlu0 %449
        %v451 = vrcp.pop 128.0
        %v452 = vmul.f32 %v450, %v451
        %v453 = vsub.f32 %v447, %v452
        %v454 = vmul.f32 %v453, %v453
        %455 = vadd.xlane.f32.xlu0 %v454
        %v456 = vpop.xlane.xlu0 %455
        %v457 = vmul.f32 %v456, %v451
        %v458 = vadd.f32 %v457, 1e-05
        %v459 = vrsqrt.pop %v458
        %v460 = vmul.f32 %v453, %v459
        %v461 = vlaneseq
        %v462 = vshrl.u32 %v461, 7
        %v463 = vsub.s32 0, %v462
        %v464 = vrot.slane %v448, %v463
        %v465 = vmul.f32 %v460, %v464
        %v466 = vlaneseq
        %v467 = vshrl.u32 %v466, 7
        %v468 = vsub.s32 1, %v467
        %v469 = vrot.slane %v448, %v468
        %v470 = vadd.f32 %v465, %v469
        %v471 = vpack.c.bf16 %v470, %v470
        %v472 = vld [vmem:[%s424] sm:$0xf]
        %v473 = vld [vmem:[%s424 + $0x4] sm:$0xf]
        %v474 = vld [vmem:[%s424 + $0x8] sm:$0xf]
        %v475 = vld [vmem:[%s424 + $0xc] sm:$0xf]
        %v476 = vld [vmem:[%s424 + $0x10] sm:$0xf]
        %v477 = vld [vmem:[%s424 + $0x14] sm:$0xf]
        %v478 = vld [vmem:[%s424 + $0x18] sm:$0xf]
        %v479 = vld [vmem:[%s424 + $0x1c] sm:$0xf]
        %v480 = vld [vmem:[%s424 + $0x20] sm:$0xf]
        %v481 = vld [vmem:[%s424 + $0x24] sm:$0xf]
        %v482 = vld [vmem:[%s424 + $0x28] sm:$0xf]
        %v483 = vld [vmem:[%s424 + $0x2c] sm:$0xf]
        %v484 = vld [vmem:[%s424 + $0x30] sm:$0xf]
        %v485 = vld [vmem:[%s424 + $0x34] sm:$0xf]
        %v486 = vld [vmem:[%s424 + $0x38] sm:$0xf]
        %v487 = vld [vmem:[%s424 + $0x3c] sm:$0xf]
        %v488 = vld [vmem:[%s424 + $0x40] sm:$0xf]
        %v489 = vld [vmem:[%s424 + $0x44] sm:$0xf]
        %v490 = vld [vmem:[%s424 + $0x48] sm:$0xf]
        %v491 = vld [vmem:[%s424 + $0x4c] sm:$0xf]
        %v492 = vld [vmem:[%s424 + $0x50] sm:$0xf]
        %v493 = vld [vmem:[%s424 + $0x54] sm:$0xf]
        %v494 = vld [vmem:[%s424 + $0x58] sm:$0xf]
        %v495 = vld [vmem:[%s424 + $0x5c] sm:$0xf]
        %v496 = vld [vmem:[%s424 + $0x60] sm:$0xf]
        %v497 = vld [vmem:[%s424 + $0x64] sm:$0xf]
        %v498 = vld [vmem:[%s424 + $0x68] sm:$0xf]
        %v499 = vld [vmem:[%s424 + $0x6c] sm:$0xf]
        %v500 = vld [vmem:[%s424 + $0x70] sm:$0xf]
        %v501 = vld [vmem:[%s424 + $0x74] sm:$0xf]
        %v502 = vld [vmem:[%s424 + $0x78] sm:$0xf]
        %v503 = vld [vmem:[%s424 + $0x7c] sm:$0xf]
        %v504 = vld [vmem:[%s424 + $0x80] sm:$0xf]
        %v505 = vld [vmem:[%s424 + $0x84] sm:$0xf]
        %v506 = vld [vmem:[%s424 + $0x88] sm:$0xf]
        %v507 = vld [vmem:[%s424 + $0x8c] sm:$0xf]
        %v508 = vld [vmem:[%s424 + $0x90] sm:$0xf]
        %v509 = vld [vmem:[%s424 + $0x94] sm:$0xf]
        %v510 = vld [vmem:[%s424 + $0x98] sm:$0xf]
        %v511 = vld [vmem:[%s424 + $0x9c] sm:$0xf]
        %v512 = vld [vmem:[%s424 + $0xa0] sm:$0xf]
        %v513 = vld [vmem:[%s424 + $0xa4] sm:$0xf]
        %v514 = vld [vmem:[%s424 + $0xa8] sm:$0xf]
        %v515 = vld [vmem:[%s424 + $0xac] sm:$0xf]
        %v516 = vld [vmem:[%s424 + $0xb0] sm:$0xf]
        %v517 = vld [vmem:[%s424 + $0xb4] sm:$0xf]
        %v518 = vld [vmem:[%s424 + $0xb8] sm:$0xf]
        %v519 = vld [vmem:[%s424 + $0xbc] sm:$0xf]
        %v520 = vld [vmem:[%s424 + $0xc0] sm:$0xf]
        %v521 = vld [vmem:[%s424 + $0xc4] sm:$0xf]
        %v522 = vld [vmem:[%s424 + $0xc8] sm:$0xf]
        %v523 = vld [vmem:[%s424 + $0xcc] sm:$0xf]
        %v524 = vld [vmem:[%s424 + $0xd0] sm:$0xf]
        %v525 = vld [vmem:[%s424 + $0xd4] sm:$0xf]
        %v526 = vld [vmem:[%s424 + $0xd8] sm:$0xf]
        %v527 = vld [vmem:[%s424 + $0xdc] sm:$0xf]
        %v528 = vld [vmem:[%s424 + $0xe0] sm:$0xf]
        %v529 = vld [vmem:[%s424 + $0xe4] sm:$0xf]
        %v530 = vld [vmem:[%s424 + $0xe8] sm:$0xf]
        %v531 = vld [vmem:[%s424 + $0xec] sm:$0xf]
        %v532 = vld [vmem:[%s424 + $0xf0] sm:$0xf]
        %v533 = vld [vmem:[%s424 + $0xf4] sm:$0xf]
        %v534 = vld [vmem:[%s424 + $0xf8] sm:$0xf]
        %v535 = vld [vmem:[%s424 + $0xfc] sm:$0xf]
        %v536 = vld [vmem:[%s424 + $0x100] sm:$0xf]
        %v537 = vld [vmem:[%s424 + $0x104] sm:$0xf]
        %v538 = vld [vmem:[%s424 + $0x108] sm:$0xf]
        %v539 = vld [vmem:[%s424 + $0x10c] sm:$0xf]
        %v540 = vld [vmem:[%s424 + $0x110] sm:$0xf]
        %v541 = vld [vmem:[%s424 + $0x114] sm:$0xf]
        %v542 = vld [vmem:[%s424 + $0x118] sm:$0xf]
        %v543 = vld [vmem:[%s424 + $0x11c] sm:$0xf]
        %v544 = vld [vmem:[%s424 + $0x120] sm:$0xf]
        %v545 = vld [vmem:[%s424 + $0x124] sm:$0xf]
        %v546 = vld [vmem:[%s424 + $0x128] sm:$0xf]
        %v547 = vld [vmem:[%s424 + $0x12c] sm:$0xf]
        %v548 = vld [vmem:[%s424 + $0x130] sm:$0xf]
        %v549 = vld [vmem:[%s424 + $0x134] sm:$0xf]
        %v550 = vld [vmem:[%s424 + $0x138] sm:$0xf]
        %v551 = vld [vmem:[%s424 + $0x13c] sm:$0xf]
        %v552 = vld [vmem:[%s424 + $0x140] sm:$0xf]
        %v553 = vld [vmem:[%s424 + $0x144] sm:$0xf]
        %v554 = vld [vmem:[%s424 + $0x148] sm:$0xf]
        %v555 = vld [vmem:[%s424 + $0x14c] sm:$0xf]
        %v556 = vld [vmem:[%s424 + $0x150] sm:$0xf]
        %v557 = vld [vmem:[%s424 + $0x154] sm:$0xf]
        %v558 = vld [vmem:[%s424 + $0x158] sm:$0xf]
        %v559 = vld [vmem:[%s424 + $0x15c] sm:$0xf]
        %v560 = vld [vmem:[%s424 + $0x160] sm:$0xf]
        %v561 = vld [vmem:[%s424 + $0x164] sm:$0xf]
        %v562 = vld [vmem:[%s424 + $0x168] sm:$0xf]
        %v563 = vld [vmem:[%s424 + $0x16c] sm:$0xf]
        %v564 = vld [vmem:[%s424 + $0x170] sm:$0xf]
        %v565 = vld [vmem:[%s424 + $0x174] sm:$0xf]
        %v566 = vld [vmem:[%s424 + $0x178] sm:$0xf]
        %v567 = vld [vmem:[%s424 + $0x17c] sm:$0xf]
        %v568 = vld [vmem:[%s424 + $0x180] sm:$0xf]
        %v569 = vld [vmem:[%s424 + $0x184] sm:$0xf]
        %v570 = vld [vmem:[%s424 + $0x188] sm:$0xf]
        %v571 = vld [vmem:[%s424 + $0x18c] sm:$0xf]
        %v572 = vld [vmem:[%s424 + $0x190] sm:$0xf]
        %v573 = vld [vmem:[%s424 + $0x194] sm:$0xf]
        %v574 = vld [vmem:[%s424 + $0x198] sm:$0xf]
        %v575 = vld [vmem:[%s424 + $0x19c] sm:$0xf]
        %v576 = vld [vmem:[%s424 + $0x1a0] sm:$0xf]
        %v577 = vld [vmem:[%s424 + $0x1a4] sm:$0xf]
        %v578 = vld [vmem:[%s424 + $0x1a8] sm:$0xf]
        %v579 = vld [vmem:[%s424 + $0x1ac] sm:$0xf]
        %v580 = vld [vmem:[%s424 + $0x1b0] sm:$0xf]
        %v581 = vld [vmem:[%s424 + $0x1b4] sm:$0xf]
        %v582 = vld [vmem:[%s424 + $0x1b8] sm:$0xf]
        %v583 = vld [vmem:[%s424 + $0x1bc] sm:$0xf]
        %v584 = vld [vmem:[%s424 + $0x1c0] sm:$0xf]
        %v585 = vld [vmem:[%s424 + $0x1c4] sm:$0xf]
        %v586 = vld [vmem:[%s424 + $0x1c8] sm:$0xf]
        %v587 = vld [vmem:[%s424 + $0x1cc] sm:$0xf]
        %v588 = vld [vmem:[%s424 + $0x1d0] sm:$0xf]
        %v589 = vld [vmem:[%s424 + $0x1d4] sm:$0xf]
        %v590 = vld [vmem:[%s424 + $0x1d8] sm:$0xf]
        %v591 = vld [vmem:[%s424 + $0x1dc] sm:$0xf]
        %v592 = vld [vmem:[%s424 + $0x1e0] sm:$0xf]
        %v593 = vld [vmem:[%s424 + $0x1e4] sm:$0xf]
        %v594 = vld [vmem:[%s424 + $0x1e8] sm:$0xf]
        %v595 = vld [vmem:[%s424 + $0x1ec] sm:$0xf]
        %v596 = vld [vmem:[%s424 + $0x1f0] sm:$0xf]
        %v597 = vld [vmem:[%s424 + $0x1f4] sm:$0xf]
        %v598 = vld [vmem:[%s424 + $0x1f8] sm:$0xf]
        %v599 = vld [vmem:[%s424 + $0x1fc] sm:$0xf]
        %v600 = vld [vmem:[%s424 + $0x200] sm:$0xf]
        %v601 = vld [vmem:[%s424 + $0x204] sm:$0xf]
        %v602 = vld [vmem:[%s424 + $0x208] sm:$0xf]
        %v603 = vld [vmem:[%s424 + $0x20c] sm:$0xf]
        %v604 = vld [vmem:[%s424 + $0x210] sm:$0xf]
        %v605 = vld [vmem:[%s424 + $0x214] sm:$0xf]
        %v606 = vld [vmem:[%s424 + $0x218] sm:$0xf]
        %v607 = vld [vmem:[%s424 + $0x21c] sm:$0xf]
        %v608 = vld [vmem:[%s424 + $0x220] sm:$0xf]
        %v609 = vld [vmem:[%s424 + $0x224] sm:$0xf]
        %v610 = vld [vmem:[%s424 + $0x228] sm:$0xf]
        %v611 = vld [vmem:[%s424 + $0x22c] sm:$0xf]
        %v612 = vld [vmem:[%s424 + $0x230] sm:$0xf]
        %v613 = vld [vmem:[%s424 + $0x234] sm:$0xf]
        %v614 = vld [vmem:[%s424 + $0x238] sm:$0xf]
        %v615 = vld [vmem:[%s424 + $0x23c] sm:$0xf]
        %v616 = vld [vmem:[%s424 + $0x240] sm:$0xf]
        %v617 = vld [vmem:[%s424 + $0x244] sm:$0xf]
        %v618 = vld [vmem:[%s424 + $0x248] sm:$0xf]
        %v619 = vld [vmem:[%s424 + $0x24c] sm:$0xf]
        %v620 = vld [vmem:[%s424 + $0x250] sm:$0xf]
        %v621 = vld [vmem:[%s424 + $0x254] sm:$0xf]
        %v622 = vld [vmem:[%s424 + $0x258] sm:$0xf]
        %v623 = vld [vmem:[%s424 + $0x25c] sm:$0xf]
        %v624 = vld [vmem:[%s424 + $0x260] sm:$0xf]
        %v625 = vld [vmem:[%s424 + $0x264] sm:$0xf]
        %v626 = vld [vmem:[%s424 + $0x268] sm:$0xf]
        %v627 = vld [vmem:[%s424 + $0x26c] sm:$0xf]
        %v628 = vld [vmem:[%s424 + $0x270] sm:$0xf]
        %v629 = vld [vmem:[%s424 + $0x274] sm:$0xf]
        %v630 = vld [vmem:[%s424 + $0x278] sm:$0xf]
        %v631 = vld [vmem:[%s424 + $0x27c] sm:$0xf]
        %v632 = vld [vmem:[%s424 + $0x280] sm:$0xf]
        %v633 = vld [vmem:[%s424 + $0x284] sm:$0xf]
        %v634 = vld [vmem:[%s424 + $0x288] sm:$0xf]
        %v635 = vld [vmem:[%s424 + $0x28c] sm:$0xf]
        %v636 = vld [vmem:[%s424 + $0x290] sm:$0xf]
        %v637 = vld [vmem:[%s424 + $0x294] sm:$0xf]
        %v638 = vld [vmem:[%s424 + $0x298] sm:$0xf]
        %v639 = vld [vmem:[%s424 + $0x29c] sm:$0xf]
        %v640 = vld [vmem:[%s424 + $0x2a0] sm:$0xf]
        %v641 = vld [vmem:[%s424 + $0x2a4] sm:$0xf]
        %v642 = vld [vmem:[%s424 + $0x2a8] sm:$0xf]
        %v643 = vld [vmem:[%s424 + $0x2ac] sm:$0xf]
        %v644 = vld [vmem:[%s424 + $0x2b0] sm:$0xf]
        %v645 = vld [vmem:[%s424 + $0x2b4] sm:$0xf]
        %v646 = vld [vmem:[%s424 + $0x2b8] sm:$0xf]
        %v647 = vld [vmem:[%s424 + $0x2bc] sm:$0xf]
        %v648 = vld [vmem:[%s424 + $0x2c0] sm:$0xf]
        %v649 = vld [vmem:[%s424 + $0x2c4] sm:$0xf]
        %v650 = vld [vmem:[%s424 + $0x2c8] sm:$0xf]
        %v651 = vld [vmem:[%s424 + $0x2cc] sm:$0xf]
        %v652 = vld [vmem:[%s424 + $0x2d0] sm:$0xf]
        %v653 = vld [vmem:[%s424 + $0x2d4] sm:$0xf]
        %v654 = vld [vmem:[%s424 + $0x2d8] sm:$0xf]
        %v655 = vld [vmem:[%s424 + $0x2dc] sm:$0xf]
        %v656 = vld [vmem:[%s424 + $0x2e0] sm:$0xf]
        %v657 = vld [vmem:[%s424 + $0x2e4] sm:$0xf]
        %v658 = vld [vmem:[%s424 + $0x2e8] sm:$0xf]
        %v659 = vld [vmem:[%s424 + $0x2ec] sm:$0xf]
        %v660 = vld [vmem:[%s424 + $0x2f0] sm:$0xf]
        %v661 = vld [vmem:[%s424 + $0x2f4] sm:$0xf]
        %v662 = vld [vmem:[%s424 + $0x2f8] sm:$0xf]
        %v663 = vld [vmem:[%s424 + $0x2fc] sm:$0xf]
        %v680 = vunpack.c.l.b16 %v472
        %v681 = vunpack.c.l.b16 %v473
        %v682 = vunpack.c.l.b16 %v474
        %v683 = vunpack.c.l.b16 %v475
        %v684 = vunpack.c.l.b16 %v476
        %v685 = vunpack.c.l.b16 %v477
        %v686 = vunpack.c.l.b16 %v478
        %v687 = vunpack.c.l.b16 %v479
        %v688 = vunpack.c.l.b16 %v480
        %v689 = vunpack.c.l.b16 %v481
        %v690 = vunpack.c.l.b16 %v482
        %v691 = vunpack.c.l.b16 %v483
        %v692 = vunpack.c.l.b16 %v484
        %v693 = vunpack.c.l.b16 %v485
        %v694 = vunpack.c.l.b16 %v486
        %v695 = vunpack.c.l.b16 %v487
        %v696 = vpack.c.b16 %v681, %v680
        %v697 = vpack.c.b16 %v683, %v682
        %v698 = vpack.c.b16 %v685, %v684
        %v699 = vpack.c.b16 %v687, %v686
        %v700 = vpack.c.b16 %v689, %v688
        %v701 = vpack.c.b16 %v691, %v690
        %v702 = vpack.c.b16 %v693, %v692
        %v703 = vpack.c.b16 %v695, %v694
        %712 = vmatprep.subr.bf16.mxu0 0
        %713 = vmatpush1.bf16.msra.mxu0 %v696
        %714 = vmatprep.subr.bf16.mxu0 0
        %715 = vmatpush1.bf16.msra.mxu0 %v697
        %716 = vmatprep.subr.bf16.mxu0 0
        %717 = vmatpush1.bf16.msra.mxu0 %v698
        %718 = vmatprep.subr.bf16.mxu0 0
        %719 = vmatpush1.bf16.msra.mxu0 %v699
        %720 = vmatprep.subr.bf16.mxu0 0
        %721 = vmatpush1.bf16.msra.mxu0 %v700
        %722 = vmatprep.subr.bf16.mxu0 0
        %723 = vmatpush1.bf16.msra.mxu0 %v701
        %724 = vmatprep.subr.bf16.mxu0 0
        %725 = vmatpush1.bf16.msra.mxu0 %v702
        %726 = vmatprep.subr.bf16.mxu0 0
        %727 = vmatpush1.bf16.msra.mxu0 %v703
        %728 = vmatprep.subr.bf16.mxu0 0
        %729 = vmatpush1.bf16.msra.mxu0 0
        %730 = vmatprep.subr.bf16.mxu0 0
        %731 = vmatpush1.bf16.msra.mxu0 0
        %732 = vmatprep.subr.bf16.mxu0 0
        %733 = vmatpush1.bf16.msra.mxu0 0
        %734 = vmatprep.subr.bf16.mxu0 0
        %735 = vmatpush1.bf16.msra.mxu0 0
        %736 = vmatprep.subr.bf16.mxu0 0
        %737 = vmatpush1.bf16.msra.mxu0 0
        %738 = vmatprep.subr.bf16.mxu0 0
        %739 = vmatpush1.bf16.msra.mxu0 0
        %740 = vmatprep.subr.bf16.mxu0 0
        %741 = vmatpush1.bf16.msra.mxu0 0
        %742 = vmatprep.subr.bf16.mxu0 0
        %743 = vmatpush1.bf16.msra.mxu0 0
        %744 = vmatprep.mubr.bf16.mxu0 0
        %745 = vmatmul.mubr.bf16.gmra.mrb[0].mxu0 %v471
        %v746 = vpop.f32.mrb[0].mxu0
        %v747 = vadd.f32 0.0, %v746
        %v748 = vpop.f32.mrb[0].mxu0
        %v749 = vpop.f32.mrb[0].mxu0
        %v750 = vpop.f32.mrb[0].mxu0
        %751 = vdwg.mxu0
        %v768 = vunpack.c.l.b16 %v488
        %v769 = vunpack.c.l.b16 %v489
        %v770 = vunpack.c.l.b16 %v490
        %v771 = vunpack.c.l.b16 %v491
        %v772 = vunpack.c.l.b16 %v492
        %v773 = vunpack.c.l.b16 %v493
        %v774 = vunpack.c.l.b16 %v494
        %v775 = vunpack.c.l.b16 %v495
        %v776 = vunpack.c.l.b16 %v496
        %v777 = vunpack.c.l.b16 %v497
        %v778 = vunpack.c.l.b16 %v498
        %v779 = vunpack.c.l.b16 %v499
        %v780 = vunpack.c.l.b16 %v500
        %v781 = vunpack.c.l.b16 %v501
        %v782 = vunpack.c.l.b16 %v502
        %v783 = vunpack.c.l.b16 %v503
        %v784 = vpack.c.b16 %v769, %v768
        %v785 = vpack.c.b16 %v771, %v770
        %v786 = vpack.c.b16 %v773, %v772
        %v787 = vpack.c.b16 %v775, %v774
        %v788 = vpack.c.b16 %v777, %v776
        %v789 = vpack.c.b16 %v779, %v778
        %v790 = vpack.c.b16 %v781, %v780
        %v791 = vpack.c.b16 %v783, %v782
        %800 = vmatprep.subr.bf16.mxu0 0
        %801 = vmatpush1.bf16.msra.mxu0 %v784
        %802 = vmatprep.subr.bf16.mxu0 0
        %803 = vmatpush1.bf16.msra.mxu0 %v785
        %804 = vmatprep.subr.bf16.mxu0 0
        %805 = vmatpush1.bf16.msra.mxu0 %v786
        %806 = vmatprep.subr.bf16.mxu0 0
        %807 = vmatpush1.bf16.msra.mxu0 %v787
        %808 = vmatprep.subr.bf16.mxu0 0
        %809 = vmatpush1.bf16.msra.mxu0 %v788
        %810 = vmatprep.subr.bf16.mxu0 0
        %811 = vmatpush1.bf16.msra.mxu0 %v789
        %812 = vmatprep.subr.bf16.mxu0 0
        %813 = vmatpush1.bf16.msra.mxu0 %v790
        %814 = vmatprep.subr.bf16.mxu0 0
        %815 = vmatpush1.bf16.msra.mxu0 %v791
        %816 = vmatprep.subr.bf16.mxu0 0
        %817 = vmatpush1.bf16.msra.mxu0 0
        %818 = vmatprep.subr.bf16.mxu0 0
        %819 = vmatpush1.bf16.msra.mxu0 0
        %820 = vmatprep.subr.bf16.mxu0 0
        %821 = vmatpush1.bf16.msra.mxu0 0
        %822 = vmatprep.subr.bf16.mxu0 0
        %823 = vmatpush1.bf16.msra.mxu0 0
        %824 = vmatprep.subr.bf16.mxu0 0
        %825 = vmatpush1.bf16.msra.mxu0 0
        %826 = vmatprep.subr.bf16.mxu0 0
        %827 = vmatpush1.bf16.msra.mxu0 0
        %828 = vmatprep.subr.bf16.mxu0 0
        %829 = vmatpush1.bf16.msra.mxu0 0
        %830 = vmatprep.subr.bf16.mxu0 0
        %831 = vmatpush1.bf16.msra.mxu0 0
        %832 = vmatprep.mubr.bf16.mxu0 0
        %833 = vmatmul.mubr.bf16.gmra.mrb[0].mxu0 %v471
        %v834 = vpop.f32.mrb[0].mxu0
        %v835 = vadd.f32 0.0, %v834
        %v836 = vpop.f32.mrb[0].mxu0
        %v837 = vpop.f32.mrb[0].mxu0
        %v838 = vpop.f32.mrb[0].mxu0
        %839 = vdwg.mxu0
        %v856 = vunpack.c.l.b16 %v504
        %v857 = vunpack.c.l.b16 %v505
        %v858 = vunpack.c.l.b16 %v506
        %v859 = vunpack.c.l.b16 %v507
        %v860 = vunpack.c.l.b16 %v508
        %v861 = vunpack.c.l.b16 %v509
        %v862 = vunpack.c.l.b16 %v510
        %v863 = vunpack.c.l.b16 %v511
        %v864 = vunpack.c.l.b16 %v512
        %v865 = vunpack.c.l.b16 %v513
        %v866 = vunpack.c.l.b16 %v514
        %v867 = vunpack.c.l.b16 %v515
        %v868 = vunpack.c.l.b16 %v516
        %v869 = vunpack.c.l.b16 %v517
        %v870 = vunpack.c.l.b16 %v518
        %v871 = vunpack.c.l.b16 %v519
        %v872 = vpack.c.b16 %v857, %v856
        %v873 = vpack.c.b16 %v859, %v858
        %v874 = vpack.c.b16 %v861, %v860
        %v875 = vpack.c.b16 %v863, %v862
        %v876 = vpack.c.b16 %v865, %v864
        %v877 = vpack.c.b16 %v867, %v866
        %v878 = vpack.c.b16 %v869, %v868
        %v879 = vpack.c.b16 %v871, %v870
        %888 = vmatprep.subr.bf16.mxu0 0
        %889 = vmatpush1.bf16.msra.mxu0 %v872
        %890 = vmatprep.subr.bf16.mxu0 0
        %891 = vmatpush1.bf16.msra.mxu0 %v873
        %892 = vmatprep.subr.bf16.mxu0 0
        %893 = vmatpush1.bf16.msra.mxu0 %v874
        %894 = vmatprep.subr.bf16.mxu0 0
        %895 = vmatpush1.bf16.msra.mxu0 %v875
        %896 = vmatprep.subr.bf16.mxu0 0
        %897 = vmatpush1.bf16.msra.mxu0 %v876
        %898 = vmatprep.subr.bf16.mxu0 0
        %899 = vmatpush1.bf16.msra.mxu0 %v877
        %900 = vmatprep.subr.bf16.mxu0 0
        %901 = vmatpush1.bf16.msra.mxu0 %v878
        %902 = vmatprep.subr.bf16.mxu0 0
        %903 = vmatpush1.bf16.msra.mxu0 %v879
        %904 = vmatprep.subr.bf16.mxu0 0
        %905 = vmatpush1.bf16.msra.mxu0 0
        %906 = vmatprep.subr.bf16.mxu0 0
        %907 = vmatpush1.bf16.msra.mxu0 0
        %908 = vmatprep.subr.bf16.mxu0 0
        %909 = vmatpush1.bf16.msra.mxu0 0
        %910 = vmatprep.subr.bf16.mxu0 0
        %911 = vmatpush1.bf16.msra.mxu0 0
        %912 = vmatprep.subr.bf16.mxu0 0
        %913 = vmatpush1.bf16.msra.mxu0 0
        %914 = vmatprep.subr.bf16.mxu0 0
        %915 = vmatpush1.bf16.msra.mxu0 0
        %916 = vmatprep.subr.bf16.mxu0 0
        %917 = vmatpush1.bf16.msra.mxu0 0
        %918 = vmatprep.subr.bf16.mxu0 0
        %919 = vmatpush1.bf16.msra.mxu0 0
        %920 = vmatprep.mubr.bf16.mxu0 0
        %921 = vmatmul.mubr.bf16.gmra.mrb[0].mxu0 %v471
        %v922 = vpop.f32.mrb[0].mxu0
        %v923 = vadd.f32 0.0, %v922
        %v924 = vpop.f32.mrb[0].mxu0
        %v925 = vpop.f32.mrb[0].mxu0
        %v926 = vpop.f32.mrb[0].mxu0
        %927 = vdwg.mxu0
        %v944 = vunpack.c.l.b16 %v520
        %v945 = vunpack.c.l.b16 %v521
        %v946 = vunpack.c.l.b16 %v522
        %v947 = vunpack.c.l.b16 %v523
        %v948 = vunpack.c.l.b16 %v524
        %v949 = vunpack.c.l.b16 %v525
        %v950 = vunpack.c.l.b16 %v526
        %v951 = vunpack.c.l.b16 %v527
        %v952 = vunpack.c.l.b16 %v528
        %v953 = vunpack.c.l.b16 %v529
        %v954 = vunpack.c.l.b16 %v530
        %v955 = vunpack.c.l.b16 %v531
        %v956 = vunpack.c.l.b16 %v532
        %v957 = vunpack.c.l.b16 %v533
        %v958 = vunpack.c.l.b16 %v534
        %v959 = vunpack.c.l.b16 %v535
        %v960 = vpack.c.b16 %v945, %v944
        %v961 = vpack.c.b16 %v947, %v946
        %v962 = vpack.c.b16 %v949, %v948
        %v963 = vpack.c.b16 %v951, %v950
        %v964 = vpack.c.b16 %v953, %v952
        %v965 = vpack.c.b16 %v955, %v954
        %v966 = vpack.c.b16 %v957, %v956
        %v967 = vpack.c.b16 %v959, %v958
        %976 = vmatprep.subr.bf16.mxu0 0
        %977 = vmatpush1.bf16.msra.mxu0 %v960
        %978 = vmatprep.subr.bf16.mxu0 0
        %979 = vmatpush1.bf16.msra.mxu0 %v961
        %980 = vmatprep.subr.bf16.mxu0 0
        %981 = vmatpush1.bf16.msra.mxu0 %v962
        %982 = vmatprep.subr.bf16.mxu0 0
        %983 = vmatpush1.bf16.msra.mxu0 %v963
        %984 = vmatprep.subr.bf16.mxu0 0
        %985 = vmatpush1.bf16.msra.mxu0 %v964
        %986 = vmatprep.subr.bf16.mxu0 0
        %987 = vmatpush1.bf16.msra.mxu0 %v965
        %988 = vmatprep.subr.bf16.mxu0 0
        %989 = vmatpush1.bf16.msra.mxu0 %v966
        %990 = vmatprep.subr.bf16.mxu0 0
        %991 = vmatpush1.bf16.msra.mxu0 %v967
        %992 = vmatprep.subr.bf16.mxu0 0
        %993 = vmatpush1.bf16.msra.mxu0 0
        %994 = vmatprep.subr.bf16.mxu0 0
        %995 = vmatpush1.bf16.msra.mxu0 0
        %996 = vmatprep.subr.bf16.mxu0 0
        %997 = vmatpush1.bf16.msra.mxu0 0
        %998 = vmatprep.subr.bf16.mxu0 0
        %999 = vmatpush1.bf16.msra.mxu0 0
        %1000 = vmatprep.subr.bf16.mxu0 0
        %1001 = vmatpush1.bf16.msra.mxu0 0
        %1002 = vmatprep.subr.bf16.mxu0 0
        %1003 = vmatpush1.bf16.msra.mxu0 0
        %1004 = vmatprep.subr.bf16.mxu0 0
        %1005 = vmatpush1.bf16.msra.mxu0 0
        %1006 = vmatprep.subr.bf16.mxu0 0
        %1007 = vmatpush1.bf16.msra.mxu0 0
        %1008 = vmatprep.mubr.bf16.mxu0 0
        %1009 = vmatmul.mubr.bf16.gmra.mrb[0].mxu0 %v471
        %v1010 = vpop.f32.mrb[0].mxu0
        %v1011 = vadd.f32 0.0, %v1010
        %v1012 = vpop.f32.mrb[0].mxu0
        %v1013 = vpop.f32.mrb[0].mxu0
        %v1014 = vpop.f32.mrb[0].mxu0
        %1015 = vdwg.mxu0
        %v1032 = vunpack.c.l.b16 %v536
        %v1033 = vunpack.c.l.b16 %v537
        %v1034 = vunpack.c.l.b16 %v538
        %v1035 = vunpack.c.l.b16 %v539
        %v1036 = vunpack.c.l.b16 %v540
        %v1037 = vunpack.c.l.b16 %v541
        %v1038 = vunpack.c.l.b16 %v542
        %v1039 = vunpack.c.l.b16 %v543
        %v1040 = vunpack.c.l.b16 %v544
        %v1041 = vunpack.c.l.b16 %v545
        %v1042 = vunpack.c.l.b16 %v546
        %v1043 = vunpack.c.l.b16 %v547
        %v1044 = vunpack.c.l.b16 %v548
        %v1045 = vunpack.c.l.b16 %v549
        %v1046 = vunpack.c.l.b16 %v550
        %v1047 = vunpack.c.l.b16 %v551
        %v1048 = vpack.c.b16 %v1033, %v1032
        %v1049 = vpack.c.b16 %v1035, %v1034
        %v1050 = vpack.c.b16 %v1037, %v1036
        %v1051 = vpack.c.b16 %v1039, %v1038
        %v1052 = vpack.c.b16 %v1041, %v1040
        %v1053 = vpack.c.b16 %v1043, %v1042
        %v1054 = vpack.c.b16 %v1045, %v1044
        %v1055 = vpack.c.b16 %v1047, %v1046
        %1064 = vmatprep.subr.bf16.mxu0 0
        %1065 = vmatpush1.bf16.msra.mxu0 %v1048
        %1066 = vmatprep.subr.bf16.mxu0 0
        %1067 = vmatpush1.bf16.msra.mxu0 %v1049
        %1068 = vmatprep.subr.bf16.mxu0 0
        %1069 = vmatpush1.bf16.msra.mxu0 %v1050
        %1070 = vmatprep.subr.bf16.mxu0 0
        %1071 = vmatpush1.bf16.msra.mxu0 %v1051
        %1072 = vmatprep.subr.bf16.mxu0 0
        %1073 = vmatpush1.bf16.msra.mxu0 %v1052
        %1074 = vmatprep.subr.bf16.mxu0 0
        %1075 = vmatpush1.bf16.msra.mxu0 %v1053
        %1076 = vmatprep.subr.bf16.mxu0 0
        %1077 = vmatpush1.bf16.msra.mxu0 %v1054
        %1078 = vmatprep.subr.bf16.mxu0 0
        %1079 = vmatpush1.bf16.msra.mxu0 %v1055
        %1080 = vmatprep.subr.bf16.mxu0 0
        %1081 = vmatpush1.bf16.msra.mxu0 0
        %1082 = vmatprep.subr.bf16.mxu0 0
        %1083 = vmatpush1.bf16.msra.mxu0 0
        %1084 = vmatprep.subr.bf16.mxu0 0
        %1085 = vmatpush1.bf16.msra.mxu0 0
        %1086 = vmatprep.subr.bf16.mxu0 0
        %1087 = vmatpush1.bf16.msra.mxu0 0
        %1088 = vmatprep.subr.bf16.mxu0 0
        %1089 = vmatpush1.bf16.msra.mxu0 0
        %1090 = vmatprep.subr.bf16.mxu0 0
        %1091 = vmatpush1.bf16.msra.mxu0 0
        %1092 = vmatprep.subr.bf16.mxu0 0
        %1093 = vmatpush1.bf16.msra.mxu0 0
        %1094 = vmatprep.subr.bf16.mxu0 0
        %1095 = vmatpush1.bf16.msra.mxu0 0
        %1096 = vmatprep.mubr.bf16.mxu0 0
        %1097 = vmatmul.mubr.bf16.gmra.mrb[0].mxu0 %v471
        %v1098 = vpop.f32.mrb[0].mxu0
        %v1099 = vadd.f32 0.0, %v1098
        %v1100 = vpop.f32.mrb[0].mxu0
        %v1101 = vpop.f32.mrb[0].mxu0
        %v1102 = vpop.f32.mrb[0].mxu0
        %1103 = vdwg.mxu0
        %v1120 = vunpack.c.l.b16 %v552
        %v1121 = vunpack.c.l.b16 %v553
        %v1122 = vunpack.c.l.b16 %v554
        %v1123 = vunpack.c.l.b16 %v555
        %v1124 = vunpack.c.l.b16 %v556
        %v1125 = vunpack.c.l.b16 %v557
        %v1126 = vunpack.c.l.b16 %v558
        %v1127 = vunpack.c.l.b16 %v559
        %v1128 = vunpack.c.l.b16 %v560
        %v1129 = vunpack.c.l.b16 %v561
        %v1130 = vunpack.c.l.b16 %v562
        %v1131 = vunpack.c.l.b16 %v563
        %v1132 = vunpack.c.l.b16 %v564
        %v1133 = vunpack.c.l.b16 %v565
        %v1134 = vunpack.c.l.b16 %v566
        %v1135 = vunpack.c.l.b16 %v567
        %v1136 = vpack.c.b16 %v1121, %v1120
        %v1137 = vpack.c.b16 %v1123, %v1122
        %v1138 = vpack.c.b16 %v1125, %v1124
        %v1139 = vpack.c.b16 %v1127, %v1126
        %v1140 = vpack.c.b16 %v1129, %v1128
        %v1141 = vpack.c.b16 %v1131, %v1130
        %v1142 = vpack.c.b16 %v1133, %v1132
        %v1143 = vpack.c.b16 %v1135, %v1134
        %1152 = vmatprep.subr.bf16.mxu0 0
        %1153 = vmatpush1.bf16.msra.mxu0 %v1136
        %1154 = vmatprep.subr.bf16.mxu0 0
        %1155 = vmatpush1.bf16.msra.mxu0 %v1137
        %1156 = vmatprep.subr.bf16.mxu0 0
        %1157 = vmatpush1.bf16.msra.mxu0 %v1138
        %1158 = vmatprep.subr.bf16.mxu0 0
        %1159 = vmatpush1.bf16.msra.mxu0 %v1139
        %1160 = vmatprep.subr.bf16.mxu0 0
        %1161 = vmatpush1.bf16.msra.mxu0 %v1140
        %1162 = vmatprep.subr.bf16.mxu0 0
        %1163 = vmatpush1.bf16.msra.mxu0 %v1141
        %1164 = vmatprep.subr.bf16.mxu0 0
        %1165 = vmatpush1.bf16.msra.mxu0 %v1142
        %1166 = vmatprep.subr.bf16.mxu0 0
        %1167 = vmatpush1.bf16.msra.mxu0 %v1143
        %1168 = vmatprep.subr.bf16.mxu0 0
        %1169 = vmatpush1.bf16.msra.mxu0 0
        %1170 = vmatprep.subr.bf16.mxu0 0
        %1171 = vmatpush1.bf16.msra.mxu0 0
        %1172 = vmatprep.subr.bf16.mxu0 0
        %1173 = vmatpush1.bf16.msra.mxu0 0
        %1174 = vmatprep.subr.bf16.mxu0 0
        %1175 = vmatpush1.bf16.msra.mxu0 0
        %1176 = vmatprep.subr.bf16.mxu0 0
        %1177 = vmatpush1.bf16.msra.mxu0 0
        %1178 = vmatprep.subr.bf16.mxu0 0
        %1179 = vmatpush1.bf16.msra.mxu0 0
        %1180 = vmatprep.subr.bf16.mxu0 0
        %1181 = vmatpush1.bf16.msra.mxu0 0
        %1182 = vmatprep.subr.bf16.mxu0 0
        %1183 = vmatpush1.bf16.msra.mxu0 0
        %1184 = vmatprep.mubr.bf16.mxu0 0
        %1185 = vmatmul.mubr.bf16.gmra.mrb[0].mxu0 %v471
        %v1186 = vpop.f32.mrb[0].mxu0
        %v1187 = vadd.f32 0.0, %v1186
        %v1188 = vpop.f32.mrb[0].mxu0
        %v1189 = vpop.f32.mrb[0].mxu0
        %v1190 = vpop.f32.mrb[0].mxu0
        %1191 = vdwg.mxu0
        %v1208 = vunpack.c.l.b16 %v568
        %v1209 = vunpack.c.l.b16 %v569
        %v1210 = vunpack.c.l.b16 %v570
        %v1211 = vunpack.c.l.b16 %v571
        %v1212 = vunpack.c.l.b16 %v572
        %v1213 = vunpack.c.l.b16 %v573
        %v1214 = vunpack.c.l.b16 %v574
        %v1215 = vunpack.c.l.b16 %v575
        %v1216 = vunpack.c.l.b16 %v576
        %v1217 = vunpack.c.l.b16 %v577
        %v1218 = vunpack.c.l.b16 %v578
        %v1219 = vunpack.c.l.b16 %v579
        %v1220 = vunpack.c.l.b16 %v580
        %v1221 = vunpack.c.l.b16 %v581
        %v1222 = vunpack.c.l.b16 %v582
        %v1223 = vunpack.c.l.b16 %v583
        %v1224 = vpack.c.b16 %v1209, %v1208
        %v1225 = vpack.c.b16 %v1211, %v1210
        %v1226 = vpack.c.b16 %v1213, %v1212
        %v1227 = vpack.c.b16 %v1215, %v1214
        %v1228 = vpack.c.b16 %v1217, %v1216
        %v1229 = vpack.c.b16 %v1219, %v1218
        %v1230 = vpack.c.b16 %v1221, %v1220
        %v1231 = vpack.c.b16 %v1223, %v1222
        %1240 = vmatprep.subr.bf16.mxu0 0
        %1241 = vmatpush1.bf16.msra.mxu0 %v1224
        %1242 = vmatprep.subr.bf16.mxu0 0
        %1243 = vmatpush1.bf16.msra.mxu0 %v1225
        %1244 = vmatprep.subr.bf16.mxu0 0
        %1245 = vmatpush1.bf16.msra.mxu0 %v1226
        %1246 = vmatprep.subr.bf16.mxu0 0
        %1247 = vmatpush1.bf16.msra.mxu0 %v1227
        %1248 = vmatprep.subr.bf16.mxu0 0
        %1249 = vmatpush1.bf16.msra.mxu0 %v1228
        %1250 = vmatprep.subr.bf16.mxu0 0
        %1251 = vmatpush1.bf16.msra.mxu0 %v1229
        %1252 = vmatprep.subr.bf16.mxu0 0
        %1253 = vmatpush1.bf16.msra.mxu0 %v1230
        %1254 = vmatprep.subr.bf16.mxu0 0
        %1255 = vmatpush1.bf16.msra.mxu0 %v1231
        %1256 = vmatprep.subr.bf16.mxu0 0
        %1257 = vmatpush1.bf16.msra.mxu0 0
        %1258 = vmatprep.subr.bf16.mxu0 0
        %1259 = vmatpush1.bf16.msra.mxu0 0
        %1260 = vmatprep.subr.bf16.mxu0 0
        %1261 = vmatpush1.bf16.msra.mxu0 0
        %1262 = vmatprep.subr.bf16.mxu0 0
        %1263 = vmatpush1.bf16.msra.mxu0 0
        %1264 = vmatprep.subr.bf16.mxu0 0
        %1265 = vmatpush1.bf16.msra.mxu0 0
        %1266 = vmatprep.subr.bf16.mxu0 0
        %1267 = vmatpush1.bf16.msra.mxu0 0
        %1268 = vmatprep.subr.bf16.mxu0 0
        %1269 = vmatpush1.bf16.msra.mxu0 0
        %1270 = vmatprep.subr.bf16.mxu0 0
        %1271 = vmatpush1.bf16.msra.mxu0 0
        %1272 = vmatprep.mubr.bf16.mxu0 0
        %1273 = vmatmul.mubr.bf16.gmra.mrb[0].mxu0 %v471
        %v1274 = vpop.f32.mrb[0].mxu0
        %v1275 = vadd.f32 0.0, %v1274
        %v1276 = vpop.f32.mrb[0].mxu0
        %v1277 = vpop.f32.mrb[0].mxu0
        %v1278 = vpop.f32.mrb[0].mxu0
        %1279 = vdwg.mxu0
        %v1296 = vunpack.c.l.b16 %v584
        %v1297 = vunpack.c.l.b16 %v585
        %v1298 = vunpack.c.l.b16 %v586
        %v1299 = vunpack.c.l.b16 %v587
        %v1300 = vunpack.c.l.b16 %v588
        %v1301 = vunpack.c.l.b16 %v589
        %v1302 = vunpack.c.l.b16 %v590
        %v1303 = vunpack.c.l.b16 %v591
        %v1304 = vunpack.c.l.b16 %v592
        %v1305 = vunpack.c.l.b16 %v593
        %v1306 = vunpack.c.l.b16 %v594
        %v1307 = vunpack.c.l.b16 %v595
        %v1308 = vunpack.c.l.b16 %v596
        %v1309 = vunpack.c.l.b16 %v597
        %v1310 = vunpack.c.l.b16 %v598
        %v1311 = vunpack.c.l.b16 %v599
        %v1312 = vpack.c.b16 %v1297, %v1296
        %v1313 = vpack.c.b16 %v1299, %v1298
        %v1314 = vpack.c.b16 %v1301, %v1300
        %v1315 = vpack.c.b16 %v1303, %v1302
        %v1316 = vpack.c.b16 %v1305, %v1304
        %v1317 = vpack.c.b16 %v1307, %v1306
        %v1318 = vpack.c.b16 %v1309, %v1308
        %v1319 = vpack.c.b16 %v1311, %v1310
        %1328 = vmatprep.subr.bf16.mxu0 0
        %1329 = vmatpush1.bf16.msra.mxu0 %v1312
        %1330 = vmatprep.subr.bf16.mxu0 0
        %1331 = vmatpush1.bf16.msra.mxu0 %v1313
        %1332 = vmatprep.subr.bf16.mxu0 0
        %1333 = vmatpush1.bf16.msra.mxu0 %v1314
        %1334 = vmatprep.subr.bf16.mxu0 0
        %1335 = vmatpush1.bf16.msra.mxu0 %v1315
        %1336 = vmatprep.subr.bf16.mxu0 0
        %1337 = vmatpush1.bf16.msra.mxu0 %v1316
        %1338 = vmatprep.subr.bf16.mxu0 0
        %1339 = vmatpush1.bf16.msra.mxu0 %v1317
        %1340 = vmatprep.subr.bf16.mxu0 0
        %1341 = vmatpush1.bf16.msra.mxu0 %v1318
        %1342 = vmatprep.subr.bf16.mxu0 0
        %1343 = vmatpush1.bf16.msra.mxu0 %v1319
        %1344 = vmatprep.subr.bf16.mxu0 0
        %1345 = vmatpush1.bf16.msra.mxu0 0
        %1346 = vmatprep.subr.bf16.mxu0 0
        %1347 = vmatpush1.bf16.msra.mxu0 0
        %1348 = vmatprep.subr.bf16.mxu0 0
        %1349 = vmatpush1.bf16.msra.mxu0 0
        %1350 = vmatprep.subr.bf16.mxu0 0
        %1351 = vmatpush1.bf16.msra.mxu0 0
        %1352 = vmatprep.subr.bf16.mxu0 0
        %1353 = vmatpush1.bf16.msra.mxu0 0
        %1354 = vmatprep.subr.bf16.mxu0 0
        %1355 = vmatpush1.bf16.msra.mxu0 0
        %1356 = vmatprep.subr.bf16.mxu0 0
        %1357 = vmatpush1.bf16.msra.mxu0 0
        %1358 = vmatprep.subr.bf16.mxu0 0
        %1359 = vmatpush1.bf16.msra.mxu0 0
        %1360 = vmatprep.mubr.bf16.mxu0 0
        %1361 = vmatmul.mubr.bf16.gmra.mrb[0].mxu0 %v471
        %v1362 = vpop.f32.mrb[0].mxu0
        %v1363 = vadd.f32 0.0, %v1362
        %v1364 = vpop.f32.mrb[0].mxu0
        %v1365 = vpop.f32.mrb[0].mxu0
        %v1366 = vpop.f32.mrb[0].mxu0
        %1367 = vdwg.mxu0
        %v1384 = vunpack.c.l.b16 %v600
        %v1385 = vunpack.c.l.b16 %v601
        %v1386 = vunpack.c.l.b16 %v602
        %v1387 = vunpack.c.l.b16 %v603
        %v1388 = vunpack.c.l.b16 %v604
        %v1389 = vunpack.c.l.b16 %v605
        %v1390 = vunpack.c.l.b16 %v606
        %v1391 = vunpack.c.l.b16 %v607
        %v1392 = vunpack.c.l.b16 %v608
        %v1393 = vunpack.c.l.b16 %v609
        %v1394 = vunpack.c.l.b16 %v610
        %v1395 = vunpack.c.l.b16 %v611
        %v1396 = vunpack.c.l.b16 %v612
        %v1397 = vunpack.c.l.b16 %v613
        %v1398 = vunpack.c.l.b16 %v614
        %v1399 = vunpack.c.l.b16 %v615
        %v1400 = vpack.c.b16 %v1385, %v1384
        %v1401 = vpack.c.b16 %v1387, %v1386
        %v1402 = vpack.c.b16 %v1389, %v1388
        %v1403 = vpack.c.b16 %v1391, %v1390
        %v1404 = vpack.c.b16 %v1393, %v1392
        %v1405 = vpack.c.b16 %v1395, %v1394
        %v1406 = vpack.c.b16 %v1397, %v1396
        %v1407 = vpack.c.b16 %v1399, %v1398
        %1416 = vmatprep.subr.bf16.mxu0 0
        %1417 = vmatpush1.bf16.msra.mxu0 %v1400
        %1418 = vmatprep.subr.bf16.mxu0 0
        %1419 = vmatpush1.bf16.msra.mxu0 %v1401
        %1420 = vmatprep.subr.bf16.mxu0 0
        %1421 = vmatpush1.bf16.msra.mxu0 %v1402
        %1422 = vmatprep.subr.bf16.mxu0 0
        %1423 = vmatpush1.bf16.msra.mxu0 %v1403
        %1424 = vmatprep.subr.bf16.mxu0 0
        %1425 = vmatpush1.bf16.msra.mxu0 %v1404
        %1426 = vmatprep.subr.bf16.mxu0 0
        %1427 = vmatpush1.bf16.msra.mxu0 %v1405
        %1428 = vmatprep.subr.bf16.mxu0 0
        %1429 = vmatpush1.bf16.msra.mxu0 %v1406
        %1430 = vmatprep.subr.bf16.mxu0 0
        %1431 = vmatpush1.bf16.msra.mxu0 %v1407
        %1432 = vmatprep.subr.bf16.mxu0 0
        %1433 = vmatpush1.bf16.msra.mxu0 0
        %1434 = vmatprep.subr.bf16.mxu0 0
        %1435 = vmatpush1.bf16.msra.mxu0 0
        %1436 = vmatprep.subr.bf16.mxu0 0
        %1437 = vmatpush1.bf16.msra.mxu0 0
        %1438 = vmatprep.subr.bf16.mxu0 0
        %1439 = vmatpush1.bf16.msra.mxu0 0
        %1440 = vmatprep.subr.bf16.mxu0 0
        %1441 = vmatpush1.bf16.msra.mxu0 0
        %1442 = vmatprep.subr.bf16.mxu0 0
        %1443 = vmatpush1.bf16.msra.mxu0 0
        %1444 = vmatprep.subr.bf16.mxu0 0
        %1445 = vmatpush1.bf16.msra.mxu0 0
        %1446 = vmatprep.subr.bf16.mxu0 0
        %1447 = vmatpush1.bf16.msra.mxu0 0
        %1448 = vmatprep.mubr.bf16.mxu0 0
        %1449 = vmatmul.mubr.bf16.gmra.mrb[0].mxu0 %v471
        %v1450 = vpop.f32.mrb[0].mxu0
        %v1451 = vadd.f32 0.0, %v1450
        %v1452 = vpop.f32.mrb[0].mxu0
        %v1453 = vpop.f32.mrb[0].mxu0
        %v1454 = vpop.f32.mrb[0].mxu0
        %1455 = vdwg.mxu0
        %v1472 = vunpack.c.l.b16 %v616
        %v1473 = vunpack.c.l.b16 %v617
        %v1474 = vunpack.c.l.b16 %v618
        %v1475 = vunpack.c.l.b16 %v619
        %v1476 = vunpack.c.l.b16 %v620
        %v1477 = vunpack.c.l.b16 %v621
        %v1478 = vunpack.c.l.b16 %v622
        %v1479 = vunpack.c.l.b16 %v623
        %v1480 = vunpack.c.l.b16 %v624
        %v1481 = vunpack.c.l.b16 %v625
        %v1482 = vunpack.c.l.b16 %v626
        %v1483 = vunpack.c.l.b16 %v627
        %v1484 = vunpack.c.l.b16 %v628
        %v1485 = vunpack.c.l.b16 %v629
        %v1486 = vunpack.c.l.b16 %v630
        %v1487 = vunpack.c.l.b16 %v631
        %v1488 = vpack.c.b16 %v1473, %v1472
        %v1489 = vpack.c.b16 %v1475, %v1474
        %v1490 = vpack.c.b16 %v1477, %v1476
        %v1491 = vpack.c.b16 %v1479, %v1478
        %v1492 = vpack.c.b16 %v1481, %v1480
        %v1493 = vpack.c.b16 %v1483, %v1482
        %v1494 = vpack.c.b16 %v1485, %v1484
        %v1495 = vpack.c.b16 %v1487, %v1486
        %1504 = vmatprep.subr.bf16.mxu0 0
        %1505 = vmatpush1.bf16.msra.mxu0 %v1488
        %1506 = vmatprep.subr.bf16.mxu0 0
        %1507 = vmatpush1.bf16.msra.mxu0 %v1489
        %1508 = vmatprep.subr.bf16.mxu0 0
        %1509 = vmatpush1.bf16.msra.mxu0 %v1490
        %1510 = vmatprep.subr.bf16.mxu0 0
        %1511 = vmatpush1.bf16.msra.mxu0 %v1491
        %1512 = vmatprep.subr.bf16.mxu0 0
        %1513 = vmatpush1.bf16.msra.mxu0 %v1492
        %1514 = vmatprep.subr.bf16.mxu0 0
        %1515 = vmatpush1.bf16.msra.mxu0 %v1493
        %1516 = vmatprep.subr.bf16.mxu0 0
        %1517 = vmatpush1.bf16.msra.mxu0 %v1494
        %1518 = vmatprep.subr.bf16.mxu0 0
        %1519 = vmatpush1.bf16.msra.mxu0 %v1495
        %1520 = vmatprep.subr.bf16.mxu0 0
        %1521 = vmatpush1.bf16.msra.mxu0 0
        %1522 = vmatprep.subr.bf16.mxu0 0
        %1523 = vmatpush1.bf16.msra.mxu0 0
        %1524 = vmatprep.subr.bf16.mxu0 0
        %1525 = vmatpush1.bf16.msra.mxu0 0
        %1526 = vmatprep.subr.bf16.mxu0 0
        %1527 = vmatpush1.bf16.msra.mxu0 0
        %1528 = vmatprep.subr.bf16.mxu0 0
        %1529 = vmatpush1.bf16.msra.mxu0 0
        %1530 = vmatprep.subr.bf16.mxu0 0
        %1531 = vmatpush1.bf16.msra.mxu0 0
        %1532 = vmatprep.subr.bf16.mxu0 0
        %1533 = vmatpush1.bf16.msra.mxu0 0
        %1534 = vmatprep.subr.bf16.mxu0 0
        %1535 = vmatpush1.bf16.msra.mxu0 0
        %1536 = vmatprep.mubr.bf16.mxu0 0
        %1537 = vmatmul.mubr.bf16.gmra.mrb[0].mxu0 %v471
        %v1538 = vpop.f32.mrb[0].mxu0
        %v1539 = vadd.f32 0.0, %v1538
        %v1540 = vpop.f32.mrb[0].mxu0
        %v1541 = vpop.f32.mrb[0].mxu0
        %v1542 = vpop.f32.mrb[0].mxu0
        %1543 = vdwg.mxu0
        %v1560 = vunpack.c.l.b16 %v632
        %v1561 = vunpack.c.l.b16 %v633
        %v1562 = vunpack.c.l.b16 %v634
        %v1563 = vunpack.c.l.b16 %v635
        %v1564 = vunpack.c.l.b16 %v636
        %v1565 = vunpack.c.l.b16 %v637
        %v1566 = vunpack.c.l.b16 %v638
        %v1567 = vunpack.c.l.b16 %v639
        %v1568 = vunpack.c.l.b16 %v640
        %v1569 = vunpack.c.l.b16 %v641
        %v1570 = vunpack.c.l.b16 %v642
        %v1571 = vunpack.c.l.b16 %v643
        %v1572 = vunpack.c.l.b16 %v644
        %v1573 = vunpack.c.l.b16 %v645
        %v1574 = vunpack.c.l.b16 %v646
        %v1575 = vunpack.c.l.b16 %v647
        %v1576 = vpack.c.b16 %v1561, %v1560
        %v1577 = vpack.c.b16 %v1563, %v1562
        %v1578 = vpack.c.b16 %v1565, %v1564
        %v1579 = vpack.c.b16 %v1567, %v1566
        %v1580 = vpack.c.b16 %v1569, %v1568
        %v1581 = vpack.c.b16 %v1571, %v1570
        %v1582 = vpack.c.b16 %v1573, %v1572
        %v1583 = vpack.c.b16 %v1575, %v1574
        %1592 = vmatprep.subr.bf16.mxu0 0
        %1593 = vmatpush1.bf16.msra.mxu0 %v1576
        %1594 = vmatprep.subr.bf16.mxu0 0
        %1595 = vmatpush1.bf16.msra.mxu0 %v1577
        %1596 = vmatprep.subr.bf16.mxu0 0
        %1597 = vmatpush1.bf16.msra.mxu0 %v1578
        %1598 = vmatprep.subr.bf16.mxu0 0
        %1599 = vmatpush1.bf16.msra.mxu0 %v1579
        %1600 = vmatprep.subr.bf16.mxu0 0
        %1601 = vmatpush1.bf16.msra.mxu0 %v1580
        %1602 = vmatprep.subr.bf16.mxu0 0
        %1603 = vmatpush1.bf16.msra.mxu0 %v1581
        %1604 = vmatprep.subr.bf16.mxu0 0
        %1605 = vmatpush1.bf16.msra.mxu0 %v1582
        %1606 = vmatprep.subr.bf16.mxu0 0
        %1607 = vmatpush1.bf16.msra.mxu0 %v1583
        %1608 = vmatprep.subr.bf16.mxu0 0
        %1609 = vmatpush1.bf16.msra.mxu0 0
        %1610 = vmatprep.subr.bf16.mxu0 0
        %1611 = vmatpush1.bf16.msra.mxu0 0
        %1612 = vmatprep.subr.bf16.mxu0 0
        %1613 = vmatpush1.bf16.msra.mxu0 0
        %1614 = vmatprep.subr.bf16.mxu0 0
        %1615 = vmatpush1.bf16.msra.mxu0 0
        %1616 = vmatprep.subr.bf16.mxu0 0
        %1617 = vmatpush1.bf16.msra.mxu0 0
        %1618 = vmatprep.subr.bf16.mxu0 0
        %1619 = vmatpush1.bf16.msra.mxu0 0
        %1620 = vmatprep.subr.bf16.mxu0 0
        %1621 = vmatpush1.bf16.msra.mxu0 0
        %1622 = vmatprep.subr.bf16.mxu0 0
        %1623 = vmatpush1.bf16.msra.mxu0 0
        %1624 = vmatprep.mubr.bf16.mxu0 0
        %1625 = vmatmul.mubr.bf16.gmra.mrb[0].mxu0 %v471
        %v1626 = vpop.f32.mrb[0].mxu0
        %v1627 = vadd.f32 0.0, %v1626
        %v1628 = vpop.f32.mrb[0].mxu0
        %v1629 = vpop.f32.mrb[0].mxu0
        %v1630 = vpop.f32.mrb[0].mxu0
        %1631 = vdwg.mxu0
        %v1648 = vunpack.c.l.b16 %v648
        %v1649 = vunpack.c.l.b16 %v649
        %v1650 = vunpack.c.l.b16 %v650
        %v1651 = vunpack.c.l.b16 %v651
        %v1652 = vunpack.c.l.b16 %v652
        %v1653 = vunpack.c.l.b16 %v653
        %v1654 = vunpack.c.l.b16 %v654
        %v1655 = vunpack.c.l.b16 %v655
        %v1656 = vunpack.c.l.b16 %v656
        %v1657 = vunpack.c.l.b16 %v657
        %v1658 = vunpack.c.l.b16 %v658
        %v1659 = vunpack.c.l.b16 %v659
        %v1660 = vunpack.c.l.b16 %v660
        %v1661 = vunpack.c.l.b16 %v661
        %v1662 = vunpack.c.l.b16 %v662
        %v1663 = vunpack.c.l.b16 %v663
        %v1664 = vpack.c.b16 %v1649, %v1648
        %v1665 = vpack.c.b16 %v1651, %v1650
        %v1666 = vpack.c.b16 %v1653, %v1652
        %v1667 = vpack.c.b16 %v1655, %v1654
        %v1668 = vpack.c.b16 %v1657, %v1656
        %v1669 = vpack.c.b16 %v1659, %v1658
        %v1670 = vpack.c.b16 %v1661, %v1660
        %v1671 = vpack.c.b16 %v1663, %v1662
        %1680 = vmatprep.subr.bf16.mxu0 0
        %1681 = vmatpush1.bf16.msra.mxu0 %v1664
        %1682 = vmatprep.subr.bf16.mxu0 0
        %1683 = vmatpush1.bf16.msra.mxu0 %v1665
        %1684 = vmatprep.subr.bf16.mxu0 0
        %1685 = vmatpush1.bf16.msra.mxu0 %v1666
        %1686 = vmatprep.subr.bf16.mxu0 0
        %1687 = vmatpush1.bf16.msra.mxu0 %v1667
        %1688 = vmatprep.subr.bf16.mxu0 0
        %1689 = vmatpush1.bf16.msra.mxu0 %v1668
        %1690 = vmatprep.subr.bf16.mxu0 0
        %1691 = vmatpush1.bf16.msra.mxu0 %v1669
        %1692 = vmatprep.subr.bf16.mxu0 0
        %1693 = vmatpush1.bf16.msra.mxu0 %v1670
        %1694 = vmatprep.subr.bf16.mxu0 0
        %1695 = vmatpush1.bf16.msra.mxu0 %v1671
        %1696 = vmatprep.subr.bf16.mxu0 0
        %1697 = vmatpush1.bf16.msra.mxu0 0
        %1698 = vmatprep.subr.bf16.mxu0 0
        %1699 = vmatpush1.bf16.msra.mxu0 0
        %1700 = vmatprep.subr.bf16.mxu0 0
        %1701 = vmatpush1.bf16.msra.mxu0 0
        %1702 = vmatprep.subr.bf16.mxu0 0
        %1703 = vmatpush1.bf16.msra.mxu0 0
        %1704 = vmatprep.subr.bf16.mxu0 0
        %1705 = vmatpush1.bf16.msra.mxu0 0
        %1706 = vmatprep.subr.bf16.mxu0 0
        %1707 = vmatpush1.bf16.msra.mxu0 0
        %1708 = vmatprep.subr.bf16.mxu0 0
        %1709 = vmatpush1.bf16.msra.mxu0 0
        %1710 = vmatprep.subr.bf16.mxu0 0
        %1711 = vmatpush1.bf16.msra.mxu0 0
        %1712 = vmatprep.mubr.bf16.mxu0 0
        %1713 = vmatmul.mubr.bf16.gmra.mrb[0].mxu0 %v471
        %v1714 = vpop.f32.mrb[0].mxu0
        %v1715 = vadd.f32 0.0, %v1714
        %v1716 = vpop.f32.mrb[0].mxu0
        %v1717 = vpop.f32.mrb[0].mxu0
        %v1718 = vpop.f32.mrb[0].mxu0
        %1719 = vdwg.mxu0
        %v1720 = vpack.c.bf16 %v747, %v747
        %v1721 = vpack.c.bf16 %v835, %v835
        %v1722 = vpack.c.bf16 %v923, %v923
        %v1723 = vpack.c.bf16 %v1011, %v1011
        %v1724 = vpack.c.bf16 %v1099, %v1099
        %v1725 = vpack.c.bf16 %v1187, %v1187
        %v1726 = vpack.c.bf16 %v1275, %v1275
        %v1727 = vpack.c.bf16 %v1363, %v1363
        %v1728 = vpack.c.bf16 %v1451, %v1451
        %v1729 = vpack.c.bf16 %v1539, %v1539
        %v1730 = vpack.c.bf16 %v1627, %v1627
        %v1731 = vpack.c.bf16 %v1715, %v1715
        %v1732 = vld [vmem:[%s0] sm:$0xff]
        %vm1733 = vcmask 261120
        %v1735 = vsel %vm1733, %v1720, 0
        %v1738 = vsel %vm1733, %v1724, 0
        %1740 = vmatprep.subr.bf16.mxu0 0
        %1741 = vmatpush1.bf16.xpose.msra.mxu0 %v1738
        %1742 = vmatprep.subr.bf16.mxu0 0
        %1743 = vmatpush1.bf16.xpose.msra.mxu0 0
        %1744 = vmatprep.subr.bf16.mxu0 0
        %1745 = vmatpush1.bf16.xpose.msra.mxu0 0
        %1746 = vmatprep.subr.bf16.mxu0 0
        %1747 = vmatpush1.bf16.xpose.msra.mxu0 0
        %1748 = vmatprep.subr.bf16.mxu0 0
        %1749 = vmatpush1.bf16.xpose.msra.mxu0 0
        %1750 = vmatprep.subr.bf16.mxu0 0
        %1751 = vmatpush1.bf16.xpose.msra.mxu0 0
        %1752 = vmatprep.subr.bf16.mxu0 0
        %1753 = vmatpush1.bf16.xpose.msra.mxu0 0
        %1754 = vmatprep.subr.bf16.mxu0 0
        %1755 = vmatpush1.bf16.xpose.msra.mxu0 0
        %1756 = vmatprep.subr.bf16.mxu0 0
        %1757 = vmatpush1.bf16.xpose.msra.mxu0 0
        %1758 = vmatprep.subr.bf16.mxu0 0
        %1759 = vmatpush1.bf16.xpose.msra.mxu0 0
        %1760 = vmatprep.subr.bf16.mxu0 0
        %1761 = vmatpush1.bf16.xpose.msra.mxu0 0
        %1762 = vmatprep.subr.bf16.mxu0 0
        %1763 = vmatpush1.bf16.xpose.msra.mxu0 0
        %1764 = vmatprep.subr.bf16.mxu0 0
        %1765 = vmatpush1.bf16.xpose.msra.mxu0 0
        %1766 = vmatprep.subr.bf16.mxu0 0
        %1767 = vmatpush1.bf16.xpose.msra.mxu0 0
        %1768 = vmatprep.subr.bf16.mxu0 0
        %1769 = vmatpush1.bf16.xpose.msra.mxu0 0
        %1770 = vmatprep.subr.bf16.mxu0 0
        %1771 = vmatpush1.bf16.xpose.msra.mxu0 0
        %1772 = vmatprep.mubr.bf16.mxu0 0
        %1773 = vmatmul.mubr.bf16.gmra.mrb[0].mxu0 %v1735
        %v1774 = vpop.f32.mrb[0].mxu0
        %v1775 = vadd.f32 %v1732, %v1774
        %v1776 = vpop.f32.mrb[0].mxu0
        %v1777 = vpop.f32.mrb[0].mxu0
        %v1778 = vpop.f32.mrb[0].mxu0
        %1779 = vdwg.mxu0
        %v1781 = vsel %vm1733, %v1721, 0
        %v1784 = vsel %vm1733, %v1725, 0
        %1786 = vmatprep.subr.bf16.mxu0 0
        %1787 = vmatpush1.bf16.xpose.msra.mxu0 %v1784
        %1788 = vmatprep.subr.bf16.mxu0 0
        %1789 = vmatpush1.bf16.xpose.msra.mxu0 0
        %1790 = vmatprep.subr.bf16.mxu0 0
        %1791 = vmatpush1.bf16.xpose.msra.mxu0 0
        %1792 = vmatprep.subr.bf16.mxu0 0
        %1793 = vmatpush1.bf16.xpose.msra.mxu0 0
        %1794 = vmatprep.subr.bf16.mxu0 0
        %1795 = vmatpush1.bf16.xpose.msra.mxu0 0
        %1796 = vmatprep.subr.bf16.mxu0 0
        %1797 = vmatpush1.bf16.xpose.msra.mxu0 0
        %1798 = vmatprep.subr.bf16.mxu0 0
        %1799 = vmatpush1.bf16.xpose.msra.mxu0 0
        %1800 = vmatprep.subr.bf16.mxu0 0
        %1801 = vmatpush1.bf16.xpose.msra.mxu0 0
        %1802 = vmatprep.subr.bf16.mxu0 0
        %1803 = vmatpush1.bf16.xpose.msra.mxu0 0
        %1804 = vmatprep.subr.bf16.mxu0 0
        %1805 = vmatpush1.bf16.xpose.msra.mxu0 0
        %1806 = vmatprep.subr.bf16.mxu0 0
        %1807 = vmatpush1.bf16.xpose.msra.mxu0 0
        %1808 = vmatprep.subr.bf16.mxu0 0
        %1809 = vmatpush1.bf16.xpose.msra.mxu0 0
        %1810 = vmatprep.subr.bf16.mxu0 0
        %1811 = vmatpush1.bf16.xpose.msra.mxu0 0
        %1812 = vmatprep.subr.bf16.mxu0 0
        %1813 = vmatpush1.bf16.xpose.msra.mxu0 0
        %1814 = vmatprep.subr.bf16.mxu0 0
        %1815 = vmatpush1.bf16.xpose.msra.mxu0 0
        %1816 = vmatprep.subr.bf16.mxu0 0
        %1817 = vmatpush1.bf16.xpose.msra.mxu0 0
        %1818 = vmatprep.mubr.bf16.mxu0 0
        %1819 = vmatmul.mubr.bf16.gmra.mrb[0].mxu0 %v1781
        %v1820 = vpop.f32.mrb[0].mxu0
        %v1821 = vadd.f32 %v1732, %v1820
        %v1822 = vpop.f32.mrb[0].mxu0
        %v1823 = vpop.f32.mrb[0].mxu0
        %v1824 = vpop.f32.mrb[0].mxu0
        %1825 = vdwg.mxu0
        %v1827 = vsel %vm1733, %v1722, 0
        %v1830 = vsel %vm1733, %v1726, 0
        %1832 = vmatprep.subr.bf16.mxu0 0
        %1833 = vmatpush1.bf16.xpose.msra.mxu0 %v1830
        %1834 = vmatprep.subr.bf16.mxu0 0
        %1835 = vmatpush1.bf16.xpose.msra.mxu0 0
        %1836 = vmatprep.subr.bf16.mxu0 0
        %1837 = vmatpush1.bf16.xpose.msra.mxu0 0
        %1838 = vmatprep.subr.bf16.mxu0 0
        %1839 = vmatpush1.bf16.xpose.msra.mxu0 0
        %1840 = vmatprep.subr.bf16.mxu0 0
        %1841 = vmatpush1.bf16.xpose.msra.mxu0 0
        %1842 = vmatprep.subr.bf16.mxu0 0
        %1843 = vmatpush1.bf16.xpose.msra.mxu0 0
        %1844 = vmatprep.subr.bf16.mxu0 0
        %1845 = vmatpush1.bf16.xpose.msra.mxu0 0
        %1846 = vmatprep.subr.bf16.mxu0 0
        %1847 = vmatpush1.bf16.xpose.msra.mxu0 0
        %1848 = vmatprep.subr.bf16.mxu0 0
        %1849 = vmatpush1.bf16.xpose.msra.mxu0 0
        %1850 = vmatprep.subr.bf16.mxu0 0
        %1851 = vmatpush1.bf16.xpose.msra.mxu0 0
        %1852 = vmatprep.subr.bf16.mxu0 0
        %1853 = vmatpush1.bf16.xpose.msra.mxu0 0
        %1854 = vmatprep.subr.bf16.mxu0 0
        %1855 = vmatpush1.bf16.xpose.msra.mxu0 0
        %1856 = vmatprep.subr.bf16.mxu0 0
        %1857 = vmatpush1.bf16.xpose.msra.mxu0 0
        %1858 = vmatprep.subr.bf16.mxu0 0
        %1859 = vmatpush1.bf16.xpose.msra.mxu0 0
        %1860 = vmatprep.subr.bf16.mxu0 0
        %1861 = vmatpush1.bf16.xpose.msra.mxu0 0
        %1862 = vmatprep.subr.bf16.mxu0 0
        %1863 = vmatpush1.bf16.xpose.msra.mxu0 0
        %1864 = vmatprep.mubr.bf16.mxu0 0
        %1865 = vmatmul.mubr.bf16.gmra.mrb[0].mxu0 %v1827
        %v1866 = vpop.f32.mrb[0].mxu0
        %v1867 = vadd.f32 %v1732, %v1866
        %v1868 = vpop.f32.mrb[0].mxu0
        %v1869 = vpop.f32.mrb[0].mxu0
        %v1870 = vpop.f32.mrb[0].mxu0
        %1871 = vdwg.mxu0
        %v1873 = vsel %vm1733, %v1723, 0
        %v1876 = vsel %vm1733, %v1727, 0
        %1878 = vmatprep.subr.bf16.mxu0 0
        %1879 = vmatpush1.bf16.xpose.msra.mxu0 %v1876
        %1880 = vmatprep.subr.bf16.mxu0 0
        %1881 = vmatpush1.bf16.xpose.msra.mxu0 0
        %1882 = vmatprep.subr.bf16.mxu0 0
        %1883 = vmatpush1.bf16.xpose.msra.mxu0 0
        %1884 = vmatprep.subr.bf16.mxu0 0
        %1885 = vmatpush1.bf16.xpose.msra.mxu0 0
        %1886 = vmatprep.subr.bf16.mxu0 0
        %1887 = vmatpush1.bf16.xpose.msra.mxu0 0
        %1888 = vmatprep.subr.bf16.mxu0 0
        %1889 = vmatpush1.bf16.xpose.msra.mxu0 0
        %1890 = vmatprep.subr.bf16.mxu0 0
        %1891 = vmatpush1.bf16.xpose.msra.mxu0 0
        %1892 = vmatprep.subr.bf16.mxu0 0
        %1893 = vmatpush1.bf16.xpose.msra.mxu0 0
        %1894 = vmatprep.subr.bf16.mxu0 0
        %1895 = vmatpush1.bf16.xpose.msra.mxu0 0
        %1896 = vmatprep.subr.bf16.mxu0 0
        %1897 = vmatpush1.bf16.xpose.msra.mxu0 0
        %1898 = vmatprep.subr.bf16.mxu0 0
        %1899 = vmatpush1.bf16.xpose.msra.mxu0 0
        %1900 = vmatprep.subr.bf16.mxu0 0
        %1901 = vmatpush1.bf16.xpose.msra.mxu0 0
        %1902 = vmatprep.subr.bf16.mxu0 0
        %1903 = vmatpush1.bf16.xpose.msra.mxu0 0
        %1904 = vmatprep.subr.bf16.mxu0 0
        %1905 = vmatpush1.bf16.xpose.msra.mxu0 0
        %1906 = vmatprep.subr.bf16.mxu0 0
        %1907 = vmatpush1.bf16.xpose.msra.mxu0 0
        %1908 = vmatprep.subr.bf16.mxu0 0
        %1909 = vmatpush1.bf16.xpose.msra.mxu0 0
        %1910 = vmatprep.mubr.bf16.mxu0 0
        %1911 = vmatmul.mubr.bf16.gmra.mrb[0].mxu0 %v1873
        %v1912 = vpop.f32.mrb[0].mxu0
        %v1913 = vadd.f32 %v1732, %v1912
        %v1914 = vpop.f32.mrb[0].mxu0
        %v1915 = vpop.f32.mrb[0].mxu0
        %v1916 = vpop.f32.mrb[0].mxu0
        %1917 = vdwg.mxu0
        %vm1918 = vcmask 64512
        %v1919 = vsel %vm1918, %v1775, -inf
        %1920 = vmax.xlane.f32.xlu0 %v1919
        %v1921 = vpop.xlane.xlu0 %1920
        %v1922 = vsel %vm1918, %v1821, -inf
        %1923 = vmax.xlane.f32.xlu0 %v1922
        %v1924 = vpop.xlane.xlu0 %1923
        %v1925 = vsel %vm1918, %v1867, -inf
        %1926 = vmax.xlane.f32.xlu0 %v1925
        %v1927 = vpop.xlane.xlu0 %1926
        %v1928 = vsel %vm1918, %v1913, -inf
        %1929 = vmax.xlane.f32.xlu0 %v1928
        %v1930 = vpop.xlane.xlu0 %1929
        %v1931 = vsub.f32 %v1775, %v1921
        %v1932 = vsub.f32 %v1821, %v1924
        %v1933 = vsub.f32 %v1867, %v1927
        %v1934 = vsub.f32 %v1913, %v1930
        %v1935 = vmul.f32 %v1931, 1.442695
        %v1936 = vpow.pop %v1935
        %v1937 = vmul.f32 %v1932, 1.442695
        %v1938 = vpow.pop %v1937
        %v1939 = vmul.f32 %v1933, 1.442695
        %v1940 = vpow.pop %v1939
        %v1941 = vmul.f32 %v1934, 1.442695
        %v1942 = vpow.pop %v1941
        %v1943 = vsel %vm1918, %v1936, 0.0
        %1944 = vadd.xlane.f32.xlu0 %v1943
        %v1945 = vpop.xlane.xlu0 %1944
        %v1946 = vsel %vm1918, %v1938, 0.0
        %1947 = vadd.xlane.f32.xlu0 %v1946
        %v1948 = vpop.xlane.xlu0 %1947
        %v1949 = vsel %vm1918, %v1940, 0.0
        %1950 = vadd.xlane.f32.xlu0 %v1949
        %v1951 = vpop.xlane.xlu0 %1950
        %v1952 = vsel %vm1918, %v1942, 0.0
        %1953 = vadd.xlane.f32.xlu0 %v1952
        %v1954 = vpop.xlane.xlu0 %1953
        %v1955 = vrcp.pop %v1945
        %v1956 = vrcp.pop %v1948
        %v1957 = vrcp.pop %v1951
        %v1958 = vrcp.pop %v1954
        %v1959 = vmul.f32 %v1936, %v1955
        %v1960 = vmul.f32 %v1938, %v1956
        %v1961 = vmul.f32 %v1940, %v1957
        %v1962 = vmul.f32 %v1942, %v1958
        %v1963 = vpack.c.bf16 %v1959, %v1959
        %v1964 = vpack.c.bf16 %v1960, %v1960
        %v1965 = vpack.c.bf16 %v1961, %v1961
        %v1966 = vpack.c.bf16 %v1962, %v1962
        %v1968 = vsel %vm1918, %v1963, 0
        %vm1970 = vcmask 1043456
        %v1972 = vsel %vm1970, %v1728, 0
        %1974 = vmatprep.subr.bf16.mxu0 0
        %1975 = vmatpush1.bf16.msra.mxu0 %v1972
        %1976 = vmatprep.subr.bf16.mxu0 0
        %1977 = vmatpush1.bf16.msra.mxu0 0
        %1978 = vmatprep.subr.bf16.mxu0 0
        %1979 = vmatpush1.bf16.msra.mxu0 0
        %1980 = vmatprep.subr.bf16.mxu0 0
        %1981 = vmatpush1.bf16.msra.mxu0 0
        %1982 = vmatprep.subr.bf16.mxu0 0
        %1983 = vmatpush1.bf16.msra.mxu0 0
        %1984 = vmatprep.subr.bf16.mxu0 0
        %1985 = vmatpush1.bf16.msra.mxu0 0
        %1986 = vmatprep.subr.bf16.mxu0 0
        %1987 = vmatpush1.bf16.msra.mxu0 0
        %1988 = vmatprep.subr.bf16.mxu0 0
        %1989 = vmatpush1.bf16.msra.mxu0 0
        %1990 = vmatprep.subr.bf16.mxu0 0
        %1991 = vmatpush1.bf16.msra.mxu0 0
        %1992 = vmatprep.subr.bf16.mxu0 0
        %1993 = vmatpush1.bf16.msra.mxu0 0
        %1994 = vmatprep.subr.bf16.mxu0 0
        %1995 = vmatpush1.bf16.msra.mxu0 0
        %1996 = vmatprep.subr.bf16.mxu0 0
        %1997 = vmatpush1.bf16.msra.mxu0 0
        %1998 = vmatprep.subr.bf16.mxu0 0
        %1999 = vmatpush1.bf16.msra.mxu0 0
        %2000 = vmatprep.subr.bf16.mxu0 0
        %2001 = vmatpush1.bf16.msra.mxu0 0
        %2002 = vmatprep.subr.bf16.mxu0 0
        %2003 = vmatpush1.bf16.msra.mxu0 0
        %2004 = vmatprep.subr.bf16.mxu0 0
        %2005 = vmatpush1.bf16.msra.mxu0 0
        %2006 = vmatprep.mubr.bf16.mxu0 0
        %2007 = vmatmul.mubr.bf16.gmra.mrb[0].mxu0 %v1968
        %v2008 = vpop.f32.mrb[0].mxu0
        %v2009 = vadd.f32 0.0, %v2008
        %v2010 = vpop.f32.mrb[0].mxu0
        %v2011 = vpop.f32.mrb[0].mxu0
        %v2012 = vpop.f32.mrb[0].mxu0
        %2013 = vdwg.mxu0
        %v2015 = vsel %vm1918, %v1964, 0
        %v2018 = vsel %vm1970, %v1729, 0
        %2020 = vmatprep.subr.bf16.mxu0 0
        %2021 = vmatpush1.bf16.msra.mxu0 %v2018
        %2022 = vmatprep.subr.bf16.mxu0 0
        %2023 = vmatpush1.bf16.msra.mxu0 0
        %2024 = vmatprep.subr.bf16.mxu0 0
        %2025 = vmatpush1.bf16.msra.mxu0 0
        %2026 = vmatprep.subr.bf16.mxu0 0
        %2027 = vmatpush1.bf16.msra.mxu0 0
        %2028 = vmatprep.subr.bf16.mxu0 0
        %2029 = vmatpush1.bf16.msra.mxu0 0
        %2030 = vmatprep.subr.bf16.mxu0 0
        %2031 = vmatpush1.bf16.msra.mxu0 0
        %2032 = vmatprep.subr.bf16.mxu0 0
        %2033 = vmatpush1.bf16.msra.mxu0 0
        %2034 = vmatprep.subr.bf16.mxu0 0
        %2035 = vmatpush1.bf16.msra.mxu0 0
        %2036 = vmatprep.subr.bf16.mxu0 0
        %2037 = vmatpush1.bf16.msra.mxu0 0
        %2038 = vmatprep.subr.bf16.mxu0 0
        %2039 = vmatpush1.bf16.msra.mxu0 0
        %2040 = vmatprep.subr.bf16.mxu0 0
        %2041 = vmatpush1.bf16.msra.mxu0 0
        %2042 = vmatprep.subr.bf16.mxu0 0
        %2043 = vmatpush1.bf16.msra.mxu0 0
        %2044 = vmatprep.subr.bf16.mxu0 0
        %2045 = vmatpush1.bf16.msra.mxu0 0
        %2046 = vmatprep.subr.bf16.mxu0 0
        %2047 = vmatpush1.bf16.msra.mxu0 0
        %2048 = vmatprep.subr.bf16.mxu0 0
        %2049 = vmatpush1.bf16.msra.mxu0 0
        %2050 = vmatprep.subr.bf16.mxu0 0
        %2051 = vmatpush1.bf16.msra.mxu0 0
        %2052 = vmatprep.mubr.bf16.mxu0 0
        %2053 = vmatmul.mubr.bf16.gmra.mrb[0].mxu0 %v2015
        %v2054 = vpop.f32.mrb[0].mxu0
        %v2055 = vadd.f32 0.0, %v2054
        %v2056 = vpop.f32.mrb[0].mxu0
        %v2057 = vpop.f32.mrb[0].mxu0
        %v2058 = vpop.f32.mrb[0].mxu0
        %2059 = vdwg.mxu0
        %v2061 = vsel %vm1918, %v1965, 0
        %v2064 = vsel %vm1970, %v1730, 0
        %2066 = vmatprep.subr.bf16.mxu0 0
        %2067 = vmatpush1.bf16.msra.mxu0 %v2064
        %2068 = vmatprep.subr.bf16.mxu0 0
        %2069 = vmatpush1.bf16.msra.mxu0 0
        %2070 = vmatprep.subr.bf16.mxu0 0
        %2071 = vmatpush1.bf16.msra.mxu0 0
        %2072 = vmatprep.subr.bf16.mxu0 0
        %2073 = vmatpush1.bf16.msra.mxu0 0
        %2074 = vmatprep.subr.bf16.mxu0 0
        %2075 = vmatpush1.bf16.msra.mxu0 0
        %2076 = vmatprep.subr.bf16.mxu0 0
        %2077 = vmatpush1.bf16.msra.mxu0 0
        %2078 = vmatprep.subr.bf16.mxu0 0
        %2079 = vmatpush1.bf16.msra.mxu0 0
        %2080 = vmatprep.subr.bf16.mxu0 0
        %2081 = vmatpush1.bf16.msra.mxu0 0
        %2082 = vmatprep.subr.bf16.mxu0 0
        %2083 = vmatpush1.bf16.msra.mxu0 0
        %2084 = vmatprep.subr.bf16.mxu0 0
        %2085 = vmatpush1.bf16.msra.mxu0 0
        %2086 = vmatprep.subr.bf16.mxu0 0
        %2087 = vmatpush1.bf16.msra.mxu0 0
        %2088 = vmatprep.subr.bf16.mxu0 0
        %2089 = vmatpush1.bf16.msra.mxu0 0
        %2090 = vmatprep.subr.bf16.mxu0 0
        %2091 = vmatpush1.bf16.msra.mxu0 0
        %2092 = vmatprep.subr.bf16.mxu0 0
        %2093 = vmatpush1.bf16.msra.mxu0 0
        %2094 = vmatprep.subr.bf16.mxu0 0
        %2095 = vmatpush1.bf16.msra.mxu0 0
        %2096 = vmatprep.subr.bf16.mxu0 0
        %2097 = vmatpush1.bf16.msra.mxu0 0
        %2098 = vmatprep.mubr.bf16.mxu0 0
        %2099 = vmatmul.mubr.bf16.gmra.mrb[0].mxu0 %v2061
        %v2100 = vpop.f32.mrb[0].mxu0
        %v2101 = vadd.f32 0.0, %v2100
        %v2102 = vpop.f32.mrb[0].mxu0
        %v2103 = vpop.f32.mrb[0].mxu0
        %v2104 = vpop.f32.mrb[0].mxu0
        %2105 = vdwg.mxu0
        %v2107 = vsel %vm1918, %v1966, 0
        %v2110 = vsel %vm1970, %v1731, 0
        %2112 = vmatprep.subr.bf16.mxu0 0
        %2113 = vmatpush1.bf16.msra.mxu0 %v2110
        %2114 = vmatprep.subr.bf16.mxu0 0
        %2115 = vmatpush1.bf16.msra.mxu0 0
        %2116 = vmatprep.subr.bf16.mxu0 0
        %2117 = vmatpush1.bf16.msra.mxu0 0
        %2118 = vmatprep.subr.bf16.mxu0 0
        %2119 = vmatpush1.bf16.msra.mxu0 0
        %2120 = vmatprep.subr.bf16.mxu0 0
        %2121 = vmatpush1.bf16.msra.mxu0 0
        %2122 = vmatprep.subr.bf16.mxu0 0
        %2123 = vmatpush1.bf16.msra.mxu0 0
        %2124 = vmatprep.subr.bf16.mxu0 0
        %2125 = vmatpush1.bf16.msra.mxu0 0
        %2126 = vmatprep.subr.bf16.mxu0 0
        %2127 = vmatpush1.bf16.msra.mxu0 0
        %2128 = vmatprep.subr.bf16.mxu0 0
        %2129 = vmatpush1.bf16.msra.mxu0 0
        %2130 = vmatprep.subr.bf16.mxu0 0
        %2131 = vmatpush1.bf16.msra.mxu0 0
        %2132 = vmatprep.subr.bf16.mxu0 0
        %2133 = vmatpush1.bf16.msra.mxu0 0
        %2134 = vmatprep.subr.bf16.mxu0 0
        %2135 = vmatpush1.bf16.msra.mxu0 0
        %2136 = vmatprep.subr.bf16.mxu0 0
        %2137 = vmatpush1.bf16.msra.mxu0 0
        %2138 = vmatprep.subr.bf16.mxu0 0
        %2139 = vmatpush1.bf16.msra.mxu0 0
        %2140 = vmatprep.subr.bf16.mxu0 0
        %2141 = vmatpush1.bf16.msra.mxu0 0
        %2142 = vmatprep.subr.bf16.mxu0 0
        %2143 = vmatpush1.bf16.msra.mxu0 0
        %2144 = vmatprep.mubr.bf16.mxu0 0
        %2145 = vmatmul.mubr.bf16.gmra.mrb[0].mxu0 %v2107
        %v2146 = vpop.f32.mrb[0].mxu0
        %v2147 = vadd.f32 0.0, %v2146
        %v2148 = vpop.f32.mrb[0].mxu0
        %v2149 = vpop.f32.mrb[0].mxu0
        %v2150 = vpop.f32.mrb[0].mxu0
        %2151 = vdwg.mxu0
        %v2152 = vpack.c.bf16 %v2009, %v2009
        %v2153 = vpack.c.bf16 %v2055, %v2055
        %v2154 = vpack.c.bf16 %v2101, %v2101
        %v2155 = vpack.c.bf16 %v2147, %v2147
        %v2156 = vld [vmem:[%s429] sm:$0xf]
        %v2157 = vld [vmem:[%s429 + $0x4] sm:$0xf]
        %v2158 = vld [vmem:[%s429 + $0x8] sm:$0xf]
        %v2159 = vld [vmem:[%s429 + $0xc] sm:$0xf]
        %v2160 = vld [vmem:[%s429 + $0x10] sm:$0xf]
        %v2161 = vld [vmem:[%s429 + $0x14] sm:$0xf]
        %v2162 = vld [vmem:[%s429 + $0x18] sm:$0xf]
        %v2163 = vld [vmem:[%s429 + $0x1c] sm:$0xf]
        %v2164 = vld [vmem:[%s429 + $0x20] sm:$0xf]
        %v2165 = vld [vmem:[%s429 + $0x24] sm:$0xf]
        %v2166 = vld [vmem:[%s429 + $0x28] sm:$0xf]
        %v2167 = vld [vmem:[%s429 + $0x2c] sm:$0xf]
        %v2168 = vld [vmem:[%s429 + $0x30] sm:$0xf]
        %v2169 = vld [vmem:[%s429 + $0x34] sm:$0xf]
        %v2170 = vld [vmem:[%s429 + $0x38] sm:$0xf]
        %v2171 = vld [vmem:[%s429 + $0x3c] sm:$0xf]
        %v2176 = vunpack.c.l.b16 %v2156
        %v2177 = vunpack.c.l.b16 %v2157
        %v2178 = vunpack.c.l.b16 %v2158
        %v2179 = vunpack.c.l.b16 %v2159
        %v2180 = vpack.c.b16 %v2177, %v2176
        %v2181 = vpack.c.b16 %v2179, %v2178
        %v2185 = vsel %vm1733, %v2152, 0
        %2187 = vmatprep.subr.bf16.mxu0 0
        %2188 = vmatpush1.bf16.msra.mxu0 %v2180
        %2189 = vmatprep.subr.bf16.mxu0 0
        %2190 = vmatpush1.bf16.msra.mxu0 %v2181
        %2191 = vmatprep.subr.bf16.mxu0 0
        %2192 = vmatpush1.bf16.msra.mxu0 0
        %2193 = vmatprep.subr.bf16.mxu0 0
        %2194 = vmatpush1.bf16.msra.mxu0 0
        %2195 = vmatprep.subr.bf16.mxu0 0
        %2196 = vmatpush1.bf16.msra.mxu0 0
        %2197 = vmatprep.subr.bf16.mxu0 0
        %2198 = vmatpush1.bf16.msra.mxu0 0
        %2199 = vmatprep.subr.bf16.mxu0 0
        %2200 = vmatpush1.bf16.msra.mxu0 0
        %2201 = vmatprep.subr.bf16.mxu0 0
        %2202 = vmatpush1.bf16.msra.mxu0 0
        %2203 = vmatprep.subr.bf16.mxu0 0
        %2204 = vmatpush1.bf16.msra.mxu0 0
        %2205 = vmatprep.subr.bf16.mxu0 0
        %2206 = vmatpush1.bf16.msra.mxu0 0
        %2207 = vmatprep.subr.bf16.mxu0 0
        %2208 = vmatpush1.bf16.msra.mxu0 0
        %2209 = vmatprep.subr.bf16.mxu0 0
        %2210 = vmatpush1.bf16.msra.mxu0 0
        %2211 = vmatprep.subr.bf16.mxu0 0
        %2212 = vmatpush1.bf16.msra.mxu0 0
        %2213 = vmatprep.subr.bf16.mxu0 0
        %2214 = vmatpush1.bf16.msra.mxu0 0
        %2215 = vmatprep.subr.bf16.mxu0 0
        %2216 = vmatpush1.bf16.msra.mxu0 0
        %2217 = vmatprep.subr.bf16.mxu0 0
        %2218 = vmatpush1.bf16.msra.mxu0 0
        %2219 = vmatprep.mubr.bf16.mxu0 0
        %2220 = vmatmul.mubr.bf16.gmra.mrb[0].mxu0 %v2185
        %v2221 = vpop.f32.mrb[0].mxu0
        %v2222 = vadd.f32 0.0, %v2221
        %v2223 = vpop.f32.mrb[0].mxu0
        %v2224 = vpop.f32.mrb[0].mxu0
        %v2225 = vpop.f32.mrb[0].mxu0
        %2226 = vdwg.mxu0
        %v2231 = vunpack.c.l.b16 %v2160
        %v2232 = vunpack.c.l.b16 %v2161
        %v2233 = vunpack.c.l.b16 %v2162
        %v2234 = vunpack.c.l.b16 %v2163
        %v2235 = vpack.c.b16 %v2232, %v2231
        %v2236 = vpack.c.b16 %v2234, %v2233
        %v2240 = vsel %vm1733, %v2153, 0
        %2242 = vmatprep.subr.bf16.mxu0 0
        %2243 = vmatpush1.bf16.msra.mxu0 %v2235
        %2244 = vmatprep.subr.bf16.mxu0 0
        %2245 = vmatpush1.bf16.msra.mxu0 %v2236
        %2246 = vmatprep.subr.bf16.mxu0 0
        %2247 = vmatpush1.bf16.msra.mxu0 0
        %2248 = vmatprep.subr.bf16.mxu0 0
        %2249 = vmatpush1.bf16.msra.mxu0 0
        %2250 = vmatprep.subr.bf16.mxu0 0
        %2251 = vmatpush1.bf16.msra.mxu0 0
        %2252 = vmatprep.subr.bf16.mxu0 0
        %2253 = vmatpush1.bf16.msra.mxu0 0
        %2254 = vmatprep.subr.bf16.mxu0 0
        %2255 = vmatpush1.bf16.msra.mxu0 0
        %2256 = vmatprep.subr.bf16.mxu0 0
        %2257 = vmatpush1.bf16.msra.mxu0 0
        %2258 = vmatprep.subr.bf16.mxu0 0
        %2259 = vmatpush1.bf16.msra.mxu0 0
        %2260 = vmatprep.subr.bf16.mxu0 0
        %2261 = vmatpush1.bf16.msra.mxu0 0
        %2262 = vmatprep.subr.bf16.mxu0 0
        %2263 = vmatpush1.bf16.msra.mxu0 0
        %2264 = vmatprep.subr.bf16.mxu0 0
        %2265 = vmatpush1.bf16.msra.mxu0 0
        %2266 = vmatprep.subr.bf16.mxu0 0
        %2267 = vmatpush1.bf16.msra.mxu0 0
        %2268 = vmatprep.subr.bf16.mxu0 0
        %2269 = vmatpush1.bf16.msra.mxu0 0
        %2270 = vmatprep.subr.bf16.mxu0 0
        %2271 = vmatpush1.bf16.msra.mxu0 0
        %2272 = vmatprep.subr.bf16.mxu0 0
        %2273 = vmatpush1.bf16.msra.mxu0 0
        %2274 = vmatprep.mubr.bf16.mxu0 0
        %2275 = vmatmul.mubr.bf16.gmra.mrb[0].mxu0 %v2240
        %v2276 = vpop.f32.mrb[0].mxu0
        %v2277 = vadd.f32 0.0, %v2276
        %v2278 = vpop.f32.mrb[0].mxu0
        %v2279 = vpop.f32.mrb[0].mxu0
        %v2280 = vpop.f32.mrb[0].mxu0
        %2281 = vdwg.mxu0
        %v2286 = vunpack.c.l.b16 %v2164
        %v2287 = vunpack.c.l.b16 %v2165
        %v2288 = vunpack.c.l.b16 %v2166
        %v2289 = vunpack.c.l.b16 %v2167
        %v2290 = vpack.c.b16 %v2287, %v2286
        %v2291 = vpack.c.b16 %v2289, %v2288
        %v2295 = vsel %vm1733, %v2154, 0
        %2297 = vmatprep.subr.bf16.mxu0 0
        %2298 = vmatpush1.bf16.msra.mxu0 %v2290
        %2299 = vmatprep.subr.bf16.mxu0 0
        %2300 = vmatpush1.bf16.msra.mxu0 %v2291
        %2301 = vmatprep.subr.bf16.mxu0 0
        %2302 = vmatpush1.bf16.msra.mxu0 0
        %2303 = vmatprep.subr.bf16.mxu0 0
        %2304 = vmatpush1.bf16.msra.mxu0 0
        %2305 = vmatprep.subr.bf16.mxu0 0
        %2306 = vmatpush1.bf16.msra.mxu0 0
        %2307 = vmatprep.subr.bf16.mxu0 0
        %2308 = vmatpush1.bf16.msra.mxu0 0
        %2309 = vmatprep.subr.bf16.mxu0 0
        %2310 = vmatpush1.bf16.msra.mxu0 0
        %2311 = vmatprep.subr.bf16.mxu0 0
        %2312 = vmatpush1.bf16.msra.mxu0 0
        %2313 = vmatprep.subr.bf16.mxu0 0
        %2314 = vmatpush1.bf16.msra.mxu0 0
        %2315 = vmatprep.subr.bf16.mxu0 0
        %2316 = vmatpush1.bf16.msra.mxu0 0
        %2317 = vmatprep.subr.bf16.mxu0 0
        %2318 = vmatpush1.bf16.msra.mxu0 0
        %2319 = vmatprep.subr.bf16.mxu0 0
        %2320 = vmatpush1.bf16.msra.mxu0 0
        %2321 = vmatprep.subr.bf16.mxu0 0
        %2322 = vmatpush1.bf16.msra.mxu0 0
        %2323 = vmatprep.subr.bf16.mxu0 0
        %2324 = vmatpush1.bf16.msra.mxu0 0
        %2325 = vmatprep.subr.bf16.mxu0 0
        %2326 = vmatpush1.bf16.msra.mxu0 0
        %2327 = vmatprep.subr.bf16.mxu0 0
        %2328 = vmatpush1.bf16.msra.mxu0 0
        %2329 = vmatprep.mubr.bf16.mxu0 0
        %2330 = vmatmul.mubr.bf16.gmra.mrb[0].mxu0 %v2295
        %v2331 = vpop.f32.mrb[0].mxu0
        %v2332 = vadd.f32 0.0, %v2331
        %v2333 = vpop.f32.mrb[0].mxu0
        %v2334 = vpop.f32.mrb[0].mxu0
        %v2335 = vpop.f32.mrb[0].mxu0
        %2336 = vdwg.mxu0
        %v2341 = vunpack.c.l.b16 %v2168
        %v2342 = vunpack.c.l.b16 %v2169
        %v2343 = vunpack.c.l.b16 %v2170
        %v2344 = vunpack.c.l.b16 %v2171
        %v2345 = vpack.c.b16 %v2342, %v2341
        %v2346 = vpack.c.b16 %v2344, %v2343
        %v2350 = vsel %vm1733, %v2155, 0
        %2352 = vmatprep.subr.bf16.mxu0 0
        %2353 = vmatpush1.bf16.msra.mxu0 %v2345
        %2354 = vmatprep.subr.bf16.mxu0 0
        %2355 = vmatpush1.bf16.msra.mxu0 %v2346
        %2356 = vmatprep.subr.bf16.mxu0 0
        %2357 = vmatpush1.bf16.msra.mxu0 0
        %2358 = vmatprep.subr.bf16.mxu0 0
        %2359 = vmatpush1.bf16.msra.mxu0 0
        %2360 = vmatprep.subr.bf16.mxu0 0
        %2361 = vmatpush1.bf16.msra.mxu0 0
        %2362 = vmatprep.subr.bf16.mxu0 0
        %2363 = vmatpush1.bf16.msra.mxu0 0
        %2364 = vmatprep.subr.bf16.mxu0 0
        %2365 = vmatpush1.bf16.msra.mxu0 0
        %2366 = vmatprep.subr.bf16.mxu0 0
        %2367 = vmatpush1.bf16.msra.mxu0 0
        %2368 = vmatprep.subr.bf16.mxu0 0
        %2369 = vmatpush1.bf16.msra.mxu0 0
        %2370 = vmatprep.subr.bf16.mxu0 0
        %2371 = vmatpush1.bf16.msra.mxu0 0
        %2372 = vmatprep.subr.bf16.mxu0 0
        %2373 = vmatpush1.bf16.msra.mxu0 0
        %2374 = vmatprep.subr.bf16.mxu0 0
        %2375 = vmatpush1.bf16.msra.mxu0 0
        %2376 = vmatprep.subr.bf16.mxu0 0
        %2377 = vmatpush1.bf16.msra.mxu0 0
        %2378 = vmatprep.subr.bf16.mxu0 0
        %2379 = vmatpush1.bf16.msra.mxu0 0
        %2380 = vmatprep.subr.bf16.mxu0 0
        %2381 = vmatpush1.bf16.msra.mxu0 0
        %2382 = vmatprep.subr.bf16.mxu0 0
        %2383 = vmatpush1.bf16.msra.mxu0 0
        %2384 = vmatprep.mubr.bf16.mxu0 0
        %2385 = vmatmul.mubr.bf16.gmra.mrb[0].mxu0 %v2350
        %v2386 = vpop.f32.mrb[0].mxu0
        %v2387 = vadd.f32 0.0, %v2386
        %v2388 = vpop.f32.mrb[0].mxu0
        %v2389 = vpop.f32.mrb[0].mxu0
        %v2390 = vpop.f32.mrb[0].mxu0
        %2391 = vdwg.mxu0
        %v2392 = vadd.f32 %v2222, %v2277
        %v2393 = vadd.f32 %v2392, %v2332
        %v2394 = vadd.f32 %v2393, %v2387
        %v2395 = vlaneseq
        %v2396 = vshrl.u32 %v2395, 7
        %v2397 = vsub.s32 2, %v2396
        %v2398 = vrot.slane %v448, %v2397
        %v2399 = vadd.f32 %v2394, %v2398
        %v2400 = vadd.f32 %v447, %v2399
        %2401 = vadd.xlane.f32.xlu0 %v2400
        %v2402 = vpop.xlane.xlu0 %2401
        %v2403 = vmul.f32 %v2402, %v451
        %v2404 = vsub.f32 %v2400, %v2403
        %v2405 = vmul.f32 %v2404, %v2404
        %2406 = vadd.xlane.f32.xlu0 %v2405
        %v2407 = vpop.xlane.xlu0 %2406
        %v2408 = vmul.f32 %v2407, %v451
        %v2409 = vadd.f32 %v2408, 1e-05
        %v2410 = vrsqrt.pop %v2409
        %v2411 = vmul.f32 %v2404, %v2410
        %v2412 = vlaneseq
        %v2413 = vshrl.u32 %v2412, 7
        %v2414 = vsub.s32 3, %v2413
        %v2415 = vrot.slane %v448, %v2414
        %v2416 = vmul.f32 %v2411, %v2415
        %v2417 = vlaneseq
        %v2418 = vshrl.u32 %v2417, 7
        %v2419 = vsub.s32 4, %v2418
        %v2420 = vrot.slane %v448, %v2419
        %v2421 = vadd.f32 %v2416, %v2420
        %v2422 = vpack.c.bf16 %v2421, %v2421
        %v2423 = vld [vmem:[%s434] sm:$0xff]
        %v2424 = vld [vmem:[%s434 + $0x8] sm:$0xff]
        %v2425 = vld [vmem:[%s434 + $0x10] sm:$0xff]
        %v2426 = vld [vmem:[%s434 + $0x18] sm:$0xff]
        %v2427 = vld [vmem:[%s434 + $0x20] sm:$0xff]
        %v2428 = vld [vmem:[%s434 + $0x28] sm:$0xff]
        %v2429 = vld [vmem:[%s434 + $0x30] sm:$0xff]
        %v2430 = vld [vmem:[%s434 + $0x38] sm:$0xff]
        %v2431 = vld [vmem:[%s434 + $0x40] sm:$0xff]
        %v2432 = vld [vmem:[%s434 + $0x48] sm:$0xff]
        %v2433 = vld [vmem:[%s434 + $0x50] sm:$0xff]
        %v2434 = vld [vmem:[%s434 + $0x58] sm:$0xff]
        %v2435 = vld [vmem:[%s434 + $0x60] sm:$0xff]
        %v2436 = vld [vmem:[%s434 + $0x68] sm:$0xff]
        %v2437 = vld [vmem:[%s434 + $0x70] sm:$0xff]
        %v2438 = vld [vmem:[%s434 + $0x78] sm:$0xff]
        %v2439 = vld [vmem:[%s434 + $0x80] sm:$0xff]
        %v2440 = vld [vmem:[%s434 + $0x88] sm:$0xff]
        %v2441 = vld [vmem:[%s434 + $0x90] sm:$0xff]
        %v2442 = vld [vmem:[%s434 + $0x98] sm:$0xff]
        %v2443 = vld [vmem:[%s434 + $0xa0] sm:$0xff]
        %v2444 = vld [vmem:[%s434 + $0xa8] sm:$0xff]
        %v2445 = vld [vmem:[%s434 + $0xb0] sm:$0xff]
        %v2446 = vld [vmem:[%s434 + $0xb8] sm:$0xff]
        %v2447 = vld [vmem:[%s434 + $0xc0] sm:$0xff]
        %v2448 = vld [vmem:[%s434 + $0xc8] sm:$0xff]
        %v2449 = vld [vmem:[%s434 + $0xd0] sm:$0xff]
        %v2450 = vld [vmem:[%s434 + $0xd8] sm:$0xff]
        %v2451 = vld [vmem:[%s434 + $0xe0] sm:$0xff]
        %v2452 = vld [vmem:[%s434 + $0xe8] sm:$0xff]
        %v2453 = vld [vmem:[%s434 + $0xf0] sm:$0xff]
        %v2454 = vld [vmem:[%s434 + $0xf8] sm:$0xff]
        %v2455 = vld [vmem:[%s419] sm:$0xf]
        %v2457 = vlaneseq
        %v2458 = vshrl.u32 %v2457, 7
        %v2459 = vsub.s32 0, %v2458
        %v2460 = vrot.slane %v2455, %v2459
        %v2461 = vlaneseq
        %v2462 = vshrl.u32 %v2461, 7
        %v2463 = vsub.s32 1, %v2462
        %v2464 = vrot.slane %v2455, %v2463
        %v2465 = vlaneseq
        %v2466 = vshrl.u32 %v2465, 7
        %v2467 = vsub.s32 2, %v2466
        %v2468 = vrot.slane %v2455, %v2467
        %v2469 = vlaneseq
        %v2470 = vshrl.u32 %v2469, 7
        %v2471 = vsub.s32 3, %v2470
        %v2472 = vrot.slane %v2455, %v2471
        %v2509 = vunpack.c.l.b16 %v2423
        %v2510 = vunpack.c.h.b16 %v2423
        %v2511 = vunpack.c.l.b16 %v2424
        %v2512 = vunpack.c.h.b16 %v2424
        %v2513 = vunpack.c.l.b16 %v2425
        %v2514 = vunpack.c.h.b16 %v2425
        %v2515 = vunpack.c.l.b16 %v2426
        %v2516 = vunpack.c.h.b16 %v2426
        %v2517 = vunpack.c.l.b16 %v2427
        %v2518 = vunpack.c.h.b16 %v2427
        %v2519 = vunpack.c.l.b16 %v2428
        %v2520 = vunpack.c.h.b16 %v2428
        %v2521 = vunpack.c.l.b16 %v2429
        %v2522 = vunpack.c.h.b16 %v2429
        %v2523 = vunpack.c.l.b16 %v2430
        %v2524 = vunpack.c.h.b16 %v2430
        %v2525 = vunpack.c.l.b16 %v2431
        %v2526 = vunpack.c.h.b16 %v2431
        %v2527 = vunpack.c.l.b16 %v2432
        %v2528 = vunpack.c.h.b16 %v2432
        %v2529 = vunpack.c.l.b16 %v2433
        %v2530 = vunpack.c.h.b16 %v2433
        %v2531 = vunpack.c.l.b16 %v2434
        %v2532 = vunpack.c.h.b16 %v2434
        %v2533 = vunpack.c.l.b16 %v2435
        %v2534 = vunpack.c.h.b16 %v2435
        %v2535 = vunpack.c.l.b16 %v2436
        %v2536 = vunpack.c.h.b16 %v2436
        %v2537 = vunpack.c.l.b16 %v2437
        %v2538 = vunpack.c.h.b16 %v2437
        %v2539 = vunpack.c.l.b16 %v2438
        %v2540 = vunpack.c.h.b16 %v2438
        %v2541 = vunpack.c.l.b16 %v2439
        %v2542 = vunpack.c.h.b16 %v2439
        %v2543 = vunpack.c.l.b16 %v2440
        %v2544 = vunpack.c.h.b16 %v2440
        %v2545 = vunpack.c.l.b16 %v2441
        %v2546 = vunpack.c.h.b16 %v2441
        %v2547 = vunpack.c.l.b16 %v2442
        %v2548 = vunpack.c.h.b16 %v2442
        %v2549 = vunpack.c.l.b16 %v2443
        %v2550 = vunpack.c.h.b16 %v2443
        %v2551 = vunpack.c.l.b16 %v2444
        %v2552 = vunpack.c.h.b16 %v2444
        %v2553 = vunpack.c.l.b16 %v2445
        %v2554 = vunpack.c.h.b16 %v2445
        %v2555 = vunpack.c.l.b16 %v2446
        %v2556 = vunpack.c.h.b16 %v2446
        %v2557 = vunpack.c.l.b16 %v2447
        %v2558 = vunpack.c.h.b16 %v2447
        %v2559 = vunpack.c.l.b16 %v2448
        %v2560 = vunpack.c.h.b16 %v2448
        %v2561 = vunpack.c.l.b16 %v2449
        %v2562 = vunpack.c.h.b16 %v2449
        %v2563 = vunpack.c.l.b16 %v2450
        %v2564 = vunpack.c.h.b16 %v2450
        %v2565 = vunpack.c.l.b16 %v2451
        %v2566 = vunpack.c.h.b16 %v2451
        %v2567 = vunpack.c.l.b16 %v2452
        %v2568 = vunpack.c.h.b16 %v2452
        %v2569 = vunpack.c.l.b16 %v2453
        %v2570 = vunpack.c.h.b16 %v2453
        %v2571 = vunpack.c.l.b16 %v2454
        %v2572 = vunpack.c.h.b16 %v2454
        %v2573 = vpack.c.b16 %v2513, %v2509
        %v2574 = vpack.c.b16 %v2514, %v2510
        %v2575 = vpack.c.b16 %v2515, %v2511
        %v2576 = vpack.c.b16 %v2516, %v2512
        %v2577 = vpack.c.b16 %v2521, %v2517
        %v2578 = vpack.c.b16 %v2522, %v2518
        %v2579 = vpack.c.b16 %v2523, %v2519
        %v2580 = vpack.c.b16 %v2524, %v2520
        %v2581 = vpack.c.b16 %v2529, %v2525
        %v2582 = vpack.c.b16 %v2530, %v2526
        %v2583 = vpack.c.b16 %v2531, %v2527
        %v2584 = vpack.c.b16 %v2532, %v2528
        %v2585 = vpack.c.b16 %v2537, %v2533
        %v2586 = vpack.c.b16 %v2538, %v2534
        %v2587 = vpack.c.b16 %v2539, %v2535
        %v2588 = vpack.c.b16 %v2540, %v2536
        %v2589 = vpack.c.b16 %v2545, %v2541
        %v2590 = vpack.c.b16 %v2546, %v2542
        %v2591 = vpack.c.b16 %v2547, %v2543
        %v2592 = vpack.c.b16 %v2548, %v2544
        %v2593 = vpack.c.b16 %v2553, %v2549
        %v2594 = vpack.c.b16 %v2554, %v2550
        %v2595 = vpack.c.b16 %v2555, %v2551
        %v2596 = vpack.c.b16 %v2556, %v2552
        %v2597 = vpack.c.b16 %v2561, %v2557
        %v2598 = vpack.c.b16 %v2562, %v2558
        %v2599 = vpack.c.b16 %v2563, %v2559
        %v2600 = vpack.c.b16 %v2564, %v2560
        %v2601 = vpack.c.b16 %v2569, %v2565
        %v2602 = vpack.c.b16 %v2570, %v2566
        %v2603 = vpack.c.b16 %v2571, %v2567
        %v2604 = vpack.c.b16 %v2572, %v2568
        %2637 = vmatprep.subr.bf16.mxu0 %v2574
        %2638 = vmatpush1.bf16.msra.mxu0 %v2573
        %2639 = vmatprep.subr.bf16.mxu0 %v2578
        %2640 = vmatpush1.bf16.msra.mxu0 %v2577
        %2641 = vmatprep.subr.bf16.mxu0 %v2582
        %2642 = vmatpush1.bf16.msra.mxu0 %v2581
        %2643 = vmatprep.subr.bf16.mxu0 %v2586
        %2644 = vmatpush1.bf16.msra.mxu0 %v2585
        %2645 = vmatprep.subr.bf16.mxu0 %v2590
        %2646 = vmatpush1.bf16.msra.mxu0 %v2589
        %2647 = vmatprep.subr.bf16.mxu0 %v2594
        %2648 = vmatpush1.bf16.msra.mxu0 %v2593
        %2649 = vmatprep.subr.bf16.mxu0 %v2598
        %2650 = vmatpush1.bf16.msra.mxu0 %v2597
        %2651 = vmatprep.subr.bf16.mxu0 %v2602
        %2652 = vmatpush1.bf16.msra.mxu0 %v2601
        %2653 = vmatprep.subr.bf16.mxu0 0
        %2654 = vmatpush1.bf16.msra.mxu0 0
        %2655 = vmatprep.subr.bf16.mxu0 0
        %2656 = vmatpush1.bf16.msra.mxu0 0
        %2657 = vmatprep.subr.bf16.mxu0 0
        %2658 = vmatpush1.bf16.msra.mxu0 0
        %2659 = vmatprep.subr.bf16.mxu0 0
        %2660 = vmatpush1.bf16.msra.mxu0 0
        %2661 = vmatprep.subr.bf16.mxu0 0
        %2662 = vmatpush1.bf16.msra.mxu0 0
        %2663 = vmatprep.subr.bf16.mxu0 0
        %2664 = vmatpush1.bf16.msra.mxu0 0
        %2665 = vmatprep.subr.bf16.mxu0 0
        %2666 = vmatpush1.bf16.msra.mxu0 0
        %2667 = vmatprep.subr.bf16.mxu0 0
        %2668 = vmatpush1.bf16.msra.mxu0 0
        %2669 = vmatprep.mubr.bf16.mxu0 0
        %2670 = vmatmul.mubr.bf16.gmra.mrb[0].mxu0 %v2422
        %v2671 = vpop.f32.mrb[0].mxu0
        %v2672 = vadd.f32 %v2460, %v2671
        %v2673 = vpop.f32.mrb[0].mxu0
        %v2674 = vadd.f32 %v2464, %v2673
        %v2675 = vpop.f32.mrb[0].mxu0
        %v2676 = vpop.f32.mrb[0].mxu0
        %2677 = vdwg.mxu0
        %2678 = vmatprep.subr.bf16.mxu0 %v2576
        %2679 = vmatpush1.bf16.msra.mxu0 %v2575
        %2680 = vmatprep.subr.bf16.mxu0 %v2580
        %2681 = vmatpush1.bf16.msra.mxu0 %v2579
        %2682 = vmatprep.subr.bf16.mxu0 %v2584
        %2683 = vmatpush1.bf16.msra.mxu0 %v2583
        %2684 = vmatprep.subr.bf16.mxu0 %v2588
        %2685 = vmatpush1.bf16.msra.mxu0 %v2587
        %2686 = vmatprep.subr.bf16.mxu0 %v2592
        %2687 = vmatpush1.bf16.msra.mxu0 %v2591
        %2688 = vmatprep.subr.bf16.mxu0 %v2596
        %2689 = vmatpush1.bf16.msra.mxu0 %v2595
        %2690 = vmatprep.subr.bf16.mxu0 %v2600
        %2691 = vmatpush1.bf16.msra.mxu0 %v2599
        %2692 = vmatprep.subr.bf16.mxu0 %v2604
        %2693 = vmatpush1.bf16.msra.mxu0 %v2603
        %2694 = vmatprep.subr.bf16.mxu0 0
        %2695 = vmatpush1.bf16.msra.mxu0 0
        %2696 = vmatprep.subr.bf16.mxu0 0
        %2697 = vmatpush1.bf16.msra.mxu0 0
        %2698 = vmatprep.subr.bf16.mxu0 0
        %2699 = vmatpush1.bf16.msra.mxu0 0
        %2700 = vmatprep.subr.bf16.mxu0 0
        %2701 = vmatpush1.bf16.msra.mxu0 0
        %2702 = vmatprep.subr.bf16.mxu0 0
        %2703 = vmatpush1.bf16.msra.mxu0 0
        %2704 = vmatprep.subr.bf16.mxu0 0
        %2705 = vmatpush1.bf16.msra.mxu0 0
        %2706 = vmatprep.subr.bf16.mxu0 0
        %2707 = vmatpush1.bf16.msra.mxu0 0
        %2708 = vmatprep.subr.bf16.mxu0 0
        %2709 = vmatpush1.bf16.msra.mxu0 0
        %2710 = vmatprep.mubr.bf16.mxu0 0
        %2711 = vmatmul.mubr.bf16.gmra.mrb[0].mxu0 %v2422
        %v2712 = vpop.f32.mrb[0].mxu0
        %v2713 = vadd.f32 %v2468, %v2712
        %v2714 = vpop.f32.mrb[0].mxu0
        %v2715 = vadd.f32 %v2472, %v2714
        %v2716 = vpop.f32.mrb[0].mxu0
        %v2717 = vpop.f32.mrb[0].mxu0
        %2718 = vdwg.mxu0
        %v2719 = vmul.f32 %v2672, 0.5
        %v2720 = vmul.f32 %v2674, 0.5
        %v2721 = vmul.f32 %v2713, 0.5
        %v2722 = vmul.f32 %v2715, 0.5
        %v2723 = vmul.f32 %v2672, 0.044715
        %v2724 = vmul.f32 %v2674, 0.044715
        %v2725 = vmul.f32 %v2713, 0.044715
        %v2726 = vmul.f32 %v2715, 0.044715
        %v2727 = vmul.f32 %v2723, %v2672
        %v2728 = vmul.f32 %v2724, %v2674
        %v2729 = vmul.f32 %v2725, %v2713
        %v2730 = vmul.f32 %v2726, %v2715
        %v2731 = vmul.f32 %v2727, %v2672
        %v2732 = vmul.f32 %v2728, %v2674
        %v2733 = vmul.f32 %v2729, %v2713
        %v2734 = vmul.f32 %v2730, %v2715
        %v2735 = vadd.f32 %v2672, %v2731
        %v2736 = vadd.f32 %v2674, %v2732
        %v2737 = vadd.f32 %v2713, %v2733
        %v2738 = vadd.f32 %v2715, %v2734
        %v2739 = vmul.f32 %v2735, 0.7978846
        %v2740 = vmul.f32 %v2736, 0.7978846
        %v2741 = vmul.f32 %v2737, 0.7978846
        %v2742 = vmul.f32 %v2738, 0.7978846
        %v2743 = vtanh.pop %v2739
        %v2744 = vtanh.pop %v2740
        %v2745 = vtanh.pop %v2741
        %v2746 = vtanh.pop %v2742
        %v2747 = vadd.f32 %v2743, 1.0
        %v2748 = vadd.f32 %v2744, 1.0
        %v2749 = vadd.f32 %v2745, 1.0
        %v2750 = vadd.f32 %v2746, 1.0
        %v2751 = vmul.f32 %v2719, %v2747
        %v2752 = vmul.f32 %v2720, %v2748
        %v2753 = vmul.f32 %v2721, %v2749
        %v2754 = vmul.f32 %v2722, %v2750
        %v2755 = vpack.c.bf16 %v2751, %v2751
        %v2756 = vpack.c.bf16 %v2752, %v2752
        %v2757 = vpack.c.bf16 %v2753, %v2753
        %v2758 = vpack.c.bf16 %v2754, %v2754
        %v2759 = vld [vmem:[%s439] sm:$0xf]
        %v2760 = vld [vmem:[%s439 + $0x4] sm:$0xf]
        %v2761 = vld [vmem:[%s439 + $0x8] sm:$0xf]
        %v2762 = vld [vmem:[%s439 + $0xc] sm:$0xf]
        %v2763 = vld [vmem:[%s439 + $0x10] sm:$0xf]
        %v2764 = vld [vmem:[%s439 + $0x14] sm:$0xf]
        %v2765 = vld [vmem:[%s439 + $0x18] sm:$0xf]
        %v2766 = vld [vmem:[%s439 + $0x1c] sm:$0xf]
        %v2767 = vld [vmem:[%s439 + $0x20] sm:$0xf]
        %v2768 = vld [vmem:[%s439 + $0x24] sm:$0xf]
        %v2769 = vld [vmem:[%s439 + $0x28] sm:$0xf]
        %v2770 = vld [vmem:[%s439 + $0x2c] sm:$0xf]
        %v2771 = vld [vmem:[%s439 + $0x30] sm:$0xf]
        %v2772 = vld [vmem:[%s439 + $0x34] sm:$0xf]
        %v2773 = vld [vmem:[%s439 + $0x38] sm:$0xf]
        %v2774 = vld [vmem:[%s439 + $0x3c] sm:$0xf]
        %v2775 = vld [vmem:[%s439 + $0x40] sm:$0xf]
        %v2776 = vld [vmem:[%s439 + $0x44] sm:$0xf]
        %v2777 = vld [vmem:[%s439 + $0x48] sm:$0xf]
        %v2778 = vld [vmem:[%s439 + $0x4c] sm:$0xf]
        %v2779 = vld [vmem:[%s439 + $0x50] sm:$0xf]
        %v2780 = vld [vmem:[%s439 + $0x54] sm:$0xf]
        %v2781 = vld [vmem:[%s439 + $0x58] sm:$0xf]
        %v2782 = vld [vmem:[%s439 + $0x5c] sm:$0xf]
        %v2783 = vld [vmem:[%s439 + $0x60] sm:$0xf]
        %v2784 = vld [vmem:[%s439 + $0x64] sm:$0xf]
        %v2785 = vld [vmem:[%s439 + $0x68] sm:$0xf]
        %v2786 = vld [vmem:[%s439 + $0x6c] sm:$0xf]
        %v2787 = vld [vmem:[%s439 + $0x70] sm:$0xf]
        %v2788 = vld [vmem:[%s439 + $0x74] sm:$0xf]
        %v2789 = vld [vmem:[%s439 + $0x78] sm:$0xf]
        %v2790 = vld [vmem:[%s439 + $0x7c] sm:$0xf]
        %v2791 = vld [vmem:[%s439 + $0x80] sm:$0xf]
        %v2792 = vld [vmem:[%s439 + $0x84] sm:$0xf]
        %v2793 = vld [vmem:[%s439 + $0x88] sm:$0xf]
        %v2794 = vld [vmem:[%s439 + $0x8c] sm:$0xf]
        %v2795 = vld [vmem:[%s439 + $0x90] sm:$0xf]
        %v2796 = vld [vmem:[%s439 + $0x94] sm:$0xf]
        %v2797 = vld [vmem:[%s439 + $0x98] sm:$0xf]
        %v2798 = vld [vmem:[%s439 + $0x9c] sm:$0xf]
        %v2799 = vld [vmem:[%s439 + $0xa0] sm:$0xf]
        %v2800 = vld [vmem:[%s439 + $0xa4] sm:$0xf]
        %v2801 = vld [vmem:[%s439 + $0xa8] sm:$0xf]
        %v2802 = vld [vmem:[%s439 + $0xac] sm:$0xf]
        %v2803 = vld [vmem:[%s439 + $0xb0] sm:$0xf]
        %v2804 = vld [vmem:[%s439 + $0xb4] sm:$0xf]
        %v2805 = vld [vmem:[%s439 + $0xb8] sm:$0xf]
        %v2806 = vld [vmem:[%s439 + $0xbc] sm:$0xf]
        %v2807 = vld [vmem:[%s439 + $0xc0] sm:$0xf]
        %v2808 = vld [vmem:[%s439 + $0xc4] sm:$0xf]
        %v2809 = vld [vmem:[%s439 + $0xc8] sm:$0xf]
        %v2810 = vld [vmem:[%s439 + $0xcc] sm:$0xf]
        %v2811 = vld [vmem:[%s439 + $0xd0] sm:$0xf]
        %v2812 = vld [vmem:[%s439 + $0xd4] sm:$0xf]
        %v2813 = vld [vmem:[%s439 + $0xd8] sm:$0xf]
        %v2814 = vld [vmem:[%s439 + $0xdc] sm:$0xf]
        %v2815 = vld [vmem:[%s439 + $0xe0] sm:$0xf]
        %v2816 = vld [vmem:[%s439 + $0xe4] sm:$0xf]
        %v2817 = vld [vmem:[%s439 + $0xe8] sm:$0xf]
        %v2818 = vld [vmem:[%s439 + $0xec] sm:$0xf]
        %v2819 = vld [vmem:[%s439 + $0xf0] sm:$0xf]
        %v2820 = vld [vmem:[%s439 + $0xf4] sm:$0xf]
        %v2821 = vld [vmem:[%s439 + $0xf8] sm:$0xf]
        %v2822 = vld [vmem:[%s439 + $0xfc] sm:$0xf]
        %v2823 = vlaneseq
        %v2824 = vshrl.u32 %v2823, 7
        %v2825 = vsub.s32 5, %v2824
        %v2826 = vrot.slane %v448, %v2825
        %v2891 = vunpack.c.l.b16 %v2759
        %v2892 = vunpack.c.l.b16 %v2760
        %v2893 = vunpack.c.l.b16 %v2761
        %v2894 = vunpack.c.l.b16 %v2762
        %v2895 = vunpack.c.l.b16 %v2763
        %v2896 = vunpack.c.l.b16 %v2764
        %v2897 = vunpack.c.l.b16 %v2765
        %v2898 = vunpack.c.l.b16 %v2766
        %v2899 = vunpack.c.l.b16 %v2767
        %v2900 = vunpack.c.l.b16 %v2768
        %v2901 = vunpack.c.l.b16 %v2769
        %v2902 = vunpack.c.l.b16 %v2770
        %v2903 = vunpack.c.l.b16 %v2771
        %v2904 = vunpack.c.l.b16 %v2772
        %v2905 = vunpack.c.l.b16 %v2773
        %v2906 = vunpack.c.l.b16 %v2774
        %v2907 = vunpack.c.l.b16 %v2775
        %v2908 = vunpack.c.l.b16 %v2776
        %v2909 = vunpack.c.l.b16 %v2777
        %v2910 = vunpack.c.l.b16 %v2778
        %v2911 = vunpack.c.l.b16 %v2779
        %v2912 = vunpack.c.l.b16 %v2780
        %v2913 = vunpack.c.l.b16 %v2781
        %v2914 = vunpack.c.l.b16 %v2782
        %v2915 = vunpack.c.l.b16 %v2783
        %v2916 = vunpack.c.l.b16 %v2784
        %v2917 = vunpack.c.l.b16 %v2785
        %v2918 = vunpack.c.l.b16 %v2786
        %v2919 = vunpack.c.l.b16 %v2787
        %v2920 = vunpack.c.l.b16 %v2788
        %v2921 = vunpack.c.l.b16 %v2789
        %v2922 = vunpack.c.l.b16 %v2790
        %v2923 = vunpack.c.l.b16 %v2791
        %v2924 = vunpack.c.l.b16 %v2792
        %v2925 = vunpack.c.l.b16 %v2793
        %v2926 = vunpack.c.l.b16 %v2794
        %v2927 = vunpack.c.l.b16 %v2795
        %v2928 = vunpack.c.l.b16 %v2796
        %v2929 = vunpack.c.l.b16 %v2797
        %v2930 = vunpack.c.l.b16 %v2798
        %v2931 = vunpack.c.l.b16 %v2799
        %v2932 = vunpack.c.l.b16 %v2800
        %v2933 = vunpack.c.l.b16 %v2801
        %v2934 = vunpack.c.l.b16 %v2802
        %v2935 = vunpack.c.l.b16 %v2803
        %v2936 = vunpack.c.l.b16 %v2804
        %v2937 = vunpack.c.l.b16 %v2805
        %v2938 = vunpack.c.l.b16 %v2806
        %v2939 = vunpack.c.l.b16 %v2807
        %v2940 = vunpack.c.l.b16 %v2808
        %v2941 = vunpack.c.l.b16 %v2809
        %v2942 = vunpack.c.l.b16 %v2810
        %v2943 = vunpack.c.l.b16 %v2811
        %v2944 = vunpack.c.l.b16 %v2812
        %v2945 = vunpack.c.l.b16 %v2813
        %v2946 = vunpack.c.l.b16 %v2814
        %v2947 = vunpack.c.l.b16 %v2815
        %v2948 = vunpack.c.l.b16 %v2816
        %v2949 = vunpack.c.l.b16 %v2817
        %v2950 = vunpack.c.l.b16 %v2818
        %v2951 = vunpack.c.l.b16 %v2819
        %v2952 = vunpack.c.l.b16 %v2820
        %v2953 = vunpack.c.l.b16 %v2821
        %v2954 = vunpack.c.l.b16 %v2822
        %v2955 = vpack.c.b16 %v2892, %v2891
        %v2956 = vpack.c.b16 %v2894, %v2893
        %v2957 = vpack.c.b16 %v2896, %v2895
        %v2958 = vpack.c.b16 %v2898, %v2897
        %v2959 = vpack.c.b16 %v2900, %v2899
        %v2960 = vpack.c.b16 %v2902, %v2901
        %v2961 = vpack.c.b16 %v2904, %v2903
        %v2962 = vpack.c.b16 %v2906, %v2905
        %v2963 = vpack.c.b16 %v2908, %v2907
        %v2964 = vpack.c.b16 %v2910, %v2909
        %v2965 = vpack.c.b16 %v2912, %v2911
        %v2966 = vpack.c.b16 %v2914, %v2913
        %v2967 = vpack.c.b16 %v2916, %v2915
        %v2968 = vpack.c.b16 %v2918, %v2917
        %v2969 = vpack.c.b16 %v2920, %v2919
        %v2970 = vpack.c.b16 %v2922, %v2921
        %v2971 = vpack.c.b16 %v2924, %v2923
        %v2972 = vpack.c.b16 %v2926, %v2925
        %v2973 = vpack.c.b16 %v2928, %v2927
        %v2974 = vpack.c.b16 %v2930, %v2929
        %v2975 = vpack.c.b16 %v2932, %v2931
        %v2976 = vpack.c.b16 %v2934, %v2933
        %v2977 = vpack.c.b16 %v2936, %v2935
        %v2978 = vpack.c.b16 %v2938, %v2937
        %v2979 = vpack.c.b16 %v2940, %v2939
        %v2980 = vpack.c.b16 %v2942, %v2941
        %v2981 = vpack.c.b16 %v2944, %v2943
        %v2982 = vpack.c.b16 %v2946, %v2945
        %v2983 = vpack.c.b16 %v2948, %v2947
        %v2984 = vpack.c.b16 %v2950, %v2949
        %v2985 = vpack.c.b16 %v2952, %v2951
        %v2986 = vpack.c.b16 %v2954, %v2953
        %3019 = vmatprep.subr.bf16.mxu0 0
        %3020 = vmatpush1.bf16.msra.mxu0 %v2955
        %3021 = vmatprep.subr.bf16.mxu0 0
        %3022 = vmatpush1.bf16.msra.mxu0 %v2956
        %3023 = vmatprep.subr.bf16.mxu0 0
        %3024 = vmatpush1.bf16.msra.mxu0 %v2957
        %3025 = vmatprep.subr.bf16.mxu0 0
        %3026 = vmatpush1.bf16.msra.mxu0 %v2958
        %3027 = vmatprep.subr.bf16.mxu0 0
        %3028 = vmatpush1.bf16.msra.mxu0 %v2959
        %3029 = vmatprep.subr.bf16.mxu0 0
        %3030 = vmatpush1.bf16.msra.mxu0 %v2960
        %3031 = vmatprep.subr.bf16.mxu0 0
        %3032 = vmatpush1.bf16.msra.mxu0 %v2961
        %3033 = vmatprep.subr.bf16.mxu0 0
        %3034 = vmatpush1.bf16.msra.mxu0 %v2962
        %3035 = vmatprep.subr.bf16.mxu0 0
        %3036 = vmatpush1.bf16.msra.mxu0 %v2963
        %3037 = vmatprep.subr.bf16.mxu0 0
        %3038 = vmatpush1.bf16.msra.mxu0 %v2964
        %3039 = vmatprep.subr.bf16.mxu0 0
        %3040 = vmatpush1.bf16.msra.mxu0 %v2965
        %3041 = vmatprep.subr.bf16.mxu0 0
        %3042 = vmatpush1.bf16.msra.mxu0 %v2966
        %3043 = vmatprep.subr.bf16.mxu0 0
        %3044 = vmatpush1.bf16.msra.mxu0 %v2967
        %3045 = vmatprep.subr.bf16.mxu0 0
        %3046 = vmatpush1.bf16.msra.mxu0 %v2968
        %3047 = vmatprep.subr.bf16.mxu0 0
        %3048 = vmatpush1.bf16.msra.mxu0 %v2969
        %3049 = vmatprep.subr.bf16.mxu0 0
        %3050 = vmatpush1.bf16.msra.mxu0 %v2970
        %3051 = vmatprep.mubr.bf16.mxu0 %v2756
        %3052 = vmatmul.mubr.bf16.gmra.mrb[0].mxu0 %v2755
        %v3053 = vpop.f32.mrb[0].mxu0
        %v3054 = vadd.f32 %v2826, %v3053
        %v3055 = vpop.f32.mrb[0].mxu0
        %v3056 = vpop.f32.mrb[0].mxu0
        %v3057 = vpop.f32.mrb[0].mxu0
        %3058 = vdwg.mxu0
        %3059 = vmatprep.subr.bf16.mxu0 0
        %3060 = vmatpush1.bf16.msra.mxu0 %v2971
        %3061 = vmatprep.subr.bf16.mxu0 0
        %3062 = vmatpush1.bf16.msra.mxu0 %v2972
        %3063 = vmatprep.subr.bf16.mxu0 0
        %3064 = vmatpush1.bf16.msra.mxu0 %v2973
        %3065 = vmatprep.subr.bf16.mxu0 0
        %3066 = vmatpush1.bf16.msra.mxu0 %v2974
        %3067 = vmatprep.subr.bf16.mxu0 0
        %3068 = vmatpush1.bf16.msra.mxu0 %v2975
        %3069 = vmatprep.subr.bf16.mxu0 0
        %3070 = vmatpush1.bf16.msra.mxu0 %v2976
        %3071 = vmatprep.subr.bf16.mxu0 0
        %3072 = vmatpush1.bf16.msra.mxu0 %v2977
        %3073 = vmatprep.subr.bf16.mxu0 0
        %3074 = vmatpush1.bf16.msra.mxu0 %v2978
        %3075 = vmatprep.subr.bf16.mxu0 0
        %3076 = vmatpush1.bf16.msra.mxu0 %v2979
        %3077 = vmatprep.subr.bf16.mxu0 0
        %3078 = vmatpush1.bf16.msra.mxu0 %v2980
        %3079 = vmatprep.subr.bf16.mxu0 0
        %3080 = vmatpush1.bf16.msra.mxu0 %v2981
        %3081 = vmatprep.subr.bf16.mxu0 0
        %3082 = vmatpush1.bf16.msra.mxu0 %v2982
        %3083 = vmatprep.subr.bf16.mxu0 0
        %3084 = vmatpush1.bf16.msra.mxu0 %v2983
        %3085 = vmatprep.subr.bf16.mxu0 0
        %3086 = vmatpush1.bf16.msra.mxu0 %v2984
        %3087 = vmatprep.subr.bf16.mxu0 0
        %3088 = vmatpush1.bf16.msra.mxu0 %v2985
        %3089 = vmatprep.subr.bf16.mxu0 0
        %3090 = vmatpush1.bf16.msra.mxu0 %v2986
        %3091 = vmatprep.mubr.bf16.mxu0 %v2758
        %3092 = vmatmul.mubr.bf16.gmra.mrb[0].mxu0 %v2757
        %v3093 = vpop.f32.mrb[0].mxu0
        %v3094 = vadd.f32 %v3054, %v3093
        %v3095 = vpop.f32.mrb[0].mxu0
        %v3096 = vpop.f32.mrb[0].mxu0
        %v3097 = vpop.f32.mrb[0].mxu0
        %3098 = vdwg.mxu0
        %v3099 = vadd.f32 %v2400, %v3094
        %3100 = vst [vmem:[#allocation2] sm:$0xff] %v3099
        %p3101 = scmp.eq.s32.totalorder %s22, 1
        // Predicated region
        $region65: #{tpu_custom_call.1} parent=59 // pred_check
          %p3102 = pneg %p3101
        $region66: #{tpu_custom_call.1} parent=59 // pred_check_branch
          %3104 = sbr.rel (%p3102) target = $region68
        $region67: #{tpu_custom_call.1} parent=59 // pred_region
          %v3105 = vld [vmem:[%s8] sm:$0x1]
          %v3106 = vld [vmem:[%s9] sm:$0x1]
          %3107 = vadd.xlane.f32.xlu0 %v3099
          %v3108 = vpop.xlane.xlu0 %3107
          %v3109 = vmul.f32 %v3108, %v451
          %v3110 = vsub.f32 %v3099, %v3109
          %v3111 = vmul.f32 %v3110, %v3110
          %3112 = vadd.xlane.f32.xlu0 %v3111
          %v3113 = vpop.xlane.xlu0 %3112
          %v3114 = vmul.f32 %v3113, %v451
          %v3115 = vadd.f32 %v3114, 1e-05
          %v3116 = vrsqrt.pop %v3115
          %v3117 = vmul.f32 %v3110, %v3116
          %v3119 = vlaneseq
          %v3120 = vshrl.u32 %v3119, 7
          %v3121 = vsub.s32 0, %v3120
          %v3122 = vrot.slane %v3105, %v3121
          %v3124 = vmul.f32 %v3117, %v3122
          %v3126 = vlaneseq
          %v3127 = vshrl.u32 %v3126, 7
          %v3128 = vsub.s32 0, %v3127
          %v3129 = vrot.slane %v3106, %v3128
          %v3131 = vadd.f32 %v3124, %v3129
          %3132 = vst [vmem:[#allocation3] sm:$0xff] %v3131
        $region68: #{tpu_custom_call.1} parent=59 // pred_fallthru
          _
        // Predicated region
        $region69: #{tpu_custom_call.1} parent=59 // pred_check
          %p3133 = pneg %p275
        $region70: #{tpu_custom_call.1} parent=59 // pred_check_branch
          %3135 = sbr.rel (%p3133) target = $region72
        $region71: #{tpu_custom_call.1} parent=59 // pred_region
          %s3137 = ssub.s32 128, 128
          %3138 = vsyncadd [#allocation4], %s3137
          %s3140 = sshll.u32 [#allocation3], 4
          %s3141 = int_to_ptr.vmem [resolvable:$true] %s3140
          %3143 = dma.vmem_to_hbm [thread:$0]  %s3141, 128, %s10, [#allocation4]
        $region72: #{tpu_custom_call.1} parent=59 // pred_fallthru
          _
        // Predicated region
        $region73: #{tpu_custom_call.1} parent=59 // pred_check
          %p3144 = pneg %p275
        $region74: #{tpu_custom_call.1} parent=59 // pred_check_branch
          %3146 = sbr.rel (%p3144) target = $region76
        $region75: #{tpu_custom_call.1} parent=59 // pred_region
          %3147 = dma.done [#allocation4], 128
        $region76: #{tpu_custom_call.1} parent=59 // pred_fallthru
          _
      $region60: #{tpu_custom_call.1} parent=5 // pred_fallthru
        _
      %p3148 = scmp.le.s32.totalorder 2, %s17
      // Predicated region
      $region77: #{tpu_custom_call.1} parent=5 // pred_check
        %p3149 = pneg %p3148
      $region78: #{tpu_custom_call.1} parent=5 // pred_check_branch
        %3151 = sbr.rel (%p3149) target = $region80
      $region79: #{tpu_custom_call.1} parent=5 // pred_region
        %s3152 = ssub.s32 %s17, 2
      $region80: #{tpu_custom_call.1} parent=5 // pred_fallthru
        _
    $region6: #{tpu_custom_call.1} parent=1 // loop_footer
      %s21 = sadd.s32 1, %s17
    $region7: #{tpu_custom_call.1} parent=1 // loop_footer_branch
      %16 = sbr.rel target = $region3
    $region8: #{tpu_custom_call.1} parent=1 // loop_exit
      _
    %3153 = vsyncpa [#allocation4], 1
    %s3154 = scalar_lea.sflag [#allocation4], 1
    %3155 = vsyncpa %s3154, 1

</llo_original>
